<compile_context>
chip_gen: v5e
topology: v5e:2x2
jax: 0.10.0
libtpu: 0.0.40
codegen_flags: <defaults>
</compile_context>

<pallas_src>
import functools

import numpy as np

import jax
import jax.numpy as jnp
from jax import lax
from jax.experimental import pallas as pl
from jax.experimental.pallas import tpu as pltpu

# dtype fed to the MXU (accumulation is always f32 via preferred_element_type).
# Set to jnp.float32 for bit-exact f32 matmuls.
MATMUL_DTYPE = jnp.bfloat16

_H0 = 28  # 28x28 input is what the 9*32 classifier fan-in implies:
          # 28 -conv5x5-> 24 -pool-> 12 -conv3x3-> 10 -pool-> 5 -conv3x3-> 3


# ---------------------------------------------------------------------------
# Fused Pallas kernel: the whole Cnet forward for one batch tile of `tb`.
# ---------------------------------------------------------------------------
def _cnet_fused_kernel(x_ref, w1_ref, b1_ref, w2_ref, b2_ref, w3_ref, b3_ref,
                       fw1_ref, fb1_ref, fw2_ref, fb2_ref, o_ref, *, tb):
    """Activations are kept "row packed": shape (tb, H, W*C) with the
    (x, channel) pair folded onto the 128-lane axis.

      x_ref  : (tb, 28, 84)               input, lane index = x*3 + c
      w*_ref : (KH, W_in*Cin, W_out*Cout) banded conv weights
      b*_ref : (1, W_out*Cout)            conv biases tiled over W_out (f32)
      fw1_ref: (3, 96, 256)               Linear(288,256) regrouped per conv3 row
      fw2_ref: (256, 128)                 Linear(256,66) padded to 128 columns
      o_ref  : (tb, 128)                  padded logits (cols 66..127 = padding)
    """
    mm = MATMUL_DTYPE
    f32 = jnp.float32

    def conv_relu(src, w_ref, b_ref, kh, h_out, lanes_in):
        # One MXU matmul per kernel ROW: the contraction over (kw, c_in) and
        # the scatter onto every output x position are encoded in the banded
        # weight, so K = lanes_in (84/184/144) instead of C_in (3/8/16).
        acc = None
        for i in range(kh):                         # static, unrolled (kh <= 5)
            lhs = src[:, i:i + h_out, :].astype(mm).reshape(tb * h_out, lanes_in)
            d = jnp.dot(lhs, w_ref[i], preferred_element_type=f32)
            acc = d if acc is None else acc + d
        return jnp.maximum(acc + b_ref[...], 0.0)   # (tb*h_out, w_out*c_out) f32

    def maxpool_2x2(a, h_out, lanes, cout):
        # H direction: slice + max over adjacent rows.
        a = a.reshape(tb, h_out // 2, 2, lanes)
        a = jnp.maximum(a[:, :, 0:1, :], a[:, :, 1:2, :])
        a = a.reshape(tb, h_out // 2, lanes)
        # W direction: pair-max of lane groups shifted by one channel block.
        # The result keeps full width; the stride-2 column selection is folded
        # into the next layer's banded weights (they read columns 2*x*cout+c).
        return jnp.maximum(a[:, :, :lanes - cout], a[:, :, cout:])

    # conv1 5x5, 3->8 : (tb,28,84) -> (tb*24,192); pool -> (tb,12,184)
    a = conv_relu(x_ref, w1_ref, b1_ref, kh=5, h_out=24, lanes_in=84)
    a = maxpool_2x2(a, h_out=24, lanes=192, cout=8)
    # conv2 3x3, 8->16: (tb,12,184) -> (tb*10,160); pool -> (tb,5,144)
    a = conv_relu(a, w2_ref, b2_ref, kh=3, h_out=10, lanes_in=184)
    a = maxpool_2x2(a, h_out=10, lanes=160, cout=16)
    # conv3 3x3, 16->32: (tb,5,144) -> (tb*3,96)
    a = conv_relu(a, w3_ref, b3_ref, kh=3, h_out=3, lanes_in=144)

    # classifier.  Linear(288->256) is a sum of 3 dots (one per conv3 output
    # row) so no lane-merging reshape is needed; the torch flatten(NCHW)
    # ordering is absorbed into fw1's host-side row permutation.
    a = a.astype(mm).reshape(tb, 3, 96)
    h = None
    for y in range(3):                              # static, unrolled
        row = a[:, y:y + 1, :].reshape(tb, 96)
        d = jnp.dot(row, fw1_ref[y], preferred_element_type=f32)
        h = d if h is None else h + d
    h = jnp.maximum(h + fb1_ref[...], 0.0)
    out = jnp.dot(h.astype(mm), fw2_ref[...], preferred_element_type=f32)
    o_ref[...] = (out + fb2_ref[...]).astype(o_ref.dtype)   # (tb,128) lane-dense


# ---------------------------------------------------------------------------
# pallas_call wrapper
# ---------------------------------------------------------------------------
def _resident_spec(arr):
    """Whole-array operand (weights/biases): block == full array with a
    constant index_map, so the pipeline keeps it resident across grid steps."""
    nd = arr.ndim

    def idx(b):
        return (0,) * nd

    return pl.BlockSpec(arr.shape, idx)


def _pick_batch_tile(n):
    # ~1 MiB of VMEM per 8-sample step: far inside v7x's 64 MiB as well as
    # v5e/v6e's 128 MiB.  Multiples of 8 keep the (8,128) block rule happy;
    # otherwise run the whole (small) batch in a single step.
    return 8 if n % 8 == 0 else n


def cnet_forward(x_nchw, packed):
    """x_nchw: (N, 3, 28, 28) float32.  packed: pack_params() output."""
    n = x_nchw.shape[0]
    tb = _pick_batch_tile(n)
    # NCHW -> NHWC with (W, C) folded onto the lane axis: (N, 28, 84).
    x_p = jnp.transpose(x_nchw, (0, 2, 3, 1)).reshape(n, _H0, _H0 * 3)

    weights = [packed[k] for k in ("w1b", "b1", "w2b", "b2", "w3b", "b3",
                                   "fw1", "fb1", "fw2", "fb2")]

    out_padded = pl.pallas_call(
        functools.partial(_cnet_fused_kernel, tb=tb),
        out_shape=jax.ShapeDtypeStruct((n, 128), jnp.float32),
        grid=(n // tb,),
        in_specs=[pl.BlockSpec((tb, _H0, _H0 * 3), lambda b: (b, 0, 0))]
        + [_resident_spec(w) for w in weights],
        out_specs=pl.BlockSpec((tb, 128), lambda b: (b, 0)),
        compiler_params=pltpu.CompilerParams(
            dimension_semantics=("parallel",)),    # v7x: 2 TCs split the batch
    )(x_p, *weights)
    return out_padded[:, :66]


# ---------------------------------------------------------------------------
# Host-side parameter re-layout (runs once, outside jit, plain numpy).
# ---------------------------------------------------------------------------
def _banded_conv_weight(w, in_lanes, w_out, x_stride):
    """Banded matmul weights for a 'valid' conv, one slab per kernel row.

    w: (Cout, Cin, KH, KW) torch-layout conv weight.  Returns
      out[i, x_stride*(xo+j)*Cin + ci, xo*Cout + co] = w[co, ci, i, j]
    so that (packed_rows @ out[i]) summed over i equals the conv contracted
    over (Cin, KW) for every output column xo.  x_stride=2 reads the
    pair-maxed (un-subsampled) previous activation, i.e. it implements the
    MaxPool stride-2 column selection.
    """
    w = np.asarray(w, np.float32)
    cout, cin, kh, kw = w.shape
    out = np.zeros((kh, in_lanes, w_out * cout), np.float32)
    for i in range(kh):
        for j in range(kw):
            blk = w[:, :, i, j].T                       # (cin, cout)
            for xo in range(w_out):
                r0 = x_stride * (xo + j) * cin
                out[i, r0:r0 + cin, xo * cout:(xo + 1) * cout] = blk
    return out


def pack_params(params):
    """Re-layout torch-style parameters into the operands the kernel consumes."""
    mm = MATMUL_DTYPE

    def tile_bias(b, w_out):
        return jnp.asarray(np.tile(np.asarray(b, np.float32), w_out)[None, :])

    w1b = _banded_conv_weight(params["cw1"], in_lanes=84,  w_out=24, x_stride=1)
    w2b = _banded_conv_weight(params["cw2"], in_lanes=184, w_out=10, x_stride=2)
    w3b = _banded_conv_weight(params["cw3"], in_lanes=144, w_out=3,  x_stride=2)

    # classifier-1: rows of the (288,256) matrix are torch-flatten ordered
    # (c*9 + y*3 + x); regroup them to the kernel's (y; x*32+c) packing.
    fw1 = np.asarray(params["fw1"], np.float32).reshape(32, 3, 3, 256)
    fw1 = fw1.transpose(1, 2, 0, 3).reshape(3, 96, 256)

    # classifier-2: pad 66 -> 128 output columns for unmasked lane-dense stores.
    fw2 = np.zeros((256, 128), np.float32)
    fw2[:, :66] = np.asarray(params["fw2"], np.float32)
    fb2 = np.zeros((1, 128), np.float32)
    fb2[0, :66] = np.asarray(params["fb2"], np.float32)

    return {
        "w1b": jnp.asarray(w1b, mm), "b1": tile_bias(params["cb1"], 24),
        "w2b": jnp.asarray(w2b, mm), "b2": tile_bias(params["cb2"], 10),
        "w3b": jnp.asarray(w3b, mm), "b3": tile_bias(params["cb3"], 3),
        "fw1": jnp.asarray(fw1, mm),
        "fb1": jnp.asarray(params["fb1"], jnp.float32)[None, :],
        "fw2": jnp.asarray(fw2, mm),
        "fb2": jnp.asarray(fb2, jnp.float32),
    }


def init_params(key):
    ks = jax.random.split(key, 10)

    def uni(k, shape, fan_in):
        bound = 1.0 / float(fan_in) ** 0.5   # PyTorch default init range
        return jax.random.uniform(k, shape, jnp.float32, -bound, bound)

    return {
        # conv weights in torch layout (Cout, Cin, KH, KW)
        "cw1": uni(ks[0], (8, 3, 5, 5), 3 * 5 * 5),
        "cb1": uni(ks[1], (8,), 3 * 5 * 5),
        "cw2": uni(ks[2], (16, 8, 3, 3), 8 * 3 * 3),
        "cb2": uni(ks[3], (16,), 8 * 3 * 3),
        "cw3": uni(ks[4], (32, 16, 3, 3), 16 * 3 * 3),
        "cb3": uni(ks[5], (32,), 16 * 3 * 3),
        # linear weights stored transposed vs torch: (in_features, out_features)
        "fw1": uni(ks[6], (288, 256), 288),
        "fb1": uni(ks[7], (256,), 288),
        "fw2": uni(ks[8], (256, 66), 256),
        "fb2": uni(ks[9], (66,), 256),
    }


# ---------------------------------------------------------------------------
# Plain-JAX/XLA f32 reference of the PyTorch forward (for a sanity check).
# ---------------------------------------------------------------------------
def cnet_reference(x, params):
    dn = ("NCHW", "OIHW", "NCHW")

    def conv_relu(y, w, b):
        y = lax.conv_general_dilated(y, w, (1, 1), "VALID", dimension_numbers=dn)
        return jax.nn.relu(y + b[None, :, None, None])

    def pool(y):
        return lax.reduce_window(y, -jnp.inf, lax.max,
                                 (1, 1, 2, 2), (1, 1, 2, 2), "VALID")

    y = pool(conv_relu(x, params["cw1"], params["cb1"]))
    y = pool(conv_relu(y, params["cw2"], params["cb2"]))
    y = conv_relu(y, params["cw3"], params["cb3"])
    y = y.reshape(y.shape[0], -1)                        # torch.flatten(x, 1)
    y = jax.nn.relu(y @ params["fw1"] + params["fb1"])
    return y @ params["fw2"] + params["fb2"]


if __name__ == "__main__":
    key = jax.random.PRNGKey(0)
    k_x, k_p = jax.random.split(key)
    x = jax.random.normal(k_x, (2, 3, 28, 28), jnp.float32)
    params = init_params(k_p)
    packed = pack_params(params)           # host-side weight re-layout, once

    out = jax.jit(cnet_forward)(x, packed)
    out = jax.block_until_ready(out)
    assert out.shape == (2, 66) and out.dtype == jnp.float32

    # Cross-check the fused Pallas forward against the plain-XLA f32 reference
    # (tolerance covers bf16 matmul operands with f32 accumulation).
    ref = jax.block_until_ready(jax.jit(cnet_reference)(x, params))
    err = float(jnp.max(jnp.abs(out - ref)))
    assert err < 2.5e-2, f"max |err| vs reference = {err}"

    print("KERNEL_OK")
</pallas_src>

<mosaic_0001>
module attributes {stable_mosaic.version = 11 : i64} {
  func.func @_cnet_fused_kernel(%arg0: i32, %arg1: memref<2x28x84xf32, #tpu.memory_space<vmem>>, %arg2: memref<5x84x192xbf16, #tpu.memory_space<vmem>>, %arg3: memref<1x192xf32, #tpu.memory_space<vmem>>, %arg4: memref<3x184x160xbf16, #tpu.memory_space<vmem>>, %arg5: memref<1x160xf32, #tpu.memory_space<vmem>>, %arg6: memref<3x144x96xbf16, #tpu.memory_space<vmem>>, %arg7: memref<1x96xf32, #tpu.memory_space<vmem>>, %arg8: memref<3x96x256xbf16, #tpu.memory_space<vmem>>, %arg9: memref<1x256xf32, #tpu.memory_space<vmem>>, %arg10: memref<256x128xbf16, #tpu.memory_space<vmem>>, %arg11: memref<1x128xf32, #tpu.memory_space<vmem>>, %arg12: memref<2x128xf32, #tpu.memory_space<vmem>>) attributes {dimension_semantics = [#tpu.dimension_semantics<parallel>], iteration_bounds = array<i64: 1>, scalar_prefetch = 0 : i64, scratch_operands = 0 : i64, tpu.core_type = #tpu.core_type<tc>, window_params = [{transform_indices = @transform_0, window_bounds = array<i64: 2, 28, 84>}, {pipeline_mode = #tpu.pipeline_mode<synchronous>, transform_indices = @transform_1, window_bounds = array<i64: 5, 84, 192>}, {pipeline_mode = #tpu.pipeline_mode<synchronous>, transform_indices = @transform_2, window_bounds = array<i64: 1, 192>}, {pipeline_mode = #tpu.pipeline_mode<synchronous>, transform_indices = @transform_3, window_bounds = array<i64: 3, 184, 160>}, {pipeline_mode = #tpu.pipeline_mode<synchronous>, transform_indices = @transform_4, window_bounds = array<i64: 1, 160>}, {pipeline_mode = #tpu.pipeline_mode<synchronous>, transform_indices = @transform_5, window_bounds = array<i64: 3, 144, 96>}, {pipeline_mode = #tpu.pipeline_mode<synchronous>, transform_indices = @transform_6, window_bounds = array<i64: 1, 96>}, {pipeline_mode = #tpu.pipeline_mode<synchronous>, transform_indices = @transform_7, window_bounds = array<i64: 3, 96, 256>}, {pipeline_mode = #tpu.pipeline_mode<synchronous>, transform_indices = @transform_8, window_bounds = array<i64: 1, 256>}, {pipeline_mode = #tpu.pipeline_mode<synchronous>, transform_indices = @transform_9, window_bounds = array<i64: 256, 128>}, {pipeline_mode = #tpu.pipeline_mode<synchronous>, transform_indices = @transform_10, window_bounds = array<i64: 1, 128>}, {transform_indices = @transform_11, window_bounds = array<i64: 2, 128>}]} {
    %c0 = arith.constant 0 : index
    %c0_0 = arith.constant 0 : index
    %c0_1 = arith.constant 0 : index
    %0 = vector.load %arg1[%c0, %c0_0, %c0_1] : memref<2x28x84xf32, #tpu.memory_space<vmem>>, vector<2x24x84xf32>
    %1 = arith.truncf %0 : vector<2x24x84xf32> to vector<2x24x84xbf16>
    %2 = vector.shape_cast %1 : vector<2x24x84xbf16> to vector<48x84xbf16>
    %c0_2 = arith.constant 0 : index
    %c0_3 = arith.constant 0 : index
    %c0_4 = arith.constant 0 : index
    %3 = vector.load %arg2[%c0_2, %c0_3, %c0_4] : memref<5x84x192xbf16, #tpu.memory_space<vmem>>, vector<1x84x192xbf16>
    %4 = vector.shape_cast %3 : vector<1x84x192xbf16> to vector<84x192xbf16>
    %cst = arith.constant dense<0.000000e+00> : vector<48x192xf32>
    %5 = tpu.matmul %2, %4, %cst {dimension_numbers = #tpu.dot_dimension_numbers<[1], [0], [0], [1], [0, 0, 1, 1], [], []>} : vector<48x84xbf16>, vector<84x192xbf16>, vector<48x192xf32> -> vector<48x192xf32>
    %c0_5 = arith.constant 0 : index
    %c1 = arith.constant 1 : index
    %c0_6 = arith.constant 0 : index
    %6 = vector.load %arg1[%c0_5, %c1, %c0_6] : memref<2x28x84xf32, #tpu.memory_space<vmem>>, vector<2x24x84xf32>
    %7 = arith.truncf %6 : vector<2x24x84xf32> to vector<2x24x84xbf16>
    %8 = vector.shape_cast %7 : vector<2x24x84xbf16> to vector<48x84xbf16>
    %c1_7 = arith.constant 1 : index
    %c0_8 = arith.constant 0 : index
    %c0_9 = arith.constant 0 : index
    %9 = vector.load %arg2[%c1_7, %c0_8, %c0_9] : memref<5x84x192xbf16, #tpu.memory_space<vmem>>, vector<1x84x192xbf16>
    %10 = vector.shape_cast %9 : vector<1x84x192xbf16> to vector<84x192xbf16>
    %cst_10 = arith.constant dense<0.000000e+00> : vector<48x192xf32>
    %11 = tpu.matmul %8, %10, %cst_10 {dimension_numbers = #tpu.dot_dimension_numbers<[1], [0], [0], [1], [0, 0, 1, 1], [], []>} : vector<48x84xbf16>, vector<84x192xbf16>, vector<48x192xf32> -> vector<48x192xf32>
    %12 = arith.addf %5, %11 : vector<48x192xf32>
    %c0_11 = arith.constant 0 : index
    %c2 = arith.constant 2 : index
    %c0_12 = arith.constant 0 : index
    %13 = vector.load %arg1[%c0_11, %c2, %c0_12] : memref<2x28x84xf32, #tpu.memory_space<vmem>>, vector<2x24x84xf32>
    %14 = arith.truncf %13 : vector<2x24x84xf32> to vector<2x24x84xbf16>
    %15 = vector.shape_cast %14 : vector<2x24x84xbf16> to vector<48x84xbf16>
    %c2_13 = arith.constant 2 : index
    %c0_14 = arith.constant 0 : index
    %c0_15 = arith.constant 0 : index
    %16 = vector.load %arg2[%c2_13, %c0_14, %c0_15] : memref<5x84x192xbf16, #tpu.memory_space<vmem>>, vector<1x84x192xbf16>
    %17 = vector.shape_cast %16 : vector<1x84x192xbf16> to vector<84x192xbf16>
    %cst_16 = arith.constant dense<0.000000e+00> : vector<48x192xf32>
    %18 = tpu.matmul %15, %17, %cst_16 {dimension_numbers = #tpu.dot_dimension_numbers<[1], [0], [0], [1], [0, 0, 1, 1], [], []>} : vector<48x84xbf16>, vector<84x192xbf16>, vector<48x192xf32> -> vector<48x192xf32>
    %19 = arith.addf %12, %18 : vector<48x192xf32>
    %c0_17 = arith.constant 0 : index
    %c3 = arith.constant 3 : index
    %c0_18 = arith.constant 0 : index
    %20 = vector.load %arg1[%c0_17, %c3, %c0_18] : memref<2x28x84xf32, #tpu.memory_space<vmem>>, vector<2x24x84xf32>
    %21 = arith.truncf %20 : vector<2x24x84xf32> to vector<2x24x84xbf16>
    %22 = vector.shape_cast %21 : vector<2x24x84xbf16> to vector<48x84xbf16>
    %c3_19 = arith.constant 3 : index
    %c0_20 = arith.constant 0 : index
    %c0_21 = arith.constant 0 : index
    %23 = vector.load %arg2[%c3_19, %c0_20, %c0_21] : memref<5x84x192xbf16, #tpu.memory_space<vmem>>, vector<1x84x192xbf16>
    %24 = vector.shape_cast %23 : vector<1x84x192xbf16> to vector<84x192xbf16>
    %cst_22 = arith.constant dense<0.000000e+00> : vector<48x192xf32>
    %25 = tpu.matmul %22, %24, %cst_22 {dimension_numbers = #tpu.dot_dimension_numbers<[1], [0], [0], [1], [0, 0, 1, 1], [], []>} : vector<48x84xbf16>, vector<84x192xbf16>, vector<48x192xf32> -> vector<48x192xf32>
    %26 = arith.addf %19, %25 : vector<48x192xf32>
    %c0_23 = arith.constant 0 : index
    %c4 = arith.constant 4 : index
    %c0_24 = arith.constant 0 : index
    %27 = vector.load %arg1[%c0_23, %c4, %c0_24] : memref<2x28x84xf32, #tpu.memory_space<vmem>>, vector<2x24x84xf32>
    %28 = arith.truncf %27 : vector<2x24x84xf32> to vector<2x24x84xbf16>
    %29 = vector.shape_cast %28 : vector<2x24x84xbf16> to vector<48x84xbf16>
    %c4_25 = arith.constant 4 : index
    %c0_26 = arith.constant 0 : index
    %c0_27 = arith.constant 0 : index
    %30 = vector.load %arg2[%c4_25, %c0_26, %c0_27] : memref<5x84x192xbf16, #tpu.memory_space<vmem>>, vector<1x84x192xbf16>
    %31 = vector.shape_cast %30 : vector<1x84x192xbf16> to vector<84x192xbf16>
    %cst_28 = arith.constant dense<0.000000e+00> : vector<48x192xf32>
    %32 = tpu.matmul %29, %31, %cst_28 {dimension_numbers = #tpu.dot_dimension_numbers<[1], [0], [0], [1], [0, 0, 1, 1], [], []>} : vector<48x84xbf16>, vector<84x192xbf16>, vector<48x192xf32> -> vector<48x192xf32>
    %33 = arith.addf %26, %32 : vector<48x192xf32>
    %c0_29 = arith.constant 0 : index
    %c0_30 = arith.constant 0 : index
    %34 = vector.load %arg3[%c0_29, %c0_30] : memref<1x192xf32, #tpu.memory_space<vmem>>, vector<1x192xf32>
    %35 = vector.broadcast %34 : vector<1x192xf32> to vector<48x192xf32>
    %36 = arith.addf %33, %35 : vector<48x192xf32>
    %cst_31 = arith.constant 0.000000e+00 : f32
    %37 = vector.broadcast %cst_31 : f32 to vector<48x192xf32>
    %38 = arith.maximumf %36, %37 : vector<48x192xf32>
    %39 = vector.shape_cast %38 : vector<48x192xf32> to vector<2x12x2x192xf32>
    %40 = vector.extract_strided_slice %39 {offsets = [0, 0, 0, 0], sizes = [2, 12, 1, 192], strides = [1, 1, 1, 1]} : vector<2x12x2x192xf32> to vector<2x12x1x192xf32>
    %41 = vector.extract_strided_slice %39 {offsets = [0, 0, 1, 0], sizes = [2, 12, 1, 192], strides = [1, 1, 1, 1]} : vector<2x12x2x192xf32> to vector<2x12x1x192xf32>
    %42 = arith.maximumf %40, %41 : vector<2x12x1x192xf32>
    %43 = vector.shape_cast %42 : vector<2x12x1x192xf32> to vector<2x12x192xf32>
    %44 = vector.extract_strided_slice %43 {offsets = [0, 0, 0], sizes = [2, 12, 184], strides = [1, 1, 1]} : vector<2x12x192xf32> to vector<2x12x184xf32>
    %45 = vector.extract_strided_slice %43 {offsets = [0, 0, 8], sizes = [2, 12, 184], strides = [1, 1, 1]} : vector<2x12x192xf32> to vector<2x12x184xf32>
    %46 = arith.maximumf %44, %45 : vector<2x12x184xf32>
    %47 = vector.extract_strided_slice %46 {offsets = [0, 0, 0], sizes = [2, 10, 184], strides = [1, 1, 1]} : vector<2x12x184xf32> to vector<2x10x184xf32>
    %48 = arith.truncf %47 : vector<2x10x184xf32> to vector<2x10x184xbf16>
    %49 = vector.shape_cast %48 : vector<2x10x184xbf16> to vector<20x184xbf16>
    %c0_32 = arith.constant 0 : index
    %c0_33 = arith.constant 0 : index
    %c0_34 = arith.constant 0 : index
    %50 = vector.load %arg4[%c0_32, %c0_33, %c0_34] : memref<3x184x160xbf16, #tpu.memory_space<vmem>>, vector<1x184x160xbf16>
    %51 = vector.shape_cast %50 : vector<1x184x160xbf16> to vector<184x160xbf16>
    %cst_35 = arith.constant dense<0.000000e+00> : vector<20x160xf32>
    %52 = tpu.matmul %49, %51, %cst_35 {dimension_numbers = #tpu.dot_dimension_numbers<[1], [0], [0], [1], [0, 0, 1, 1], [], []>} : vector<20x184xbf16>, vector<184x160xbf16>, vector<20x160xf32> -> vector<20x160xf32>
    %53 = vector.extract_strided_slice %46 {offsets = [0, 1, 0], sizes = [2, 10, 184], strides = [1, 1, 1]} : vector<2x12x184xf32> to vector<2x10x184xf32>
    %54 = arith.truncf %53 : vector<2x10x184xf32> to vector<2x10x184xbf16>
    %55 = vector.shape_cast %54 : vector<2x10x184xbf16> to vector<20x184xbf16>
    %c1_36 = arith.constant 1 : index
    %c0_37 = arith.constant 0 : index
    %c0_38 = arith.constant 0 : index
    %56 = vector.load %arg4[%c1_36, %c0_37, %c0_38] : memref<3x184x160xbf16, #tpu.memory_space<vmem>>, vector<1x184x160xbf16>
    %57 = vector.shape_cast %56 : vector<1x184x160xbf16> to vector<184x160xbf16>
    %cst_39 = arith.constant dense<0.000000e+00> : vector<20x160xf32>
    %58 = tpu.matmul %55, %57, %cst_39 {dimension_numbers = #tpu.dot_dimension_numbers<[1], [0], [0], [1], [0, 0, 1, 1], [], []>} : vector<20x184xbf16>, vector<184x160xbf16>, vector<20x160xf32> -> vector<20x160xf32>
    %59 = arith.addf %52, %58 : vector<20x160xf32>
    %60 = vector.extract_strided_slice %46 {offsets = [0, 2, 0], sizes = [2, 10, 184], strides = [1, 1, 1]} : vector<2x12x184xf32> to vector<2x10x184xf32>
    %61 = arith.truncf %60 : vector<2x10x184xf32> to vector<2x10x184xbf16>
    %62 = vector.shape_cast %61 : vector<2x10x184xbf16> to vector<20x184xbf16>
    %c2_40 = arith.constant 2 : index
    %c0_41 = arith.constant 0 : index
    %c0_42 = arith.constant 0 : index
    %63 = vector.load %arg4[%c2_40, %c0_41, %c0_42] : memref<3x184x160xbf16, #tpu.memory_space<vmem>>, vector<1x184x160xbf16>
    %64 = vector.shape_cast %63 : vector<1x184x160xbf16> to vector<184x160xbf16>
    %cst_43 = arith.constant dense<0.000000e+00> : vector<20x160xf32>
    %65 = tpu.matmul %62, %64, %cst_43 {dimension_numbers = #tpu.dot_dimension_numbers<[1], [0], [0], [1], [0, 0, 1, 1], [], []>} : vector<20x184xbf16>, vector<184x160xbf16>, vector<20x160xf32> -> vector<20x160xf32>
    %66 = arith.addf %59, %65 : vector<20x160xf32>
    %c0_44 = arith.constant 0 : index
    %c0_45 = arith.constant 0 : index
    %67 = vector.load %arg5[%c0_44, %c0_45] : memref<1x160xf32, #tpu.memory_space<vmem>>, vector<1x160xf32>
    %68 = vector.broadcast %67 : vector<1x160xf32> to vector<20x160xf32>
    %69 = arith.addf %66, %68 : vector<20x160xf32>
    %cst_46 = arith.constant 0.000000e+00 : f32
    %70 = vector.broadcast %cst_46 : f32 to vector<20x160xf32>
    %71 = arith.maximumf %69, %70 : vector<20x160xf32>
    %72 = vector.shape_cast %71 : vector<20x160xf32> to vector<2x5x2x160xf32>
    %73 = vector.extract_strided_slice %72 {offsets = [0, 0, 0, 0], sizes = [2, 5, 1, 160], strides = [1, 1, 1, 1]} : vector<2x5x2x160xf32> to vector<2x5x1x160xf32>
    %74 = vector.extract_strided_slice %72 {offsets = [0, 0, 1, 0], sizes = [2, 5, 1, 160], strides = [1, 1, 1, 1]} : vector<2x5x2x160xf32> to vector<2x5x1x160xf32>
    %75 = arith.maximumf %73, %74 : vector<2x5x1x160xf32>
    %76 = vector.shape_cast %75 : vector<2x5x1x160xf32> to vector<2x5x160xf32>
    %77 = vector.extract_strided_slice %76 {offsets = [0, 0, 0], sizes = [2, 5, 144], strides = [1, 1, 1]} : vector<2x5x160xf32> to vector<2x5x144xf32>
    %78 = vector.extract_strided_slice %76 {offsets = [0, 0, 16], sizes = [2, 5, 144], strides = [1, 1, 1]} : vector<2x5x160xf32> to vector<2x5x144xf32>
    %79 = arith.maximumf %77, %78 : vector<2x5x144xf32>
    %80 = vector.extract_strided_slice %79 {offsets = [0, 0, 0], sizes = [2, 3, 144], strides = [1, 1, 1]} : vector<2x5x144xf32> to vector<2x3x144xf32>
    %81 = arith.truncf %80 : vector<2x3x144xf32> to vector<2x3x144xbf16>
    %82 = vector.shape_cast %81 : vector<2x3x144xbf16> to vector<6x144xbf16>
    %c0_47 = arith.constant 0 : index
    %c0_48 = arith.constant 0 : index
    %c0_49 = arith.constant 0 : index
    %83 = vector.load %arg6[%c0_47, %c0_48, %c0_49] : memref<3x144x96xbf16, #tpu.memory_space<vmem>>, vector<1x144x96xbf16>
    %84 = vector.shape_cast %83 : vector<1x144x96xbf16> to vector<144x96xbf16>
    %cst_50 = arith.constant dense<0.000000e+00> : vector<6x96xf32>
    %85 = tpu.matmul %82, %84, %cst_50 {dimension_numbers = #tpu.dot_dimension_numbers<[1], [0], [0], [1], [0, 0, 1, 1], [], []>} : vector<6x144xbf16>, vector<144x96xbf16>, vector<6x96xf32> -> vector<6x96xf32>
    %86 = vector.extract_strided_slice %79 {offsets = [0, 1, 0], sizes = [2, 3, 144], strides = [1, 1, 1]} : vector<2x5x144xf32> to vector<2x3x144xf32>
    %87 = arith.truncf %86 : vector<2x3x144xf32> to vector<2x3x144xbf16>
    %88 = vector.shape_cast %87 : vector<2x3x144xbf16> to vector<6x144xbf16>
    %c1_51 = arith.constant 1 : index
    %c0_52 = arith.constant 0 : index
    %c0_53 = arith.constant 0 : index
    %89 = vector.load %arg6[%c1_51, %c0_52, %c0_53] : memref<3x144x96xbf16, #tpu.memory_space<vmem>>, vector<1x144x96xbf16>
    %90 = vector.shape_cast %89 : vector<1x144x96xbf16> to vector<144x96xbf16>
    %cst_54 = arith.constant dense<0.000000e+00> : vector<6x96xf32>
    %91 = tpu.matmul %88, %90, %cst_54 {dimension_numbers = #tpu.dot_dimension_numbers<[1], [0], [0], [1], [0, 0, 1, 1], [], []>} : vector<6x144xbf16>, vector<144x96xbf16>, vector<6x96xf32> -> vector<6x96xf32>
    %92 = arith.addf %85, %91 : vector<6x96xf32>
    %93 = vector.extract_strided_slice %79 {offsets = [0, 2, 0], sizes = [2, 3, 144], strides = [1, 1, 1]} : vector<2x5x144xf32> to vector<2x3x144xf32>
    %94 = arith.truncf %93 : vector<2x3x144xf32> to vector<2x3x144xbf16>
    %95 = vector.shape_cast %94 : vector<2x3x144xbf16> to vector<6x144xbf16>
    %c2_55 = arith.constant 2 : index
    %c0_56 = arith.constant 0 : index
    %c0_57 = arith.constant 0 : index
    %96 = vector.load %arg6[%c2_55, %c0_56, %c0_57] : memref<3x144x96xbf16, #tpu.memory_space<vmem>>, vector<1x144x96xbf16>
    %97 = vector.shape_cast %96 : vector<1x144x96xbf16> to vector<144x96xbf16>
    %cst_58 = arith.constant dense<0.000000e+00> : vector<6x96xf32>
    %98 = tpu.matmul %95, %97, %cst_58 {dimension_numbers = #tpu.dot_dimension_numbers<[1], [0], [0], [1], [0, 0, 1, 1], [], []>} : vector<6x144xbf16>, vector<144x96xbf16>, vector<6x96xf32> -> vector<6x96xf32>
    %99 = arith.addf %92, %98 : vector<6x96xf32>
    %c0_59 = arith.constant 0 : index
    %c0_60 = arith.constant 0 : index
    %100 = vector.load %arg7[%c0_59, %c0_60] : memref<1x96xf32, #tpu.memory_space<vmem>>, vector<1x96xf32>
    %101 = vector.broadcast %100 : vector<1x96xf32> to vector<6x96xf32>
    %102 = arith.addf %99, %101 : vector<6x96xf32>
    %cst_61 = arith.constant 0.000000e+00 : f32
    %103 = vector.broadcast %cst_61 : f32 to vector<6x96xf32>
    %104 = arith.maximumf %102, %103 : vector<6x96xf32>
    %105 = arith.truncf %104 : vector<6x96xf32> to vector<6x96xbf16>
    %106 = vector.shape_cast %105 : vector<6x96xbf16> to vector<2x3x96xbf16>
    %107 = vector.extract_strided_slice %106 {offsets = [0, 0, 0], sizes = [2, 1, 96], strides = [1, 1, 1]} : vector<2x3x96xbf16> to vector<2x1x96xbf16>
    %108 = vector.shape_cast %107 : vector<2x1x96xbf16> to vector<2x96xbf16>
    %c0_62 = arith.constant 0 : index
    %c0_63 = arith.constant 0 : index
    %c0_64 = arith.constant 0 : index
    %109 = vector.load %arg8[%c0_62, %c0_63, %c0_64] : memref<3x96x256xbf16, #tpu.memory_space<vmem>>, vector<1x96x256xbf16>
    %110 = vector.shape_cast %109 : vector<1x96x256xbf16> to vector<96x256xbf16>
    %cst_65 = arith.constant dense<0.000000e+00> : vector<2x256xf32>
    %111 = tpu.matmul %108, %110, %cst_65 {dimension_numbers = #tpu.dot_dimension_numbers<[1], [0], [0], [1], [0, 0, 1, 1], [], []>} : vector<2x96xbf16>, vector<96x256xbf16>, vector<2x256xf32> -> vector<2x256xf32>
    %112 = vector.extract_strided_slice %106 {offsets = [0, 1, 0], sizes = [2, 1, 96], strides = [1, 1, 1]} : vector<2x3x96xbf16> to vector<2x1x96xbf16>
    %113 = vector.shape_cast %112 : vector<2x1x96xbf16> to vector<2x96xbf16>
    %c1_66 = arith.constant 1 : index
    %c0_67 = arith.constant 0 : index
    %c0_68 = arith.constant 0 : index
    %114 = vector.load %arg8[%c1_66, %c0_67, %c0_68] : memref<3x96x256xbf16, #tpu.memory_space<vmem>>, vector<1x96x256xbf16>
    %115 = vector.shape_cast %114 : vector<1x96x256xbf16> to vector<96x256xbf16>
    %cst_69 = arith.constant dense<0.000000e+00> : vector<2x256xf32>
    %116 = tpu.matmul %113, %115, %cst_69 {dimension_numbers = #tpu.dot_dimension_numbers<[1], [0], [0], [1], [0, 0, 1, 1], [], []>} : vector<2x96xbf16>, vector<96x256xbf16>, vector<2x256xf32> -> vector<2x256xf32>
    %117 = arith.addf %111, %116 : vector<2x256xf32>
    %118 = vector.extract_strided_slice %106 {offsets = [0, 2, 0], sizes = [2, 1, 96], strides = [1, 1, 1]} : vector<2x3x96xbf16> to vector<2x1x96xbf16>
    %119 = vector.shape_cast %118 : vector<2x1x96xbf16> to vector<2x96xbf16>
    %c2_70 = arith.constant 2 : index
    %c0_71 = arith.constant 0 : index
    %c0_72 = arith.constant 0 : index
    %120 = vector.load %arg8[%c2_70, %c0_71, %c0_72] : memref<3x96x256xbf16, #tpu.memory_space<vmem>>, vector<1x96x256xbf16>
    %121 = vector.shape_cast %120 : vector<1x96x256xbf16> to vector<96x256xbf16>
    %cst_73 = arith.constant dense<0.000000e+00> : vector<2x256xf32>
    %122 = tpu.matmul %119, %121, %cst_73 {dimension_numbers = #tpu.dot_dimension_numbers<[1], [0], [0], [1], [0, 0, 1, 1], [], []>} : vector<2x96xbf16>, vector<96x256xbf16>, vector<2x256xf32> -> vector<2x256xf32>
    %123 = arith.addf %117, %122 : vector<2x256xf32>
    %c0_74 = arith.constant 0 : index
    %c0_75 = arith.constant 0 : index
    %124 = vector.load %arg9[%c0_74, %c0_75] : memref<1x256xf32, #tpu.memory_space<vmem>>, vector<1x256xf32>
    %125 = vector.broadcast %124 : vector<1x256xf32> to vector<2x256xf32>
    %126 = arith.addf %123, %125 : vector<2x256xf32>
    %cst_76 = arith.constant 0.000000e+00 : f32
    %127 = vector.broadcast %cst_76 : f32 to vector<2x256xf32>
    %128 = arith.maximumf %126, %127 : vector<2x256xf32>
    %129 = arith.truncf %128 : vector<2x256xf32> to vector<2x256xbf16>
    %c0_77 = arith.constant 0 : index
    %c0_78 = arith.constant 0 : index
    %130 = vector.load %arg10[%c0_77, %c0_78] : memref<256x128xbf16, #tpu.memory_space<vmem>>, vector<256x128xbf16>
    %cst_79 = arith.constant dense<0.000000e+00> : vector<2x128xf32>
    %131 = tpu.matmul %129, %130, %cst_79 {dimension_numbers = #tpu.dot_dimension_numbers<[1], [0], [0], [1], [0, 0, 1, 1], [], []>} : vector<2x256xbf16>, vector<256x128xbf16>, vector<2x128xf32> -> vector<2x128xf32>
    %c0_80 = arith.constant 0 : index
    %c0_81 = arith.constant 0 : index
    %132 = vector.load %arg11[%c0_80, %c0_81] : memref<1x128xf32, #tpu.memory_space<vmem>>, vector<1x128xf32>
    %133 = vector.broadcast %132 : vector<1x128xf32> to vector<2x128xf32>
    %134 = arith.addf %131, %133 : vector<2x128xf32>
    %c0_82 = arith.constant 0 : index
    %c0_83 = arith.constant 0 : index
    %135 = vector.load %arg12[%c0_82, %c0_83] : memref<2x128xf32, #tpu.memory_space<vmem>>, vector<2x128xf32>
    tpu.vector_store %arg12[%c0_82, %c0_83], %134 {strides = array<i32>} : memref<2x128xf32, #tpu.memory_space<vmem>>, vector<2x128xf32>,
    return
  }
  func.func @transform_0(%arg0: i32) -> (i32, i32, i32) {
    %c0_i32 = arith.constant 0 : i32
    %c0_i32_0 = arith.constant 0 : i32
    %c0_i32_1 = arith.constant 0 : i32
    return %arg0, %c0_i32, %c0_i32_0 : i32, i32, i32
  }
  func.func @transform_1(%arg0: i32) -> (i32, i32, i32) {
    %c0_i32 = arith.constant 0 : i32
    %c0_i32_0 = arith.constant 0 : i32
    %c0_i32_1 = arith.constant 0 : i32
    %c0_i32_2 = arith.constant 0 : i32
    return %c0_i32, %c0_i32_0, %c0_i32_1 : i32, i32, i32
  }
  func.func @transform_2(%arg0: i32) -> (i32, i32) {
    %c0_i32 = arith.constant 0 : i32
    %c0_i32_0 = arith.constant 0 : i32
    %c0_i32_1 = arith.constant 0 : i32
    return %c0_i32, %c0_i32_0 : i32, i32
  }
  func.func @transform_3(%arg0: i32) -> (i32, i32, i32) {
    %c0_i32 = arith.constant 0 : i32
    %c0_i32_0 = arith.constant 0 : i32
    %c0_i32_1 = arith.constant 0 : i32
    %c0_i32_2 = arith.constant 0 : i32
    return %c0_i32, %c0_i32_0, %c0_i32_1 : i32, i32, i32
  }
  func.func @transform_4(%arg0: i32) -> (i32, i32) {
    %c0_i32 = arith.constant 0 : i32
    %c0_i32_0 = arith.constant 0 : i32
    %c0_i32_1 = arith.constant 0 : i32
    return %c0_i32, %c0_i32_0 : i32, i32
  }
  func.func @transform_5(%arg0: i32) -> (i32, i32, i32) {
    %c0_i32 = arith.constant 0 : i32
    %c0_i32_0 = arith.constant 0 : i32
    %c0_i32_1 = arith.constant 0 : i32
    %c0_i32_2 = arith.constant 0 : i32
    return %c0_i32, %c0_i32_0, %c0_i32_1 : i32, i32, i32
  }
  func.func @transform_6(%arg0: i32) -> (i32, i32) {
    %c0_i32 = arith.constant 0 : i32
    %c0_i32_0 = arith.constant 0 : i32
    %c0_i32_1 = arith.constant 0 : i32
    return %c0_i32, %c0_i32_0 : i32, i32
  }
  func.func @transform_7(%arg0: i32) -> (i32, i32, i32) {
    %c0_i32 = arith.constant 0 : i32
    %c0_i32_0 = arith.constant 0 : i32
    %c0_i32_1 = arith.constant 0 : i32
    %c0_i32_2 = arith.constant 0 : i32
    return %c0_i32, %c0_i32_0, %c0_i32_1 : i32, i32, i32
  }
  func.func @transform_8(%arg0: i32) -> (i32, i32) {
    %c0_i32 = arith.constant 0 : i32
    %c0_i32_0 = arith.constant 0 : i32
    %c0_i32_1 = arith.constant 0 : i32
    return %c0_i32, %c0_i32_0 : i32, i32
  }
  func.func @transform_9(%arg0: i32) -> (i32, i32) {
    %c0_i32 = arith.constant 0 : i32
    %c0_i32_0 = arith.constant 0 : i32
    %c0_i32_1 = arith.constant 0 : i32
    return %c0_i32, %c0_i32_0 : i32, i32
  }
  func.func @transform_10(%arg0: i32) -> (i32, i32) {
    %c0_i32 = arith.constant 0 : i32
    %c0_i32_0 = arith.constant 0 : i32
    %c0_i32_1 = arith.constant 0 : i32
    return %c0_i32, %c0_i32_0 : i32, i32
  }
  func.func @transform_11(%arg0: i32) -> (i32, i32) {
    %c0_i32 = arith.constant 0 : i32
    %c0_i32_0 = arith.constant 0 : i32
    return %arg0, %c0_i32 : i32, i32
  }
}

</mosaic_0001>

<llo_original>
// kernel: cnet_forward.1
$region0: #{cnet_forward.1}
  #allocation0 [shape = 'u32[]', space=smem, size = 0x4, offset = 0x4, fixed_abs, tag = 'smem constant byte address 0x4 - core index']
  #allocation1 [shape = 'u32[72,128]{1,0:T(1,128)}', space=vmem, size = 0x9000, scoped, tag = 'internal scratch']
  %s0 = inlined_call_operand.vmem [shape: f32[2,28,84], index: 0, kind: input, shape index: {}]
  %s1 = inlined_call_operand.vmem [shape: bf16[5,84,192], index: 1, kind: input, shape index: {}]
  %s2 = inlined_call_operand.vmem [shape: f32[1,192], index: 2, kind: input, shape index: {}]
  %s3 = inlined_call_operand.vmem [shape: bf16[3,184,160], index: 3, kind: input, shape index: {}]
  %s4 = inlined_call_operand.vmem [shape: f32[1,160], index: 4, kind: input, shape index: {}]
  %s5 = inlined_call_operand.vmem [shape: bf16[3,144,96], index: 5, kind: input, shape index: {}]
  %s6 = inlined_call_operand.vmem [shape: f32[1,96], index: 6, kind: input, shape index: {}]
  %s7 = inlined_call_operand.vmem [shape: bf16[3,96,256], index: 7, kind: input, shape index: {}]
  %s8 = inlined_call_operand.vmem [shape: f32[1,256], index: 8, kind: input, shape index: {}]
  %s9 = inlined_call_operand.vmem [shape: bf16[256,128], index: 9, kind: input, shape index: {}]
  %s10 = inlined_call_operand.vmem [shape: f32[1,128], index: 10, kind: input, shape index: {}]
  %s11 = inlined_call_operand.hbm [shape: f32[2,128], index: 11, kind: output, shape index: {}]
  %s12 = sld [smem:[#allocation0]]
  $region54: #{cnet_forward.1} parent=0
    _
  %s14 = ssub.s32 1, %s12
  %s15 = scalar_select 0, %s14, %s12
  $region1: #{cnet_forward.1} parent=0
    #allocation2 [shape = 'u8[1024]{0}', space=vmem, size = 0x400, scoped, tag = 'output window, operand 0, single buffered']
    #allocation3 [shape = 's32[1]{0}', space=sflag, size = 0x4, scoped, tag = 'scoped memory for cnet_forward.1']
    %16 = vsyncpa [#allocation3], 0
    // Predicated region
    $region2: #{cnet_forward.1} parent=1 // pred_check
      _
    $region3: #{cnet_forward.1} parent=1 // pred_check_branch
      %18 = sbr.rel (0) target = $region5
    $region4: #{cnet_forward.1} parent=1 // pred_region
      _
    $region5: #{cnet_forward.1} parent=1 // pred_fallthru
      _
    // Predicated region
    $region6: #{cnet_forward.1} parent=1 // pred_check
      _
    $region7: #{cnet_forward.1} parent=1 // pred_check_branch
      %20 = sbr.rel (0) target = $region9
    $region8: #{cnet_forward.1} parent=1 // pred_region
      _
    $region9: #{cnet_forward.1} parent=1 // pred_fallthru
      _
    // Predicated region
    $region10: #{cnet_forward.1} parent=1 // pred_check
      _
    $region11: #{cnet_forward.1} parent=1 // pred_check_branch
      %22 = sbr.rel (0) target = $region13
    $region12: #{cnet_forward.1} parent=1 // pred_region
      _
    $region13: #{cnet_forward.1} parent=1 // pred_fallthru
      _
    // Predicated region
    $region14: #{cnet_forward.1} parent=1 // pred_check
      _
    $region15: #{cnet_forward.1} parent=1 // pred_check_branch
      %24 = sbr.rel (0) target = $region17
    $region16: #{cnet_forward.1} parent=1 // pred_region
      _
    $region17: #{cnet_forward.1} parent=1 // pred_fallthru
      _
    // Predicated region
    $region18: #{cnet_forward.1} parent=1 // pred_check
      _
    $region19: #{cnet_forward.1} parent=1 // pred_check_branch
      %26 = sbr.rel (0) target = $region21
    $region20: #{cnet_forward.1} parent=1 // pred_region
      _
    $region21: #{cnet_forward.1} parent=1 // pred_fallthru
      _
    // Predicated region
    $region22: #{cnet_forward.1} parent=1 // pred_check
      _
    $region23: #{cnet_forward.1} parent=1 // pred_check_branch
      %28 = sbr.rel (0) target = $region25
    $region24: #{cnet_forward.1} parent=1 // pred_region
      _
    $region25: #{cnet_forward.1} parent=1 // pred_fallthru
      _
    // Predicated region
    $region26: #{cnet_forward.1} parent=1 // pred_check
      _
    $region27: #{cnet_forward.1} parent=1 // pred_check_branch
      %30 = sbr.rel (0) target = $region29
    $region28: #{cnet_forward.1} parent=1 // pred_region
      _
    $region29: #{cnet_forward.1} parent=1 // pred_fallthru
      _
    // Predicated region
    $region30: #{cnet_forward.1} parent=1 // pred_check
      _
    $region31: #{cnet_forward.1} parent=1 // pred_check_branch
      %32 = sbr.rel (0) target = $region33
    $region32: #{cnet_forward.1} parent=1 // pred_region
      _
    $region33: #{cnet_forward.1} parent=1 // pred_fallthru
      _
    // Predicated region
    $region34: #{cnet_forward.1} parent=1 // pred_check
      _
    $region35: #{cnet_forward.1} parent=1 // pred_check_branch
      %34 = sbr.rel (0) target = $region37
    $region36: #{cnet_forward.1} parent=1 // pred_region
      _
    $region37: #{cnet_forward.1} parent=1 // pred_fallthru
      _
    // Predicated region
    $region38: #{cnet_forward.1} parent=1 // pred_check
      _
    $region39: #{cnet_forward.1} parent=1 // pred_check_branch
      %36 = sbr.rel (0) target = $region41
    $region40: #{cnet_forward.1} parent=1 // pred_region
      _
    $region41: #{cnet_forward.1} parent=1 // pred_fallthru
      _
    // Predicated region
    $region42: #{cnet_forward.1} parent=1 // pred_check
      _
    $region43: #{cnet_forward.1} parent=1 // pred_check_branch
      %38 = sbr.rel (0) target = $region45
    $region44: #{cnet_forward.1} parent=1 // pred_region
      _
    $region45: #{cnet_forward.1} parent=1 // pred_fallthru
      _
    %v40 = vld [vmem:[%s0] sm:$0xff]
    %v41 = vld [vmem:[%s0 + $0x8] sm:$0xff]
    %v42 = vld [vmem:[%s0 + $0x10] sm:$0xff]
    %v43 = vld [vmem:[%s0 + $0x20] sm:$0xff]
    %v44 = vld [vmem:[%s0 + $0x28] sm:$0xff]
    %v45 = vld [vmem:[%s0 + $0x30] sm:$0xff]
    %v46 = vpack.c.bf16 %v40, %v40
    %v47 = vpack.c.bf16 %v41, %v41
    %v48 = vpack.c.bf16 %v42, %v42
    %v49 = vpack.c.bf16 %v43, %v43
    %v50 = vpack.c.bf16 %v44, %v44
    %v51 = vpack.c.bf16 %v45, %v45
    %v52 = vld [vmem:[%s1] sm:$0xff]
    %v53 = vld [vmem:[%s1 + $0x8] sm:$0xff]
    %v54 = vld [vmem:[%s1 + $0x10] sm:$0xff]
    %v55 = vld [vmem:[%s1 + $0x18] sm:$0xff]
    %v56 = vld [vmem:[%s1 + $0x20] sm:$0xff]
    %v57 = vld [vmem:[%s1 + $0x28] sm:$0xff]
    %v58 = vld [vmem:[%s1 + $0x30] sm:$0xff]
    %v59 = vld [vmem:[%s1 + $0x38] sm:$0xff]
    %v60 = vld [vmem:[%s1 + $0x40] sm:$0xff]
    %v61 = vld [vmem:[%s1 + $0x48] sm:$0xff]
    %v62 = vld [vmem:[%s1 + $0x50] sm:$0x33]
    %v63 = vld [vmem:[%s0 + $0x1] sm:$0xff]
    %v64 = vld [vmem:[%s0 + $0x9] sm:$0xff]
    %v65 = vld [vmem:[%s0 + $0x11] sm:$0xff]
    %v66 = vld [vmem:[%s0 + $0x21] sm:$0xff]
    %v67 = vld [vmem:[%s0 + $0x29] sm:$0xff]
    %v68 = vld [vmem:[%s0 + $0x31] sm:$0xff]
    %v69 = vpack.c.bf16 %v63, %v63
    %v70 = vpack.c.bf16 %v64, %v64
    %v71 = vpack.c.bf16 %v65, %v65
    %v72 = vpack.c.bf16 %v66, %v66
    %v73 = vpack.c.bf16 %v67, %v67
    %v74 = vpack.c.bf16 %v68, %v68
    %s75 = scalar_lea.vmem %s1, 88
    %v76 = vld [vmem:[%s75] sm:$0xff]
    %v77 = vld [vmem:[%s75 + $0x8] sm:$0xff]
    %v78 = vld [vmem:[%s75 + $0x10] sm:$0xff]
    %v79 = vld [vmem:[%s75 + $0x18] sm:$0xff]
    %v80 = vld [vmem:[%s75 + $0x20] sm:$0xff]
    %v81 = vld [vmem:[%s75 + $0x28] sm:$0xff]
    %v82 = vld [vmem:[%s75 + $0x30] sm:$0xff]
    %v83 = vld [vmem:[%s75 + $0x38] sm:$0xff]
    %v84 = vld [vmem:[%s75 + $0x40] sm:$0xff]
    %v85 = vld [vmem:[%s75 + $0x48] sm:$0xff]
    %v86 = vld [vmem:[%s75 + $0x50] sm:$0x33]
    %v93 = vunpack.c.l.b16 %v69
    %v94 = vunpack.c.l.b16 %v70
    %v95 = vunpack.c.l.b16 %v71
    %v96 = vunpack.c.l.b16 %v72
    %v97 = vunpack.c.l.b16 %v73
    %v98 = vunpack.c.l.b16 %v74
    %v99 = vpack.c.b16 %v94, %v93
    %v100 = vpack.c.b16 %v96, %v95
    %v101 = vpack.c.b16 %v98, %v97
    %v113 = vunpack.c.l.b16 %v76
    %v114 = vunpack.c.h.b16 %v76
    %v115 = vunpack.c.l.b16 %v77
    %v116 = vunpack.c.h.b16 %v77
    %v117 = vunpack.c.l.b16 %v78
    %v118 = vunpack.c.h.b16 %v78
    %v119 = vunpack.c.l.b16 %v79
    %v120 = vunpack.c.h.b16 %v79
    %v121 = vunpack.c.l.b16 %v80
    %v122 = vunpack.c.h.b16 %v80
    %v123 = vunpack.c.l.b16 %v81
    %v124 = vunpack.c.h.b16 %v81
    %v125 = vunpack.c.l.b16 %v82
    %v126 = vunpack.c.h.b16 %v82
    %v127 = vunpack.c.l.b16 %v83
    %v128 = vunpack.c.h.b16 %v83
    %v129 = vunpack.c.l.b16 %v84
    %v130 = vunpack.c.h.b16 %v84
    %v131 = vunpack.c.l.b16 %v85
    %v132 = vunpack.c.h.b16 %v85
    %v133 = vunpack.c.l.b16 %v86
    %v134 = vunpack.c.h.b16 %v86
    %v135 = vpack.c.b16 %v115, %v113
    %v136 = vpack.c.b16 %v116, %v114
    %v137 = vpack.c.b16 %v119, %v117
    %v138 = vpack.c.b16 %v120, %v118
    %v139 = vpack.c.b16 %v123, %v121
    %v140 = vpack.c.b16 %v124, %v122
    %v141 = vpack.c.b16 %v127, %v125
    %v142 = vpack.c.b16 %v128, %v126
    %v143 = vpack.c.b16 %v131, %v129
    %v144 = vpack.c.b16 %v132, %v130
    %v145 = vpack.c.b16 %v133, %v133
    %v146 = vpack.c.b16 %v134, %v134
    %vm157 = vcmask 687104
    %v159 = vsel %vm157, %v99, 0
    %v162 = vsel %vm157, %v100, 0
    %v165 = vsel %vm157, %v101, 0
    %vm167 = vcmask 1041408
    %v169 = vsel %vm167, %v145, 0
    %v172 = vsel %vm167, %v146, 0
    %174 = vmatpush.bf16.msra.mxu0 0
    %175 = vmatpush.bf16.msra.mxu0 0
    %176 = vmatpush.bf16.msra.mxu0 %v169
    %177 = vmatpush.bf16.msra.mxu0 %v143
    %178 = vmatpush.bf16.msra.mxu0 %v141
    %179 = vmatpush.bf16.msra.mxu0 %v139
    %180 = vmatpush.bf16.msra.mxu0 %v137
    %181 = vmatpush.bf16.msra.mxu0 %v135
    %182 = vmatmul.bf16.gmra.mxu0 %v159
    %v183 = vpop.f32.mrf.mxu0
    %v184 = vadd.f32 0.0, %v183
    %v185 = vpop.f32.mrf.mxu0
    %v186 = vadd.f32 0.0, %v185
    %187 = vmatmul.bf16.gmra.mxu0 %v162
    %v188 = vpop.f32.mrf.mxu0
    %v189 = vadd.f32 0.0, %v188
    %v190 = vpop.f32.mrf.mxu0
    %v191 = vadd.f32 0.0, %v190
    %192 = vmatmul.bf16.gmra.mxu0 %v165
    %v193 = vpop.f32.mrf.mxu0
    %v194 = vadd.f32 0.0, %v193
    %v195 = vpop.f32.mrf.mxu0
    %v196 = vadd.f32 0.0, %v195
    %197 = vdwg.mxu0
    %198 = vmatpush.bf16.msra.mxu0 0
    %199 = vmatpush.bf16.msra.mxu0 0
    %200 = vmatpush.bf16.msra.mxu0 %v172
    %201 = vmatpush.bf16.msra.mxu0 %v144
    %202 = vmatpush.bf16.msra.mxu0 %v142
    %203 = vmatpush.bf16.msra.mxu0 %v140
    %204 = vmatpush.bf16.msra.mxu0 %v138
    %205 = vmatpush.bf16.msra.mxu0 %v136
    %206 = vmatmul.bf16.gmra.mxu0 %v159
    %v207 = vpop.f32.mrf.mxu0
    %v208 = vadd.f32 0.0, %v207
    %v209 = vpop.f32.mrf.mxu0
    %v210 = vadd.f32 0.0, %v209
    %211 = vmatmul.bf16.gmra.mxu0 %v162
    %v212 = vpop.f32.mrf.mxu0
    %v213 = vadd.f32 0.0, %v212
    %v214 = vpop.f32.mrf.mxu0
    %v215 = vadd.f32 0.0, %v214
    %216 = vmatmul.bf16.gmra.mxu0 %v165
    %v217 = vpop.f32.mrf.mxu0
    %v218 = vadd.f32 0.0, %v217
    %v219 = vpop.f32.mrf.mxu0
    %v220 = vadd.f32 0.0, %v219
    %221 = vdwg.mxu0
    %v228 = vunpack.c.l.b16 %v46
    %v229 = vunpack.c.l.b16 %v47
    %v230 = vunpack.c.l.b16 %v48
    %v231 = vunpack.c.l.b16 %v49
    %v232 = vunpack.c.l.b16 %v50
    %v233 = vunpack.c.l.b16 %v51
    %v234 = vpack.c.b16 %v229, %v228
    %v235 = vpack.c.b16 %v231, %v230
    %v236 = vpack.c.b16 %v233, %v232
    %v248 = vunpack.c.l.b16 %v52
    %v249 = vunpack.c.h.b16 %v52
    %v250 = vunpack.c.l.b16 %v53
    %v251 = vunpack.c.h.b16 %v53
    %v252 = vunpack.c.l.b16 %v54
    %v253 = vunpack.c.h.b16 %v54
    %v254 = vunpack.c.l.b16 %v55
    %v255 = vunpack.c.h.b16 %v55
    %v256 = vunpack.c.l.b16 %v56
    %v257 = vunpack.c.h.b16 %v56
    %v258 = vunpack.c.l.b16 %v57
    %v259 = vunpack.c.h.b16 %v57
    %v260 = vunpack.c.l.b16 %v58
    %v261 = vunpack.c.h.b16 %v58
    %v262 = vunpack.c.l.b16 %v59
    %v263 = vunpack.c.h.b16 %v59
    %v264 = vunpack.c.l.b16 %v60
    %v265 = vunpack.c.h.b16 %v60
    %v266 = vunpack.c.l.b16 %v61
    %v267 = vunpack.c.h.b16 %v61
    %v268 = vunpack.c.l.b16 %v62
    %v269 = vunpack.c.h.b16 %v62
    %v270 = vpack.c.b16 %v250, %v248
    %v271 = vpack.c.b16 %v251, %v249
    %v272 = vpack.c.b16 %v254, %v252
    %v273 = vpack.c.b16 %v255, %v253
    %v274 = vpack.c.b16 %v258, %v256
    %v275 = vpack.c.b16 %v259, %v257
    %v276 = vpack.c.b16 %v262, %v260
    %v277 = vpack.c.b16 %v263, %v261
    %v278 = vpack.c.b16 %v266, %v264
    %v279 = vpack.c.b16 %v267, %v265
    %v280 = vpack.c.b16 %v268, %v268
    %v281 = vpack.c.b16 %v269, %v269
    %v293 = vsel %vm157, %v234, 0
    %v296 = vsel %vm157, %v235, 0
    %v299 = vsel %vm157, %v236, 0
    %v302 = vsel %vm167, %v280, 0
    %v305 = vsel %vm167, %v281, 0
    %307 = vmatpush.bf16.msra.mxu0 0
    %308 = vmatpush.bf16.msra.mxu0 0
    %309 = vmatpush.bf16.msra.mxu0 %v302
    %310 = vmatpush.bf16.msra.mxu0 %v278
    %311 = vmatpush.bf16.msra.mxu0 %v276
    %312 = vmatpush.bf16.msra.mxu0 %v274
    %313 = vmatpush.bf16.msra.mxu0 %v272
    %314 = vmatpush.bf16.msra.mxu0 %v270
    %315 = vmatmul.bf16.gmra.mxu0 %v293
    %v316 = vpop.f32.mrf.mxu0
    %v317 = vadd.f32 %v184, %v316
    %v318 = vpop.f32.mrf.mxu0
    %v319 = vadd.f32 %v186, %v318
    %320 = vmatmul.bf16.gmra.mxu0 %v296
    %v321 = vpop.f32.mrf.mxu0
    %v322 = vadd.f32 %v189, %v321
    %v323 = vpop.f32.mrf.mxu0
    %v324 = vadd.f32 %v191, %v323
    %325 = vmatmul.bf16.gmra.mxu0 %v299
    %v326 = vpop.f32.mrf.mxu0
    %v327 = vadd.f32 %v194, %v326
    %v328 = vpop.f32.mrf.mxu0
    %v329 = vadd.f32 %v196, %v328
    %330 = vdwg.mxu0
    %331 = vmatpush.bf16.msra.mxu0 0
    %332 = vmatpush.bf16.msra.mxu0 0
    %333 = vmatpush.bf16.msra.mxu0 %v305
    %334 = vmatpush.bf16.msra.mxu0 %v279
    %335 = vmatpush.bf16.msra.mxu0 %v277
    %336 = vmatpush.bf16.msra.mxu0 %v275
    %337 = vmatpush.bf16.msra.mxu0 %v273
    %338 = vmatpush.bf16.msra.mxu0 %v271
    %339 = vmatmul.bf16.gmra.mxu0 %v293
    %v340 = vpop.f32.mrf.mxu0
    %v341 = vadd.f32 %v208, %v340
    %v342 = vpop.f32.mrf.mxu0
    %v343 = vadd.f32 %v210, %v342
    %344 = vmatmul.bf16.gmra.mxu0 %v296
    %v345 = vpop.f32.mrf.mxu0
    %v346 = vadd.f32 %v213, %v345
    %v347 = vpop.f32.mrf.mxu0
    %v348 = vadd.f32 %v215, %v347
    %349 = vmatmul.bf16.gmra.mxu0 %v299
    %v350 = vpop.f32.mrf.mxu0
    %v351 = vadd.f32 %v218, %v350
    %v352 = vpop.f32.mrf.mxu0
    %v353 = vadd.f32 %v220, %v352
    %354 = vdwg.mxu0
    %v355 = vld [vmem:[%s0 + $0x2] sm:$0xff]
    %v356 = vld [vmem:[%s0 + $0xa] sm:$0xff]
    %v357 = vld [vmem:[%s0 + $0x12] sm:$0xff]
    %v358 = vld [vmem:[%s0 + $0x22] sm:$0xff]
    %v359 = vld [vmem:[%s0 + $0x2a] sm:$0xff]
    %v360 = vld [vmem:[%s0 + $0x32] sm:$0xff]
    %v361 = vpack.c.bf16 %v355, %v355
    %v362 = vpack.c.bf16 %v356, %v356
    %v363 = vpack.c.bf16 %v357, %v357
    %v364 = vpack.c.bf16 %v358, %v358
    %v365 = vpack.c.bf16 %v359, %v359
    %v366 = vpack.c.bf16 %v360, %v360
    %s367 = scalar_lea.vmem %s1, 176
    %v368 = vld [vmem:[%s367] sm:$0xff]
    %v369 = vld [vmem:[%s367 + $0x8] sm:$0xff]
    %v370 = vld [vmem:[%s367 + $0x10] sm:$0xff]
    %v371 = vld [vmem:[%s367 + $0x18] sm:$0xff]
    %v372 = vld [vmem:[%s367 + $0x20] sm:$0xff]
    %v373 = vld [vmem:[%s367 + $0x28] sm:$0xff]
    %v374 = vld [vmem:[%s367 + $0x30] sm:$0xff]
    %v375 = vld [vmem:[%s367 + $0x38] sm:$0xff]
    %v376 = vld [vmem:[%s367 + $0x40] sm:$0xff]
    %v377 = vld [vmem:[%s367 + $0x48] sm:$0xff]
    %v378 = vld [vmem:[%s367 + $0x50] sm:$0x33]
    %v385 = vunpack.c.l.b16 %v361
    %v386 = vunpack.c.l.b16 %v362
    %v387 = vunpack.c.l.b16 %v363
    %v388 = vunpack.c.l.b16 %v364
    %v389 = vunpack.c.l.b16 %v365
    %v390 = vunpack.c.l.b16 %v366
    %v391 = vpack.c.b16 %v386, %v385
    %v392 = vpack.c.b16 %v388, %v387
    %v393 = vpack.c.b16 %v390, %v389
    %v405 = vunpack.c.l.b16 %v368
    %v406 = vunpack.c.h.b16 %v368
    %v407 = vunpack.c.l.b16 %v369
    %v408 = vunpack.c.h.b16 %v369
    %v409 = vunpack.c.l.b16 %v370
    %v410 = vunpack.c.h.b16 %v370
    %v411 = vunpack.c.l.b16 %v371
    %v412 = vunpack.c.h.b16 %v371
    %v413 = vunpack.c.l.b16 %v372
    %v414 = vunpack.c.h.b16 %v372
    %v415 = vunpack.c.l.b16 %v373
    %v416 = vunpack.c.h.b16 %v373
    %v417 = vunpack.c.l.b16 %v374
    %v418 = vunpack.c.h.b16 %v374
    %v419 = vunpack.c.l.b16 %v375
    %v420 = vunpack.c.h.b16 %v375
    %v421 = vunpack.c.l.b16 %v376
    %v422 = vunpack.c.h.b16 %v376
    %v423 = vunpack.c.l.b16 %v377
    %v424 = vunpack.c.h.b16 %v377
    %v425 = vunpack.c.l.b16 %v378
    %v426 = vunpack.c.h.b16 %v378
    %v427 = vpack.c.b16 %v407, %v405
    %v428 = vpack.c.b16 %v408, %v406
    %v429 = vpack.c.b16 %v411, %v409
    %v430 = vpack.c.b16 %v412, %v410
    %v431 = vpack.c.b16 %v415, %v413
    %v432 = vpack.c.b16 %v416, %v414
    %v433 = vpack.c.b16 %v419, %v417
    %v434 = vpack.c.b16 %v420, %v418
    %v435 = vpack.c.b16 %v423, %v421
    %v436 = vpack.c.b16 %v424, %v422
    %v437 = vpack.c.b16 %v425, %v425
    %v438 = vpack.c.b16 %v426, %v426
    %v450 = vsel %vm157, %v391, 0
    %v453 = vsel %vm157, %v392, 0
    %v456 = vsel %vm157, %v393, 0
    %v459 = vsel %vm167, %v437, 0
    %v462 = vsel %vm167, %v438, 0
    %464 = vmatpush.bf16.msra.mxu0 0
    %465 = vmatpush.bf16.msra.mxu0 0
    %466 = vmatpush.bf16.msra.mxu0 %v459
    %467 = vmatpush.bf16.msra.mxu0 %v435
    %468 = vmatpush.bf16.msra.mxu0 %v433
    %469 = vmatpush.bf16.msra.mxu0 %v431
    %470 = vmatpush.bf16.msra.mxu0 %v429
    %471 = vmatpush.bf16.msra.mxu0 %v427
    %472 = vmatmul.bf16.gmra.mxu0 %v450
    %v473 = vpop.f32.mrf.mxu0
    %v474 = vadd.f32 0.0, %v473
    %v475 = vpop.f32.mrf.mxu0
    %v476 = vadd.f32 0.0, %v475
    %477 = vmatmul.bf16.gmra.mxu0 %v453
    %v478 = vpop.f32.mrf.mxu0
    %v479 = vadd.f32 0.0, %v478
    %v480 = vpop.f32.mrf.mxu0
    %v481 = vadd.f32 0.0, %v480
    %482 = vmatmul.bf16.gmra.mxu0 %v456
    %v483 = vpop.f32.mrf.mxu0
    %v484 = vadd.f32 0.0, %v483
    %v485 = vpop.f32.mrf.mxu0
    %v486 = vadd.f32 0.0, %v485
    %487 = vdwg.mxu0
    %488 = vmatpush.bf16.msra.mxu0 0
    %489 = vmatpush.bf16.msra.mxu0 0
    %490 = vmatpush.bf16.msra.mxu0 %v462
    %491 = vmatpush.bf16.msra.mxu0 %v436
    %492 = vmatpush.bf16.msra.mxu0 %v434
    %493 = vmatpush.bf16.msra.mxu0 %v432
    %494 = vmatpush.bf16.msra.mxu0 %v430
    %495 = vmatpush.bf16.msra.mxu0 %v428
    %496 = vmatmul.bf16.gmra.mxu0 %v450
    %v497 = vpop.f32.mrf.mxu0
    %v498 = vadd.f32 0.0, %v497
    %v499 = vpop.f32.mrf.mxu0
    %v500 = vadd.f32 0.0, %v499
    %501 = vmatmul.bf16.gmra.mxu0 %v453
    %v502 = vpop.f32.mrf.mxu0
    %v503 = vadd.f32 0.0, %v502
    %v504 = vpop.f32.mrf.mxu0
    %v505 = vadd.f32 0.0, %v504
    %506 = vmatmul.bf16.gmra.mxu0 %v456
    %v507 = vpop.f32.mrf.mxu0
    %v508 = vadd.f32 0.0, %v507
    %v509 = vpop.f32.mrf.mxu0
    %v510 = vadd.f32 0.0, %v509
    %511 = vdwg.mxu0
    %v512 = vadd.f32 %v317, %v474
    %v513 = vadd.f32 %v341, %v498
    %v514 = vadd.f32 %v319, %v476
    %v515 = vadd.f32 %v343, %v500
    %v516 = vadd.f32 %v322, %v479
    %v517 = vadd.f32 %v346, %v503
    %v518 = vadd.f32 %v324, %v481
    %v519 = vadd.f32 %v348, %v505
    %v520 = vadd.f32 %v327, %v484
    %v521 = vadd.f32 %v351, %v508
    %v522 = vadd.f32 %v329, %v486
    %v523 = vadd.f32 %v353, %v510
    %v524 = vld [vmem:[%s0 + $0x3] sm:$0xff]
    %v525 = vld [vmem:[%s0 + $0xb] sm:$0xff]
    %v526 = vld [vmem:[%s0 + $0x13] sm:$0xff]
    %v527 = vld [vmem:[%s0 + $0x23] sm:$0xff]
    %v528 = vld [vmem:[%s0 + $0x2b] sm:$0xff]
    %v529 = vld [vmem:[%s0 + $0x33] sm:$0xff]
    %v530 = vpack.c.bf16 %v524, %v524
    %v531 = vpack.c.bf16 %v525, %v525
    %v532 = vpack.c.bf16 %v526, %v526
    %v533 = vpack.c.bf16 %v527, %v527
    %v534 = vpack.c.bf16 %v528, %v528
    %v535 = vpack.c.bf16 %v529, %v529
    %s536 = scalar_lea.vmem %s1, 264
    %v537 = vld [vmem:[%s536] sm:$0xff]
    %v538 = vld [vmem:[%s536 + $0x8] sm:$0xff]
    %v539 = vld [vmem:[%s536 + $0x10] sm:$0xff]
    %v540 = vld [vmem:[%s536 + $0x18] sm:$0xff]
    %v541 = vld [vmem:[%s536 + $0x20] sm:$0xff]
    %v542 = vld [vmem:[%s536 + $0x28] sm:$0xff]
    %v543 = vld [vmem:[%s536 + $0x30] sm:$0xff]
    %v544 = vld [vmem:[%s536 + $0x38] sm:$0xff]
    %v545 = vld [vmem:[%s536 + $0x40] sm:$0xff]
    %v546 = vld [vmem:[%s536 + $0x48] sm:$0xff]
    %v547 = vld [vmem:[%s536 + $0x50] sm:$0x33]
    %v554 = vunpack.c.l.b16 %v530
    %v555 = vunpack.c.l.b16 %v531
    %v556 = vunpack.c.l.b16 %v532
    %v557 = vunpack.c.l.b16 %v533
    %v558 = vunpack.c.l.b16 %v534
    %v559 = vunpack.c.l.b16 %v535
    %v560 = vpack.c.b16 %v555, %v554
    %v561 = vpack.c.b16 %v557, %v556
    %v562 = vpack.c.b16 %v559, %v558
    %v574 = vunpack.c.l.b16 %v537
    %v575 = vunpack.c.h.b16 %v537
    %v576 = vunpack.c.l.b16 %v538
    %v577 = vunpack.c.h.b16 %v538
    %v578 = vunpack.c.l.b16 %v539
    %v579 = vunpack.c.h.b16 %v539
    %v580 = vunpack.c.l.b16 %v540
    %v581 = vunpack.c.h.b16 %v540
    %v582 = vunpack.c.l.b16 %v541
    %v583 = vunpack.c.h.b16 %v541
    %v584 = vunpack.c.l.b16 %v542
    %v585 = vunpack.c.h.b16 %v542
    %v586 = vunpack.c.l.b16 %v543
    %v587 = vunpack.c.h.b16 %v543
    %v588 = vunpack.c.l.b16 %v544
    %v589 = vunpack.c.h.b16 %v544
    %v590 = vunpack.c.l.b16 %v545
    %v591 = vunpack.c.h.b16 %v545
    %v592 = vunpack.c.l.b16 %v546
    %v593 = vunpack.c.h.b16 %v546
    %v594 = vunpack.c.l.b16 %v547
    %v595 = vunpack.c.h.b16 %v547
    %v596 = vpack.c.b16 %v576, %v574
    %v597 = vpack.c.b16 %v577, %v575
    %v598 = vpack.c.b16 %v580, %v578
    %v599 = vpack.c.b16 %v581, %v579
    %v600 = vpack.c.b16 %v584, %v582
    %v601 = vpack.c.b16 %v585, %v583
    %v602 = vpack.c.b16 %v588, %v586
    %v603 = vpack.c.b16 %v589, %v587
    %v604 = vpack.c.b16 %v592, %v590
    %v605 = vpack.c.b16 %v593, %v591
    %v606 = vpack.c.b16 %v594, %v594
    %v607 = vpack.c.b16 %v595, %v595
    %v619 = vsel %vm157, %v560, 0
    %v622 = vsel %vm157, %v561, 0
    %v625 = vsel %vm157, %v562, 0
    %v628 = vsel %vm167, %v606, 0
    %v631 = vsel %vm167, %v607, 0
    %633 = vmatpush.bf16.msra.mxu0 0
    %634 = vmatpush.bf16.msra.mxu0 0
    %635 = vmatpush.bf16.msra.mxu0 %v628
    %636 = vmatpush.bf16.msra.mxu0 %v604
    %637 = vmatpush.bf16.msra.mxu0 %v602
    %638 = vmatpush.bf16.msra.mxu0 %v600
    %639 = vmatpush.bf16.msra.mxu0 %v598
    %640 = vmatpush.bf16.msra.mxu0 %v596
    %641 = vmatmul.bf16.gmra.mxu0 %v619
    %v642 = vpop.f32.mrf.mxu0
    %v643 = vadd.f32 0.0, %v642
    %v644 = vpop.f32.mrf.mxu0
    %v645 = vadd.f32 0.0, %v644
    %646 = vmatmul.bf16.gmra.mxu0 %v622
    %v647 = vpop.f32.mrf.mxu0
    %v648 = vadd.f32 0.0, %v647
    %v649 = vpop.f32.mrf.mxu0
    %v650 = vadd.f32 0.0, %v649
    %651 = vmatmul.bf16.gmra.mxu0 %v625
    %v652 = vpop.f32.mrf.mxu0
    %v653 = vadd.f32 0.0, %v652
    %v654 = vpop.f32.mrf.mxu0
    %v655 = vadd.f32 0.0, %v654
    %656 = vdwg.mxu0
    %657 = vmatpush.bf16.msra.mxu0 0
    %658 = vmatpush.bf16.msra.mxu0 0
    %659 = vmatpush.bf16.msra.mxu0 %v631
    %660 = vmatpush.bf16.msra.mxu0 %v605
    %661 = vmatpush.bf16.msra.mxu0 %v603
    %662 = vmatpush.bf16.msra.mxu0 %v601
    %663 = vmatpush.bf16.msra.mxu0 %v599
    %664 = vmatpush.bf16.msra.mxu0 %v597
    %665 = vmatmul.bf16.gmra.mxu0 %v619
    %v666 = vpop.f32.mrf.mxu0
    %v667 = vadd.f32 0.0, %v666
    %v668 = vpop.f32.mrf.mxu0
    %v669 = vadd.f32 0.0, %v668
    %670 = vmatmul.bf16.gmra.mxu0 %v622
    %v671 = vpop.f32.mrf.mxu0
    %v672 = vadd.f32 0.0, %v671
    %v673 = vpop.f32.mrf.mxu0
    %v674 = vadd.f32 0.0, %v673
    %675 = vmatmul.bf16.gmra.mxu0 %v625
    %v676 = vpop.f32.mrf.mxu0
    %v677 = vadd.f32 0.0, %v676
    %v678 = vpop.f32.mrf.mxu0
    %v679 = vadd.f32 0.0, %v678
    %680 = vdwg.mxu0
    %v681 = vadd.f32 %v512, %v643
    %v682 = vadd.f32 %v513, %v667
    %v683 = vadd.f32 %v514, %v645
    %v684 = vadd.f32 %v515, %v669
    %v685 = vadd.f32 %v516, %v648
    %v686 = vadd.f32 %v517, %v672
    %v687 = vadd.f32 %v518, %v650
    %v688 = vadd.f32 %v519, %v674
    %v689 = vadd.f32 %v520, %v653
    %v690 = vadd.f32 %v521, %v677
    %v691 = vadd.f32 %v522, %v655
    %v692 = vadd.f32 %v523, %v679
    %v693 = vld [vmem:[%s0 + $0x4] sm:$0xff]
    %v694 = vld [vmem:[%s0 + $0xc] sm:$0xff]
    %v695 = vld [vmem:[%s0 + $0x14] sm:$0xff]
    %v696 = vld [vmem:[%s0 + $0x24] sm:$0xff]
    %v697 = vld [vmem:[%s0 + $0x2c] sm:$0xff]
    %v698 = vld [vmem:[%s0 + $0x34] sm:$0xff]
    %v699 = vpack.c.bf16 %v693, %v693
    %v700 = vpack.c.bf16 %v694, %v694
    %v701 = vpack.c.bf16 %v695, %v695
    %v702 = vpack.c.bf16 %v696, %v696
    %v703 = vpack.c.bf16 %v697, %v697
    %v704 = vpack.c.bf16 %v698, %v698
    %s705 = scalar_lea.vmem %s1, 352
    %v706 = vld [vmem:[%s705] sm:$0xff]
    %v707 = vld [vmem:[%s705 + $0x8] sm:$0xff]
    %v708 = vld [vmem:[%s705 + $0x10] sm:$0xff]
    %v709 = vld [vmem:[%s705 + $0x18] sm:$0xff]
    %v710 = vld [vmem:[%s705 + $0x20] sm:$0xff]
    %v711 = vld [vmem:[%s705 + $0x28] sm:$0xff]
    %v712 = vld [vmem:[%s705 + $0x30] sm:$0xff]
    %v713 = vld [vmem:[%s705 + $0x38] sm:$0xff]
    %v714 = vld [vmem:[%s705 + $0x40] sm:$0xff]
    %v715 = vld [vmem:[%s705 + $0x48] sm:$0xff]
    %v716 = vld [vmem:[%s705 + $0x50] sm:$0x33]
    %v723 = vunpack.c.l.b16 %v699
    %v724 = vunpack.c.l.b16 %v700
    %v725 = vunpack.c.l.b16 %v701
    %v726 = vunpack.c.l.b16 %v702
    %v727 = vunpack.c.l.b16 %v703
    %v728 = vunpack.c.l.b16 %v704
    %v729 = vpack.c.b16 %v724, %v723
    %v730 = vpack.c.b16 %v726, %v725
    %v731 = vpack.c.b16 %v728, %v727
    %v743 = vunpack.c.l.b16 %v706
    %v744 = vunpack.c.h.b16 %v706
    %v745 = vunpack.c.l.b16 %v707
    %v746 = vunpack.c.h.b16 %v707
    %v747 = vunpack.c.l.b16 %v708
    %v748 = vunpack.c.h.b16 %v708
    %v749 = vunpack.c.l.b16 %v709
    %v750 = vunpack.c.h.b16 %v709
    %v751 = vunpack.c.l.b16 %v710
    %v752 = vunpack.c.h.b16 %v710
    %v753 = vunpack.c.l.b16 %v711
    %v754 = vunpack.c.h.b16 %v711
    %v755 = vunpack.c.l.b16 %v712
    %v756 = vunpack.c.h.b16 %v712
    %v757 = vunpack.c.l.b16 %v713
    %v758 = vunpack.c.h.b16 %v713
    %v759 = vunpack.c.l.b16 %v714
    %v760 = vunpack.c.h.b16 %v714
    %v761 = vunpack.c.l.b16 %v715
    %v762 = vunpack.c.h.b16 %v715
    %v763 = vunpack.c.l.b16 %v716
    %v764 = vunpack.c.h.b16 %v716
    %v765 = vpack.c.b16 %v745, %v743
    %v766 = vpack.c.b16 %v746, %v744
    %v767 = vpack.c.b16 %v749, %v747
    %v768 = vpack.c.b16 %v750, %v748
    %v769 = vpack.c.b16 %v753, %v751
    %v770 = vpack.c.b16 %v754, %v752
    %v771 = vpack.c.b16 %v757, %v755
    %v772 = vpack.c.b16 %v758, %v756
    %v773 = vpack.c.b16 %v761, %v759
    %v774 = vpack.c.b16 %v762, %v760
    %v775 = vpack.c.b16 %v763, %v763
    %v776 = vpack.c.b16 %v764, %v764
    %v788 = vsel %vm157, %v729, 0
    %v791 = vsel %vm157, %v730, 0
    %v794 = vsel %vm157, %v731, 0
    %v797 = vsel %vm167, %v775, 0
    %v800 = vsel %vm167, %v776, 0
    %802 = vmatpush.bf16.msra.mxu0 0
    %803 = vmatpush.bf16.msra.mxu0 0
    %804 = vmatpush.bf16.msra.mxu0 %v797
    %805 = vmatpush.bf16.msra.mxu0 %v773
    %806 = vmatpush.bf16.msra.mxu0 %v771
    %807 = vmatpush.bf16.msra.mxu0 %v769
    %808 = vmatpush.bf16.msra.mxu0 %v767
    %809 = vmatpush.bf16.msra.mxu0 %v765
    %810 = vmatmul.bf16.gmra.mxu0 %v788
    %v811 = vpop.f32.mrf.mxu0
    %v812 = vadd.f32 0.0, %v811
    %v813 = vpop.f32.mrf.mxu0
    %v814 = vadd.f32 0.0, %v813
    %815 = vmatmul.bf16.gmra.mxu0 %v791
    %v816 = vpop.f32.mrf.mxu0
    %v817 = vadd.f32 0.0, %v816
    %v818 = vpop.f32.mrf.mxu0
    %v819 = vadd.f32 0.0, %v818
    %820 = vmatmul.bf16.gmra.mxu0 %v794
    %v821 = vpop.f32.mrf.mxu0
    %v822 = vadd.f32 0.0, %v821
    %v823 = vpop.f32.mrf.mxu0
    %v824 = vadd.f32 0.0, %v823
    %825 = vdwg.mxu0
    %826 = vmatpush.bf16.msra.mxu0 0
    %827 = vmatpush.bf16.msra.mxu0 0
    %828 = vmatpush.bf16.msra.mxu0 %v800
    %829 = vmatpush.bf16.msra.mxu0 %v774
    %830 = vmatpush.bf16.msra.mxu0 %v772
    %831 = vmatpush.bf16.msra.mxu0 %v770
    %832 = vmatpush.bf16.msra.mxu0 %v768
    %833 = vmatpush.bf16.msra.mxu0 %v766
    %834 = vmatmul.bf16.gmra.mxu0 %v788
    %v835 = vpop.f32.mrf.mxu0
    %v836 = vadd.f32 0.0, %v835
    %v837 = vpop.f32.mrf.mxu0
    %v838 = vadd.f32 0.0, %v837
    %839 = vmatmul.bf16.gmra.mxu0 %v791
    %v840 = vpop.f32.mrf.mxu0
    %v841 = vadd.f32 0.0, %v840
    %v842 = vpop.f32.mrf.mxu0
    %v843 = vadd.f32 0.0, %v842
    %844 = vmatmul.bf16.gmra.mxu0 %v794
    %v845 = vpop.f32.mrf.mxu0
    %v846 = vadd.f32 0.0, %v845
    %v847 = vpop.f32.mrf.mxu0
    %v848 = vadd.f32 0.0, %v847
    %849 = vdwg.mxu0
    %v850 = vadd.f32 %v681, %v812
    %v851 = vadd.f32 %v682, %v836
    %v852 = vadd.f32 %v683, %v814
    %v853 = vadd.f32 %v684, %v838
    %v854 = vadd.f32 %v685, %v817
    %v855 = vadd.f32 %v686, %v841
    %v856 = vadd.f32 %v687, %v819
    %v857 = vadd.f32 %v688, %v843
    %v858 = vadd.f32 %v689, %v822
    %v859 = vadd.f32 %v690, %v846
    %v860 = vadd.f32 %v691, %v824
    %v861 = vadd.f32 %v692, %v848
    %v862 = vld [vmem:[%s2] sm:$0x3]
    %v864 = vperm.slane %v862, 0
    %v865 = vperm.slane %v862, 1
    %v868 = vadd.f32 %v850, %v864
    %v869 = vadd.f32 %v851, %v865
    %v870 = vadd.f32 %v852, %v864
    %v871 = vadd.f32 %v853, %v865
    %v872 = vadd.f32 %v854, %v864
    %v873 = vadd.f32 %v855, %v865
    %v874 = vadd.f32 %v856, %v864
    %v875 = vadd.f32 %v857, %v865
    %v876 = vadd.f32 %v858, %v864
    %v877 = vadd.f32 %v859, %v865
    %v878 = vadd.f32 %v860, %v864
    %v879 = vadd.f32 %v861, %v865
    %v880 = vmax.f32 %v868, 0.0
    %v881 = vmax.f32 %v869, 0.0
    %v882 = vmax.f32 %v870, 0.0
    %v883 = vmax.f32 %v871, 0.0
    %v884 = vmax.f32 %v872, 0.0
    %v885 = vmax.f32 %v873, 0.0
    %v886 = vmax.f32 %v874, 0.0
    %v887 = vmax.f32 %v875, 0.0
    %v888 = vmax.f32 %v876, 0.0
    %v889 = vmax.f32 %v877, 0.0
    %v890 = vmax.f32 %v878, 0.0
    %v891 = vmax.f32 %v879, 0.0
    %v904 = vrot.slane %v881, 6
    %v905 = vrot.slane %v883, 6
    %v906 = vrot.slane %v885, 6
    %v907 = vrot.slane %v887, 6
    %v908 = vrot.slane %v889, 6
    %v909 = vrot.slane %v891, 6
    %v910 = vsel %vm167, %v880, %v904
    %vm911 = vcmask 1043458
    %v912 = vsel %vm911, %v880, %v904
    %v913 = vrot.slane %v912, 2
    %vm914 = vcmask 1045508
    %v915 = vsel %vm914, %v880, %v904
    %v916 = vrot.slane %v915, 4
    %vm917 = vcmask 1045504
    %v918 = vsel %vm917, %v904, %v880
    %v919 = vrot.slane %v918, 6
    %v920 = vsel %vm167, %v882, %v905
    %v921 = vsel %vm911, %v882, %v905
    %v922 = vrot.slane %v921, 2
    %v923 = vsel %vm914, %v882, %v905
    %v924 = vrot.slane %v923, 4
    %v925 = vsel %vm917, %v905, %v882
    %v926 = vrot.slane %v925, 6
    %v927 = vsel %vm167, %v884, %v906
    %v928 = vsel %vm911, %v884, %v906
    %v929 = vrot.slane %v928, 2
    %v930 = vsel %vm914, %v884, %v906
    %v931 = vrot.slane %v930, 4
    %v932 = vsel %vm917, %v906, %v884
    %v933 = vrot.slane %v932, 6
    %v934 = vsel %vm167, %v886, %v907
    %v935 = vsel %vm911, %v886, %v907
    %v936 = vrot.slane %v935, 2
    %v937 = vsel %vm914, %v886, %v907
    %v938 = vrot.slane %v937, 4
    %v939 = vsel %vm917, %v907, %v886
    %v940 = vrot.slane %v939, 6
    %v941 = vsel %vm167, %v888, %v908
    %v942 = vsel %vm911, %v888, %v908
    %v943 = vrot.slane %v942, 2
    %v944 = vsel %vm914, %v888, %v908
    %v945 = vrot.slane %v944, 4
    %v946 = vsel %vm917, %v908, %v888
    %v947 = vrot.slane %v946, 6
    %v948 = vsel %vm167, %v890, %v909
    %v949 = vsel %vm911, %v890, %v909
    %v950 = vrot.slane %v949, 2
    %v951 = vsel %vm914, %v890, %v909
    %v952 = vrot.slane %v951, 4
    %v953 = vsel %vm917, %v909, %v890
    %v954 = vrot.slane %v953, 6
    %v979 = vrot.slane %v910, 7
    %v980 = vrot.slane %v979, 2
    %v981 = vrot.slane %v913, 7
    %v982 = vrot.slane %v981, 2
    %v983 = vrot.slane %v916, 7
    %v984 = vrot.slane %v983, 2
    %v985 = vrot.slane %v919, 7
    %v986 = vrot.slane %v985, 2
    %v987 = vrot.slane %v920, 7
    %v988 = vrot.slane %v987, 2
    %v989 = vrot.slane %v922, 7
    %v990 = vrot.slane %v989, 2
    %v991 = vrot.slane %v924, 7
    %v992 = vrot.slane %v991, 2
    %v993 = vrot.slane %v926, 7
    %v994 = vrot.slane %v993, 2
    %v995 = vrot.slane %v927, 7
    %v996 = vrot.slane %v995, 2
    %v997 = vrot.slane %v929, 7
    %v998 = vrot.slane %v997, 2
    %v999 = vrot.slane %v931, 7
    %v1000 = vrot.slane %v999, 2
    %v1001 = vrot.slane %v933, 7
    %v1002 = vrot.slane %v1001, 2
    %v1003 = vrot.slane %v934, 7
    %v1004 = vrot.slane %v1003, 2
    %v1005 = vrot.slane %v936, 7
    %v1006 = vrot.slane %v1005, 2
    %v1007 = vrot.slane %v938, 7
    %v1008 = vrot.slane %v1007, 2
    %v1009 = vrot.slane %v940, 7
    %v1010 = vrot.slane %v1009, 2
    %v1011 = vrot.slane %v941, 7
    %v1012 = vrot.slane %v1011, 2
    %v1013 = vrot.slane %v943, 7
    %v1014 = vrot.slane %v1013, 2
    %v1015 = vrot.slane %v945, 7
    %v1016 = vrot.slane %v1015, 2
    %v1017 = vrot.slane %v947, 7
    %v1018 = vrot.slane %v1017, 2
    %v1019 = vrot.slane %v948, 7
    %v1020 = vrot.slane %v1019, 2
    %v1021 = vrot.slane %v950, 7
    %v1022 = vrot.slane %v1021, 2
    %v1023 = vrot.slane %v952, 7
    %v1024 = vrot.slane %v1023, 2
    %v1025 = vrot.slane %v954, 7
    %v1026 = vrot.slane %v1025, 2
    %v1051 = vmax.f32 %v910, %v980
    %v1052 = vmax.f32 %v913, %v982
    %v1053 = vmax.f32 %v916, %v984
    %v1054 = vmax.f32 %v919, %v986
    %v1055 = vmax.f32 %v920, %v988
    %v1056 = vmax.f32 %v922, %v990
    %v1057 = vmax.f32 %v924, %v992
    %v1058 = vmax.f32 %v926, %v994
    %v1059 = vmax.f32 %v927, %v996
    %v1060 = vmax.f32 %v929, %v998
    %v1061 = vmax.f32 %v931, %v1000
    %v1062 = vmax.f32 %v933, %v1002
    %v1063 = vmax.f32 %v934, %v1004
    %v1064 = vmax.f32 %v936, %v1006
    %v1065 = vmax.f32 %v938, %v1008
    %v1066 = vmax.f32 %v940, %v1010
    %v1067 = vmax.f32 %v941, %v1012
    %v1068 = vmax.f32 %v943, %v1014
    %v1069 = vmax.f32 %v945, %v1016
    %v1070 = vmax.f32 %v947, %v1018
    %v1071 = vmax.f32 %v948, %v1020
    %v1072 = vmax.f32 %v950, %v1022
    %v1073 = vmax.f32 %v952, %v1024
    %v1074 = vmax.f32 %v954, %v1026
    %1099 = vrot.lane.b32.xlu0 %v1051, 120
    %v1100 = vpop.permute.xlu0 %1099
    %1101 = vrot.lane.b32.xlu0 %v1052, 120
    %v1102 = vpop.permute.xlu0 %1101
    %1103 = vrot.lane.b32.xlu0 %v1053, 120
    %v1104 = vpop.permute.xlu0 %1103
    %1105 = vrot.lane.b32.xlu0 %v1054, 120
    %v1106 = vpop.permute.xlu0 %1105
    %1107 = vrot.lane.b32.xlu0 %v1055, 120
    %v1108 = vpop.permute.xlu0 %1107
    %1109 = vrot.lane.b32.xlu0 %v1056, 120
    %v1110 = vpop.permute.xlu0 %1109
    %1111 = vrot.lane.b32.xlu0 %v1057, 120
    %v1112 = vpop.permute.xlu0 %1111
    %1113 = vrot.lane.b32.xlu0 %v1058, 120
    %v1114 = vpop.permute.xlu0 %1113
    %1115 = vrot.lane.b32.xlu0 %v1059, 120
    %v1116 = vpop.permute.xlu0 %1115
    %1117 = vrot.lane.b32.xlu0 %v1060, 120
    %v1118 = vpop.permute.xlu0 %1117
    %1119 = vrot.lane.b32.xlu0 %v1061, 120
    %v1120 = vpop.permute.xlu0 %1119
    %1121 = vrot.lane.b32.xlu0 %v1062, 120
    %v1122 = vpop.permute.xlu0 %1121
    %1123 = vrot.lane.b32.xlu0 %v1063, 120
    %v1124 = vpop.permute.xlu0 %1123
    %1125 = vrot.lane.b32.xlu0 %v1064, 120
    %v1126 = vpop.permute.xlu0 %1125
    %1127 = vrot.lane.b32.xlu0 %v1065, 120
    %v1128 = vpop.permute.xlu0 %1127
    %1129 = vrot.lane.b32.xlu0 %v1066, 120
    %v1130 = vpop.permute.xlu0 %1129
    %1131 = vrot.lane.b32.xlu0 %v1067, 120
    %v1132 = vpop.permute.xlu0 %1131
    %1133 = vrot.lane.b32.xlu0 %v1068, 120
    %v1134 = vpop.permute.xlu0 %1133
    %1135 = vrot.lane.b32.xlu0 %v1069, 120
    %v1136 = vpop.permute.xlu0 %1135
    %1137 = vrot.lane.b32.xlu0 %v1070, 120
    %v1138 = vpop.permute.xlu0 %1137
    %1139 = vrot.lane.b32.xlu0 %v1071, 120
    %v1140 = vpop.permute.xlu0 %1139
    %1141 = vrot.lane.b32.xlu0 %v1072, 120
    %v1142 = vpop.permute.xlu0 %1141
    %1143 = vrot.lane.b32.xlu0 %v1073, 120
    %v1144 = vpop.permute.xlu0 %1143
    %1145 = vrot.lane.b32.xlu0 %v1074, 120
    %v1146 = vpop.permute.xlu0 %1145
    %v1147 = vrot.slane %v1100, 2
    %v1148 = vrot.slane %v1102, 2
    %v1149 = vrot.slane %v1104, 2
    %v1150 = vrot.slane %v1106, 2
    %v1151 = vrot.slane %v1108, 2
    %v1152 = vrot.slane %v1110, 2
    %v1153 = vrot.slane %v1112, 2
    %v1154 = vrot.slane %v1114, 2
    %v1155 = vrot.slane %v1116, 2
    %v1156 = vrot.slane %v1118, 2
    %v1157 = vrot.slane %v1120, 2
    %v1158 = vrot.slane %v1122, 2
    %v1159 = vrot.slane %v1124, 2
    %v1160 = vrot.slane %v1126, 2
    %v1161 = vrot.slane %v1128, 2
    %v1162 = vrot.slane %v1130, 2
    %v1163 = vrot.slane %v1132, 2
    %v1164 = vrot.slane %v1134, 2
    %v1165 = vrot.slane %v1136, 2
    %v1166 = vrot.slane %v1138, 2
    %v1167 = vrot.slane %v1140, 2
    %v1168 = vrot.slane %v1142, 2
    %v1169 = vrot.slane %v1144, 2
    %v1170 = vrot.slane %v1146, 2
    %vm1171 = vcmask 982016
    %v1172 = vsel %vm1171, %v1100, %v1147
    %v1173 = vsel %vm1171, %v1102, %v1148
    %v1174 = vsel %vm1171, %v1104, %v1149
    %v1175 = vsel %vm1171, %v1106, %v1150
    %v1176 = vsel %vm1171, %v1108, %v1151
    %v1177 = vsel %vm1171, %v1110, %v1152
    %v1178 = vsel %vm1171, %v1112, %v1153
    %v1179 = vsel %vm1171, %v1114, %v1154
    %v1180 = vsel %vm1171, %v1116, %v1155
    %v1181 = vsel %vm1171, %v1118, %v1156
    %v1182 = vsel %vm1171, %v1120, %v1157
    %v1183 = vsel %vm1171, %v1122, %v1158
    %v1184 = vsel %vm1171, %v1124, %v1159
    %v1185 = vsel %vm1171, %v1126, %v1160
    %v1186 = vsel %vm1171, %v1128, %v1161
    %v1187 = vsel %vm1171, %v1130, %v1162
    %v1188 = vsel %vm1171, %v1132, %v1163
    %v1189 = vsel %vm1171, %v1134, %v1164
    %v1190 = vsel %vm1171, %v1136, %v1165
    %v1191 = vsel %vm1171, %v1138, %v1166
    %v1192 = vsel %vm1171, %v1140, %v1167
    %v1193 = vsel %vm1171, %v1142, %v1168
    %v1194 = vsel %vm1171, %v1144, %v1169
    %v1195 = vsel %vm1171, %v1146, %v1170
    %v1220 = vmax.f32 %v1051, %v1172
    %v1221 = vmax.f32 %v1052, %v1173
    %v1222 = vmax.f32 %v1053, %v1174
    %v1223 = vmax.f32 %v1054, %v1175
    %v1224 = vmax.f32 %v1055, %v1176
    %v1225 = vmax.f32 %v1056, %v1177
    %v1226 = vmax.f32 %v1057, %v1178
    %v1227 = vmax.f32 %v1058, %v1179
    %v1228 = vmax.f32 %v1059, %v1180
    %v1229 = vmax.f32 %v1060, %v1181
    %v1230 = vmax.f32 %v1061, %v1182
    %v1231 = vmax.f32 %v1062, %v1183
    %v1232 = vmax.f32 %v1063, %v1184
    %v1233 = vmax.f32 %v1064, %v1185
    %v1234 = vmax.f32 %v1065, %v1186
    %v1235 = vmax.f32 %v1066, %v1187
    %v1236 = vmax.f32 %v1067, %v1188
    %v1237 = vmax.f32 %v1068, %v1189
    %v1238 = vmax.f32 %v1069, %v1190
    %v1239 = vmax.f32 %v1070, %v1191
    %v1240 = vmax.f32 %v1071, %v1192
    %v1241 = vmax.f32 %v1072, %v1193
    %v1242 = vmax.f32 %v1073, %v1194
    %v1243 = vmax.f32 %v1074, %v1195
    %v1264 = vperm.slane %v1220, 0
    %v1265 = vperm.slane %v1220, 2
    %v1266 = vperm.slane %v1221, 0
    %v1267 = vperm.slane %v1221, 2
    %v1268 = vperm.slane %v1222, 0
    %v1269 = vperm.slane %v1222, 2
    %v1270 = vperm.slane %v1223, 0
    %v1271 = vperm.slane %v1223, 2
    %v1272 = vperm.slane %v1224, 0
    %v1273 = vperm.slane %v1224, 2
    %v1274 = vperm.slane %v1225, 0
    %v1275 = vperm.slane %v1225, 2
    %v1276 = vperm.slane %v1226, 0
    %v1277 = vperm.slane %v1226, 2
    %v1278 = vperm.slane %v1227, 0
    %v1279 = vperm.slane %v1227, 2
    %v1280 = vperm.slane %v1228, 0
    %v1281 = vperm.slane %v1228, 2
    %v1282 = vperm.slane %v1229, 0
    %v1283 = vperm.slane %v1229, 2
    %v1284 = vperm.slane %v1232, 0
    %v1285 = vperm.slane %v1232, 2
    %v1286 = vperm.slane %v1233, 0
    %v1287 = vperm.slane %v1233, 2
    %v1288 = vperm.slane %v1234, 0
    %v1289 = vperm.slane %v1234, 2
    %v1290 = vperm.slane %v1235, 0
    %v1291 = vperm.slane %v1235, 2
    %v1292 = vperm.slane %v1236, 0
    %v1293 = vperm.slane %v1236, 2
    %v1294 = vperm.slane %v1237, 0
    %v1295 = vperm.slane %v1237, 2
    %v1296 = vperm.slane %v1238, 0
    %v1297 = vperm.slane %v1238, 2
    %v1298 = vperm.slane %v1239, 0
    %v1299 = vperm.slane %v1239, 2
    %v1300 = vperm.slane %v1240, 0
    %v1301 = vperm.slane %v1240, 2
    %v1302 = vperm.slane %v1241, 0
    %v1303 = vperm.slane %v1241, 2
    %v1344 = vpack.c.bf16 %v1265, %v1264
    %v1345 = vpack.c.bf16 %v1267, %v1266
    %v1346 = vpack.c.bf16 %v1269, %v1268
    %v1347 = vpack.c.bf16 %v1271, %v1270
    %v1348 = vpack.c.bf16 %v1273, %v1272
    %v1349 = vpack.c.bf16 %v1275, %v1274
    %v1350 = vpack.c.bf16 %v1277, %v1276
    %v1351 = vpack.c.bf16 %v1279, %v1278
    %v1352 = vpack.c.bf16 %v1281, %v1280
    %v1353 = vpack.c.bf16 %v1283, %v1282
    %v1354 = vpack.c.bf16 %v1285, %v1284
    %v1355 = vpack.c.bf16 %v1287, %v1286
    %v1356 = vpack.c.bf16 %v1289, %v1288
    %v1357 = vpack.c.bf16 %v1291, %v1290
    %v1358 = vpack.c.bf16 %v1293, %v1292
    %v1359 = vpack.c.bf16 %v1295, %v1294
    %v1360 = vpack.c.bf16 %v1297, %v1296
    %v1361 = vpack.c.bf16 %v1299, %v1298
    %v1362 = vpack.c.bf16 %v1301, %v1300
    %v1363 = vpack.c.bf16 %v1303, %v1302
    %v1364 = vld [vmem:[%s3] sm:$0xff]
    %v1365 = vld [vmem:[%s3 + $0x8] sm:$0xff]
    %v1366 = vld [vmem:[%s3 + $0x10] sm:$0xff]
    %v1367 = vld [vmem:[%s3 + $0x18] sm:$0xff]
    %v1368 = vld [vmem:[%s3 + $0x20] sm:$0xff]
    %v1369 = vld [vmem:[%s3 + $0x28] sm:$0xff]
    %v1370 = vld [vmem:[%s3 + $0x30] sm:$0xff]
    %v1371 = vld [vmem:[%s3 + $0x38] sm:$0xff]
    %v1372 = vld [vmem:[%s3 + $0x40] sm:$0xff]
    %v1373 = vld [vmem:[%s3 + $0x48] sm:$0xff]
    %v1374 = vld [vmem:[%s3 + $0x50] sm:$0xff]
    %v1375 = vld [vmem:[%s3 + $0x58] sm:$0xff]
    %v1376 = vld [vmem:[%s3 + $0x60] sm:$0xff]
    %v1377 = vld [vmem:[%s3 + $0x68] sm:$0xff]
    %v1378 = vld [vmem:[%s3 + $0x70] sm:$0xff]
    %v1379 = vld [vmem:[%s3 + $0x78] sm:$0xff]
    %v1380 = vld [vmem:[%s3 + $0x80] sm:$0xff]
    %v1381 = vld [vmem:[%s3 + $0x88] sm:$0xff]
    %v1382 = vld [vmem:[%s3 + $0x90] sm:$0xff]
    %v1383 = vld [vmem:[%s3 + $0x98] sm:$0xff]
    %v1384 = vld [vmem:[%s3 + $0xa0] sm:$0xff]
    %v1385 = vld [vmem:[%s3 + $0xa8] sm:$0xff]
    %v1386 = vld [vmem:[%s3 + $0xb0] sm:$0xff]
    %v1389 = vperm.slane %v1230, 0
    %v1390 = vperm.slane %v1230, 2
    %v1391 = vperm.slane %v1242, 0
    %v1392 = vperm.slane %v1242, 2
    %v1397 = vpack.c.bf16 %v1390, %v1389
    %v1398 = vpack.c.bf16 %v1392, %v1391
    %s1399 = scalar_lea.vmem %s3, 184
    %v1400 = vld [vmem:[%s1399] sm:$0xff]
    %v1401 = vld [vmem:[%s1399 + $0x8] sm:$0xff]
    %v1402 = vld [vmem:[%s1399 + $0x10] sm:$0xff]
    %v1403 = vld [vmem:[%s1399 + $0x18] sm:$0xff]
    %v1404 = vld [vmem:[%s1399 + $0x20] sm:$0xff]
    %v1405 = vld [vmem:[%s1399 + $0x28] sm:$0xff]
    %v1406 = vld [vmem:[%s1399 + $0x30] sm:$0xff]
    %v1407 = vld [vmem:[%s1399 + $0x38] sm:$0xff]
    %v1408 = vld [vmem:[%s1399 + $0x40] sm:$0xff]
    %v1409 = vld [vmem:[%s1399 + $0x48] sm:$0xff]
    %v1410 = vld [vmem:[%s1399 + $0x50] sm:$0xff]
    %v1411 = vld [vmem:[%s1399 + $0x58] sm:$0xff]
    %v1412 = vld [vmem:[%s1399 + $0x60] sm:$0xff]
    %v1413 = vld [vmem:[%s1399 + $0x68] sm:$0xff]
    %v1414 = vld [vmem:[%s1399 + $0x70] sm:$0xff]
    %v1415 = vld [vmem:[%s1399 + $0x78] sm:$0xff]
    %v1416 = vld [vmem:[%s1399 + $0x80] sm:$0xff]
    %v1417 = vld [vmem:[%s1399 + $0x88] sm:$0xff]
    %v1418 = vld [vmem:[%s1399 + $0x90] sm:$0xff]
    %v1419 = vld [vmem:[%s1399 + $0x98] sm:$0xff]
    %v1420 = vld [vmem:[%s1399 + $0xa0] sm:$0xff]
    %v1421 = vld [vmem:[%s1399 + $0xa8] sm:$0xff]
    %v1422 = vld [vmem:[%s1399 + $0xb0] sm:$0xff]
    %v1443 = vunpack.c.l.b16 %v1345
    %v1444 = vunpack.c.h.b16 %v1345
    %v1445 = vunpack.c.l.b16 %v1346
    %v1446 = vunpack.c.h.b16 %v1346
    %v1447 = vunpack.c.l.b16 %v1347
    %v1448 = vunpack.c.h.b16 %v1347
    %v1449 = vunpack.c.l.b16 %v1348
    %v1450 = vunpack.c.h.b16 %v1348
    %v1451 = vunpack.c.l.b16 %v1349
    %v1452 = vunpack.c.h.b16 %v1349
    %v1453 = vunpack.c.l.b16 %v1350
    %v1454 = vunpack.c.h.b16 %v1350
    %v1455 = vunpack.c.l.b16 %v1351
    %v1456 = vunpack.c.h.b16 %v1351
    %v1457 = vunpack.c.l.b16 %v1352
    %v1458 = vunpack.c.h.b16 %v1352
    %v1459 = vunpack.c.l.b16 %v1353
    %v1460 = vunpack.c.h.b16 %v1353
    %v1461 = vunpack.c.l.b16 %v1397
    %v1462 = vunpack.c.h.b16 %v1397
    %v1463 = vunpack.c.l.b16 %v1355
    %v1464 = vunpack.c.h.b16 %v1355
    %v1465 = vunpack.c.l.b16 %v1356
    %v1466 = vunpack.c.h.b16 %v1356
    %v1467 = vunpack.c.l.b16 %v1357
    %v1468 = vunpack.c.h.b16 %v1357
    %v1469 = vunpack.c.l.b16 %v1358
    %v1470 = vunpack.c.h.b16 %v1358
    %v1471 = vunpack.c.l.b16 %v1359
    %v1472 = vunpack.c.h.b16 %v1359
    %v1473 = vunpack.c.l.b16 %v1360
    %v1474 = vunpack.c.h.b16 %v1360
    %v1475 = vunpack.c.l.b16 %v1361
    %v1476 = vunpack.c.h.b16 %v1361
    %v1477 = vunpack.c.l.b16 %v1362
    %v1478 = vunpack.c.h.b16 %v1362
    %v1479 = vunpack.c.l.b16 %v1363
    %v1480 = vunpack.c.h.b16 %v1363
    %v1481 = vunpack.c.l.b16 %v1398
    %v1482 = vunpack.c.h.b16 %v1398
    %v1483 = vpack.c.b16 %v1443, %v1443
    %v1484 = vpack.c.b16 %v1444, %v1444
    %v1485 = vpack.c.b16 %v1445, %v1445
    %v1486 = vpack.c.b16 %v1446, %v1446
    %v1487 = vpack.c.b16 %v1447, %v1447
    %v1488 = vpack.c.b16 %v1448, %v1448
    %v1489 = vpack.c.b16 %v1449, %v1449
    %v1490 = vpack.c.b16 %v1450, %v1450
    %v1491 = vpack.c.b16 %v1451, %v1451
    %v1492 = vpack.c.b16 %v1452, %v1452
    %v1493 = vpack.c.b16 %v1453, %v1453
    %v1494 = vpack.c.b16 %v1454, %v1454
    %v1495 = vpack.c.b16 %v1455, %v1455
    %v1496 = vpack.c.b16 %v1456, %v1456
    %v1497 = vpack.c.b16 %v1457, %v1457
    %v1498 = vpack.c.b16 %v1458, %v1458
    %v1499 = vpack.c.b16 %v1459, %v1459
    %v1500 = vpack.c.b16 %v1460, %v1460
    %v1501 = vpack.c.b16 %v1461, %v1461
    %v1502 = vpack.c.b16 %v1462, %v1462
    %v1503 = vpack.c.b16 %v1463, %v1463
    %v1504 = vpack.c.b16 %v1464, %v1464
    %v1505 = vpack.c.b16 %v1465, %v1465
    %v1506 = vpack.c.b16 %v1466, %v1466
    %v1507 = vpack.c.b16 %v1467, %v1467
    %v1508 = vpack.c.b16 %v1468, %v1468
    %v1509 = vpack.c.b16 %v1469, %v1469
    %v1510 = vpack.c.b16 %v1470, %v1470
    %v1511 = vpack.c.b16 %v1471, %v1471
    %v1512 = vpack.c.b16 %v1472, %v1472
    %v1513 = vpack.c.b16 %v1473, %v1473
    %v1514 = vpack.c.b16 %v1474, %v1474
    %v1515 = vpack.c.b16 %v1475, %v1475
    %v1516 = vpack.c.b16 %v1476, %v1476
    %v1517 = vpack.c.b16 %v1477, %v1477
    %v1518 = vpack.c.b16 %v1478, %v1478
    %v1519 = vpack.c.b16 %v1479, %v1479
    %v1520 = vpack.c.b16 %v1480, %v1480
    %v1521 = vpack.c.b16 %v1481, %v1481
    %v1522 = vpack.c.b16 %v1482, %v1482
    %v1523 = vunpack.c.l.b16 %v1483
    %v1524 = vunpack.c.l.b16 %v1484
    %v1525 = vunpack.c.l.b16 %v1485
    %v1526 = vunpack.c.l.b16 %v1486
    %v1527 = vunpack.c.l.b16 %v1487
    %v1528 = vunpack.c.l.b16 %v1488
    %v1529 = vunpack.c.l.b16 %v1489
    %v1530 = vunpack.c.l.b16 %v1490
    %v1531 = vunpack.c.l.b16 %v1491
    %v1532 = vunpack.c.l.b16 %v1492
    %v1533 = vunpack.c.l.b16 %v1493
    %v1534 = vunpack.c.l.b16 %v1494
    %v1535 = vunpack.c.l.b16 %v1495
    %v1536 = vunpack.c.l.b16 %v1496
    %v1537 = vunpack.c.l.b16 %v1497
    %v1538 = vunpack.c.l.b16 %v1498
    %v1539 = vunpack.c.l.b16 %v1499
    %v1540 = vunpack.c.l.b16 %v1500
    %v1541 = vunpack.c.l.b16 %v1501
    %v1542 = vunpack.c.l.b16 %v1502
    %v1543 = vunpack.c.l.b16 %v1503
    %v1544 = vunpack.c.l.b16 %v1504
    %v1545 = vunpack.c.l.b16 %v1505
    %v1546 = vunpack.c.l.b16 %v1506
    %v1547 = vunpack.c.l.b16 %v1507
    %v1548 = vunpack.c.l.b16 %v1508
    %v1549 = vunpack.c.l.b16 %v1509
    %v1550 = vunpack.c.l.b16 %v1510
    %v1551 = vunpack.c.l.b16 %v1511
    %v1552 = vunpack.c.l.b16 %v1512
    %v1553 = vunpack.c.l.b16 %v1513
    %v1554 = vunpack.c.l.b16 %v1514
    %v1555 = vunpack.c.l.b16 %v1515
    %v1556 = vunpack.c.l.b16 %v1516
    %v1557 = vunpack.c.l.b16 %v1517
    %v1558 = vunpack.c.l.b16 %v1518
    %v1559 = vunpack.c.l.b16 %v1519
    %v1560 = vunpack.c.l.b16 %v1520
    %v1561 = vunpack.c.l.b16 %v1521
    %v1562 = vunpack.c.l.b16 %v1522
    %v1563 = vrot.slane %v1525, 7
    %vm1564 = vcmask 1041409
    %v1565 = vsel %vm1564, %v1563, %v1523
    %v1566 = vrot.slane %v1527, 6
    %vm1567 = vcmask 1042434
    %v1568 = vsel %vm1567, %v1566, %v1565
    %v1569 = vrot.slane %v1529, 5
    %vm1570 = vcmask 1043459
    %v1571 = vsel %vm1570, %v1569, %v1568
    %v1572 = vrot.slane %v1531, 4
    %vm1573 = vcmask 1044484
    %v1574 = vsel %vm1573, %v1572, %v1571
    %v1575 = vrot.slane %v1533, 3
    %vm1576 = vcmask 1045509
    %v1577 = vsel %vm1576, %v1575, %v1574
    %v1578 = vrot.slane %v1535, 2
    %vm1579 = vcmask 1046534
    %v1580 = vsel %vm1579, %v1578, %v1577
    %v1581 = vrot.slane %v1537, 1
    %vm1582 = vcmask 1047559
    %v1583 = vsel %vm1582, %v1581, %v1580
    %v1584 = vrot.slane %v1526, 7
    %v1585 = vsel %vm1564, %v1584, %v1524
    %v1586 = vrot.slane %v1528, 6
    %v1587 = vsel %vm1567, %v1586, %v1585
    %v1588 = vrot.slane %v1530, 5
    %v1589 = vsel %vm1570, %v1588, %v1587
    %v1590 = vrot.slane %v1532, 4
    %v1591 = vsel %vm1573, %v1590, %v1589
    %v1592 = vrot.slane %v1534, 3
    %v1593 = vsel %vm1576, %v1592, %v1591
    %v1594 = vrot.slane %v1536, 2
    %v1595 = vsel %vm1579, %v1594, %v1593
    %v1596 = vrot.slane %v1538, 1
    %v1597 = vsel %vm1582, %v1596, %v1595
    %v1598 = vrot.slane %v1541, 7
    %v1599 = vsel %vm1564, %v1598, %v1539
    %v1600 = vrot.slane %v1543, 6
    %v1601 = vsel %vm1567, %v1600, %v1599
    %v1602 = vrot.slane %v1545, 5
    %v1603 = vsel %vm1570, %v1602, %v1601
    %v1604 = vrot.slane %v1547, 4
    %v1605 = vsel %vm1573, %v1604, %v1603
    %v1606 = vrot.slane %v1549, 3
    %v1607 = vsel %vm1576, %v1606, %v1605
    %v1608 = vrot.slane %v1551, 2
    %v1609 = vsel %vm1579, %v1608, %v1607
    %v1610 = vrot.slane %v1553, 1
    %v1611 = vsel %vm1582, %v1610, %v1609
    %v1612 = vrot.slane %v1542, 7
    %v1613 = vsel %vm1564, %v1612, %v1540
    %v1614 = vrot.slane %v1544, 6
    %v1615 = vsel %vm1567, %v1614, %v1613
    %v1616 = vrot.slane %v1546, 5
    %v1617 = vsel %vm1570, %v1616, %v1615
    %v1618 = vrot.slane %v1548, 4
    %v1619 = vsel %vm1573, %v1618, %v1617
    %v1620 = vrot.slane %v1550, 3
    %v1621 = vsel %vm1576, %v1620, %v1619
    %v1622 = vrot.slane %v1552, 2
    %v1623 = vsel %vm1579, %v1622, %v1621
    %v1624 = vrot.slane %v1554, 1
    %v1625 = vsel %vm1582, %v1624, %v1623
    %v1626 = vrot.slane %v1557, 7
    %v1627 = vsel %vm1564, %v1626, %v1555
    %v1628 = vrot.slane %v1559, 6
    %v1629 = vsel %vm1567, %v1628, %v1627
    %v1630 = vrot.slane %v1561, 5
    %v1631 = vsel %vm1570, %v1630, %v1629
    %v1632 = vrot.slane %v1558, 7
    %v1633 = vsel %vm1564, %v1632, %v1556
    %v1634 = vrot.slane %v1560, 6
    %v1635 = vsel %vm1567, %v1634, %v1633
    %v1636 = vrot.slane %v1562, 5
    %v1637 = vsel %vm1570, %v1636, %v1635
    %v1638 = vpack.c.b16 %v1611, %v1583
    %v1639 = vpack.c.b16 %v1625, %v1597
    %v1640 = vpack.c.b16 %v1631, %v1631
    %v1641 = vpack.c.b16 %v1637, %v1637
    %v1667 = vunpack.c.l.b16 %v1400
    %v1668 = vunpack.c.h.b16 %v1400
    %v1669 = vunpack.c.l.b16 %v1401
    %v1670 = vunpack.c.h.b16 %v1401
    %v1671 = vunpack.c.l.b16 %v1402
    %v1672 = vunpack.c.h.b16 %v1402
    %v1673 = vunpack.c.l.b16 %v1403
    %v1674 = vunpack.c.h.b16 %v1403
    %v1675 = vunpack.c.l.b16 %v1404
    %v1676 = vunpack.c.h.b16 %v1404
    %v1677 = vunpack.c.l.b16 %v1405
    %v1678 = vunpack.c.h.b16 %v1405
    %v1679 = vunpack.c.l.b16 %v1406
    %v1680 = vunpack.c.h.b16 %v1406
    %v1681 = vunpack.c.l.b16 %v1407
    %v1682 = vunpack.c.h.b16 %v1407
    %v1683 = vunpack.c.l.b16 %v1408
    %v1684 = vunpack.c.h.b16 %v1408
    %v1685 = vunpack.c.l.b16 %v1409
    %v1686 = vunpack.c.h.b16 %v1409
    %v1687 = vunpack.c.l.b16 %v1410
    %v1688 = vunpack.c.h.b16 %v1410
    %v1689 = vunpack.c.l.b16 %v1411
    %v1690 = vunpack.c.h.b16 %v1411
    %v1691 = vunpack.c.l.b16 %v1412
    %v1692 = vunpack.c.h.b16 %v1412
    %v1693 = vunpack.c.l.b16 %v1413
    %v1694 = vunpack.c.h.b16 %v1413
    %v1695 = vunpack.c.l.b16 %v1414
    %v1696 = vunpack.c.h.b16 %v1414
    %v1697 = vunpack.c.l.b16 %v1415
    %v1698 = vunpack.c.h.b16 %v1415
    %v1699 = vunpack.c.l.b16 %v1416
    %v1700 = vunpack.c.h.b16 %v1416
    %v1701 = vunpack.c.l.b16 %v1417
    %v1702 = vunpack.c.h.b16 %v1417
    %v1703 = vunpack.c.l.b16 %v1418
    %v1704 = vunpack.c.h.b16 %v1418
    %v1705 = vunpack.c.l.b16 %v1419
    %v1706 = vunpack.c.h.b16 %v1419
    %v1707 = vunpack.c.l.b16 %v1420
    %v1708 = vunpack.c.h.b16 %v1420
    %v1709 = vunpack.c.l.b16 %v1421
    %v1710 = vunpack.c.h.b16 %v1421
    %v1711 = vunpack.c.l.b16 %v1422
    %v1712 = vunpack.c.h.b16 %v1422
    %v1713 = vpack.c.b16 %v1669, %v1667
    %v1714 = vpack.c.b16 %v1670, %v1668
    %v1715 = vpack.c.b16 %v1673, %v1671
    %v1716 = vpack.c.b16 %v1674, %v1672
    %v1717 = vpack.c.b16 %v1677, %v1675
    %v1718 = vpack.c.b16 %v1678, %v1676
    %v1719 = vpack.c.b16 %v1681, %v1679
    %v1720 = vpack.c.b16 %v1682, %v1680
    %v1721 = vpack.c.b16 %v1685, %v1683
    %v1722 = vpack.c.b16 %v1686, %v1684
    %v1723 = vpack.c.b16 %v1689, %v1687
    %v1724 = vpack.c.b16 %v1690, %v1688
    %v1725 = vpack.c.b16 %v1693, %v1691
    %v1726 = vpack.c.b16 %v1694, %v1692
    %v1727 = vpack.c.b16 %v1697, %v1695
    %v1728 = vpack.c.b16 %v1698, %v1696
    %v1729 = vpack.c.b16 %v1701, %v1699
    %v1730 = vpack.c.b16 %v1702, %v1700
    %v1731 = vpack.c.b16 %v1705, %v1703
    %v1732 = vpack.c.b16 %v1706, %v1704
    %v1733 = vpack.c.b16 %v1709, %v1707
    %v1734 = vpack.c.b16 %v1710, %v1708
    %v1735 = vpack.c.b16 %v1711, %v1711
    %v1736 = vpack.c.b16 %v1712, %v1712
    %vm1759 = vcmask 457728
    %v1761 = vsel %vm1759, %v1639, 0
    %v1764 = vsel %vm1759, %v1641, 0
    %vm1766 = vcmask 1043456
    %v1768 = vsel %vm1766, %v1735, 0
    %v1771 = vsel %vm1766, %v1736, 0
    %1773 = vmatpush.bf16.msra.mxu0 %v1727
    %1774 = vmatpush.bf16.msra.mxu0 %v1725
    %1775 = vmatpush.bf16.msra.mxu0 %v1723
    %1776 = vmatpush.bf16.msra.mxu0 %v1721
    %1777 = vmatpush.bf16.msra.mxu0 %v1719
    %1778 = vmatpush.bf16.msra.mxu0 %v1717
    %1779 = vmatpush.bf16.msra.mxu0 %v1715
    %1780 = vmatpush.bf16.msra.mxu0 %v1713
    %1781 = vmatmul.bf16.gmra.mxu0 %v1638
    %v1782 = vpop.f32.mrf.mxu0
    %v1783 = vadd.f32 0.0, %v1782
    %v1784 = vpop.f32.mrf.mxu0
    %v1785 = vadd.f32 0.0, %v1784
    %1786 = vmatmul.bf16.gmra.mxu0 %v1640
    %v1787 = vpop.f32.mrf.mxu0
    %v1788 = vadd.f32 0.0, %v1787
    %v1789 = vpop.f32.mrf.mxu0
    %1790 = vdwg.mxu0
    %1791 = vmatpush.bf16.msra.mxu0 0
    %1792 = vmatpush.bf16.msra.mxu0 0
    %1793 = vmatpush.bf16.msra.mxu0 0
    %1794 = vmatpush.bf16.msra.mxu0 0
    %1795 = vmatpush.bf16.msra.mxu0 %v1768
    %1796 = vmatpush.bf16.msra.mxu0 %v1733
    %1797 = vmatpush.bf16.msra.mxu0 %v1731
    %1798 = vmatpush.bf16.msra.mxu0 %v1729
    %1799 = vmatmul.bf16.gmra.mxu0 %v1761
    %v1800 = vpop.f32.mrf.mxu0
    %v1801 = vadd.f32 %v1783, %v1800
    %v1802 = vpop.f32.mrf.mxu0
    %v1803 = vadd.f32 %v1785, %v1802
    %1804 = vmatmul.bf16.gmra.mxu0 %v1764
    %v1805 = vpop.f32.mrf.mxu0
    %v1806 = vadd.f32 %v1788, %v1805
    %v1807 = vpop.f32.mrf.mxu0
    %1808 = vdwg.mxu0
    %1809 = vmatpush.bf16.msra.mxu0 %v1728
    %1810 = vmatpush.bf16.msra.mxu0 %v1726
    %1811 = vmatpush.bf16.msra.mxu0 %v1724
    %1812 = vmatpush.bf16.msra.mxu0 %v1722
    %1813 = vmatpush.bf16.msra.mxu0 %v1720
    %1814 = vmatpush.bf16.msra.mxu0 %v1718
    %1815 = vmatpush.bf16.msra.mxu0 %v1716
    %1816 = vmatpush.bf16.msra.mxu0 %v1714
    %1817 = vmatmul.bf16.gmra.mxu0 %v1638
    %v1818 = vpop.f32.mrf.mxu0
    %v1819 = vadd.f32 0.0, %v1818
    %v1820 = vpop.f32.mrf.mxu0
    %v1821 = vadd.f32 0.0, %v1820
    %1822 = vmatmul.bf16.gmra.mxu0 %v1640
    %v1823 = vpop.f32.mrf.mxu0
    %v1824 = vadd.f32 0.0, %v1823
    %v1825 = vpop.f32.mrf.mxu0
    %1826 = vdwg.mxu0
    %1827 = vmatpush.bf16.msra.mxu0 0
    %1828 = vmatpush.bf16.msra.mxu0 0
    %1829 = vmatpush.bf16.msra.mxu0 0
    %1830 = vmatpush.bf16.msra.mxu0 0
    %1831 = vmatpush.bf16.msra.mxu0 %v1771
    %1832 = vmatpush.bf16.msra.mxu0 %v1734
    %1833 = vmatpush.bf16.msra.mxu0 %v1732
    %1834 = vmatpush.bf16.msra.mxu0 %v1730
    %1835 = vmatmul.bf16.gmra.mxu0 %v1761
    %v1836 = vpop.f32.mrf.mxu0
    %v1837 = vadd.f32 %v1819, %v1836
    %v1838 = vpop.f32.mrf.mxu0
    %v1839 = vadd.f32 %v1821, %v1838
    %1840 = vmatmul.bf16.gmra.mxu0 %v1764
    %v1841 = vpop.f32.mrf.mxu0
    %v1842 = vadd.f32 %v1824, %v1841
    %v1843 = vpop.f32.mrf.mxu0
    %1844 = vdwg.mxu0
    %v1847 = vunpack.c.l.b16 %v1344
    %v1848 = vunpack.c.h.b16 %v1344
    %v1849 = vunpack.c.l.b16 %v1354
    %v1850 = vunpack.c.h.b16 %v1354
    %v1851 = vpack.c.b16 %v1847, %v1847
    %v1852 = vpack.c.b16 %v1848, %v1848
    %v1853 = vpack.c.b16 %v1849, %v1849
    %v1854 = vpack.c.b16 %v1850, %v1850
    %v1855 = vunpack.c.l.b16 %v1851
    %v1856 = vunpack.c.l.b16 %v1852
    %v1857 = vunpack.c.l.b16 %v1853
    %v1858 = vunpack.c.l.b16 %v1854
    %v1859 = vrot.slane %v1523, 7
    %v1860 = vsel %vm1564, %v1859, %v1855
    %v1861 = vrot.slane %v1525, 6
    %v1862 = vsel %vm1567, %v1861, %v1860
    %v1863 = vrot.slane %v1527, 5
    %v1864 = vsel %vm1570, %v1863, %v1862
    %v1865 = vrot.slane %v1529, 4
    %v1866 = vsel %vm1573, %v1865, %v1864
    %v1867 = vrot.slane %v1531, 3
    %v1868 = vsel %vm1576, %v1867, %v1866
    %v1869 = vrot.slane %v1533, 2
    %v1870 = vsel %vm1579, %v1869, %v1868
    %v1871 = vrot.slane %v1535, 1
    %v1872 = vsel %vm1582, %v1871, %v1870
    %v1873 = vrot.slane %v1524, 7
    %v1874 = vsel %vm1564, %v1873, %v1856
    %v1875 = vrot.slane %v1526, 6
    %v1876 = vsel %vm1567, %v1875, %v1874
    %v1877 = vrot.slane %v1528, 5
    %v1878 = vsel %vm1570, %v1877, %v1876
    %v1879 = vrot.slane %v1530, 4
    %v1880 = vsel %vm1573, %v1879, %v1878
    %v1881 = vrot.slane %v1532, 3
    %v1882 = vsel %vm1576, %v1881, %v1880
    %v1883 = vrot.slane %v1534, 2
    %v1884 = vsel %vm1579, %v1883, %v1882
    %v1885 = vrot.slane %v1536, 1
    %v1886 = vsel %vm1582, %v1885, %v1884
    %v1887 = vrot.slane %v1539, 7
    %v1888 = vsel %vm1564, %v1887, %v1537
    %v1889 = vrot.slane %v1857, 6
    %v1890 = vsel %vm1567, %v1889, %v1888
    %v1891 = vrot.slane %v1543, 5
    %v1892 = vsel %vm1570, %v1891, %v1890
    %v1893 = vrot.slane %v1545, 4
    %v1894 = vsel %vm1573, %v1893, %v1892
    %v1895 = vrot.slane %v1547, 3
    %v1896 = vsel %vm1576, %v1895, %v1894
    %v1897 = vrot.slane %v1549, 2
    %v1898 = vsel %vm1579, %v1897, %v1896
    %v1899 = vrot.slane %v1551, 1
    %v1900 = vsel %vm1582, %v1899, %v1898
    %v1901 = vrot.slane %v1540, 7
    %v1902 = vsel %vm1564, %v1901, %v1538
    %v1903 = vrot.slane %v1858, 6
    %v1904 = vsel %vm1567, %v1903, %v1902
    %v1905 = vrot.slane %v1544, 5
    %v1906 = vsel %vm1570, %v1905, %v1904
    %v1907 = vrot.slane %v1546, 4
    %v1908 = vsel %vm1573, %v1907, %v1906
    %v1909 = vrot.slane %v1548, 3
    %v1910 = vsel %vm1576, %v1909, %v1908
    %v1911 = vrot.slane %v1550, 2
    %v1912 = vsel %vm1579, %v1911, %v1910
    %v1913 = vrot.slane %v1552, 1
    %v1914 = vsel %vm1582, %v1913, %v1912
    %v1915 = vrot.slane %v1555, 7
    %v1916 = vsel %vm1564, %v1915, %v1553
    %v1917 = vrot.slane %v1557, 6
    %v1918 = vsel %vm1567, %v1917, %v1916
    %v1919 = vrot.slane %v1559, 5
    %v1920 = vsel %vm1570, %v1919, %v1918
    %v1921 = vrot.slane %v1556, 7
    %v1922 = vsel %vm1564, %v1921, %v1554
    %v1923 = vrot.slane %v1558, 6
    %v1924 = vsel %vm1567, %v1923, %v1922
    %v1925 = vrot.slane %v1560, 5
    %v1926 = vsel %vm1570, %v1925, %v1924
    %v1927 = vpack.c.b16 %v1900, %v1872
    %v1928 = vpack.c.b16 %v1914, %v1886
    %v1929 = vpack.c.b16 %v1920, %v1920
    %v1930 = vpack.c.b16 %v1926, %v1926
    %v1956 = vunpack.c.l.b16 %v1364
    %v1957 = vunpack.c.h.b16 %v1364
    %v1958 = vunpack.c.l.b16 %v1365
    %v1959 = vunpack.c.h.b16 %v1365
    %v1960 = vunpack.c.l.b16 %v1366
    %v1961 = vunpack.c.h.b16 %v1366
    %v1962 = vunpack.c.l.b16 %v1367
    %v1963 = vunpack.c.h.b16 %v1367
    %v1964 = vunpack.c.l.b16 %v1368
    %v1965 = vunpack.c.h.b16 %v1368
    %v1966 = vunpack.c.l.b16 %v1369
    %v1967 = vunpack.c.h.b16 %v1369
    %v1968 = vunpack.c.l.b16 %v1370
    %v1969 = vunpack.c.h.b16 %v1370
    %v1970 = vunpack.c.l.b16 %v1371
    %v1971 = vunpack.c.h.b16 %v1371
    %v1972 = vunpack.c.l.b16 %v1372
    %v1973 = vunpack.c.h.b16 %v1372
    %v1974 = vunpack.c.l.b16 %v1373
    %v1975 = vunpack.c.h.b16 %v1373
    %v1976 = vunpack.c.l.b16 %v1374
    %v1977 = vunpack.c.h.b16 %v1374
    %v1978 = vunpack.c.l.b16 %v1375
    %v1979 = vunpack.c.h.b16 %v1375
    %v1980 = vunpack.c.l.b16 %v1376
    %v1981 = vunpack.c.h.b16 %v1376
    %v1982 = vunpack.c.l.b16 %v1377
    %v1983 = vunpack.c.h.b16 %v1377
    %v1984 = vunpack.c.l.b16 %v1378
    %v1985 = vunpack.c.h.b16 %v1378
    %v1986 = vunpack.c.l.b16 %v1379
    %v1987 = vunpack.c.h.b16 %v1379
    %v1988 = vunpack.c.l.b16 %v1380
    %v1989 = vunpack.c.h.b16 %v1380
    %v1990 = vunpack.c.l.b16 %v1381
    %v1991 = vunpack.c.h.b16 %v1381
    %v1992 = vunpack.c.l.b16 %v1382
    %v1993 = vunpack.c.h.b16 %v1382
    %v1994 = vunpack.c.l.b16 %v1383
    %v1995 = vunpack.c.h.b16 %v1383
    %v1996 = vunpack.c.l.b16 %v1384
    %v1997 = vunpack.c.h.b16 %v1384
    %v1998 = vunpack.c.l.b16 %v1385
    %v1999 = vunpack.c.h.b16 %v1385
    %v2000 = vunpack.c.l.b16 %v1386
    %v2001 = vunpack.c.h.b16 %v1386
    %v2002 = vpack.c.b16 %v1958, %v1956
    %v2003 = vpack.c.b16 %v1959, %v1957
    %v2004 = vpack.c.b16 %v1962, %v1960
    %v2005 = vpack.c.b16 %v1963, %v1961
    %v2006 = vpack.c.b16 %v1966, %v1964
    %v2007 = vpack.c.b16 %v1967, %v1965
    %v2008 = vpack.c.b16 %v1970, %v1968
    %v2009 = vpack.c.b16 %v1971, %v1969
    %v2010 = vpack.c.b16 %v1974, %v1972
    %v2011 = vpack.c.b16 %v1975, %v1973
    %v2012 = vpack.c.b16 %v1978, %v1976
    %v2013 = vpack.c.b16 %v1979, %v1977
    %v2014 = vpack.c.b16 %v1982, %v1980
    %v2015 = vpack.c.b16 %v1983, %v1981
    %v2016 = vpack.c.b16 %v1986, %v1984
    %v2017 = vpack.c.b16 %v1987, %v1985
    %v2018 = vpack.c.b16 %v1990, %v1988
    %v2019 = vpack.c.b16 %v1991, %v1989
    %v2020 = vpack.c.b16 %v1994, %v1992
    %v2021 = vpack.c.b16 %v1995, %v1993
    %v2022 = vpack.c.b16 %v1998, %v1996
    %v2023 = vpack.c.b16 %v1999, %v1997
    %v2024 = vpack.c.b16 %v2000, %v2000
    %v2025 = vpack.c.b16 %v2001, %v2001
    %v2049 = vsel %vm1759, %v1928, 0
    %v2052 = vsel %vm1759, %v1930, 0
    %v2055 = vsel %vm1766, %v2024, 0
    %v2058 = vsel %vm1766, %v2025, 0
    %2060 = vmatpush.bf16.msra.mxu0 %v2016
    %2061 = vmatpush.bf16.msra.mxu0 %v2014
    %2062 = vmatpush.bf16.msra.mxu0 %v2012
    %2063 = vmatpush.bf16.msra.mxu0 %v2010
    %2064 = vmatpush.bf16.msra.mxu0 %v2008
    %2065 = vmatpush.bf16.msra.mxu0 %v2006
    %2066 = vmatpush.bf16.msra.mxu0 %v2004
    %2067 = vmatpush.bf16.msra.mxu0 %v2002
    %2068 = vmatmul.bf16.gmra.mxu0 %v1927
    %v2069 = vpop.f32.mrf.mxu0
    %v2070 = vadd.f32 %v1801, %v2069
    %v2071 = vpop.f32.mrf.mxu0
    %v2072 = vadd.f32 %v1803, %v2071
    %2073 = vmatmul.bf16.gmra.mxu0 %v1929
    %v2074 = vpop.f32.mrf.mxu0
    %v2075 = vadd.f32 %v1806, %v2074
    %v2076 = vpop.f32.mrf.mxu0
    %2077 = vdwg.mxu0
    %2078 = vmatpush.bf16.msra.mxu0 0
    %2079 = vmatpush.bf16.msra.mxu0 0
    %2080 = vmatpush.bf16.msra.mxu0 0
    %2081 = vmatpush.bf16.msra.mxu0 0
    %2082 = vmatpush.bf16.msra.mxu0 %v2055
    %2083 = vmatpush.bf16.msra.mxu0 %v2022
    %2084 = vmatpush.bf16.msra.mxu0 %v2020
    %2085 = vmatpush.bf16.msra.mxu0 %v2018
    %2086 = vmatmul.bf16.gmra.mxu0 %v2049
    %v2087 = vpop.f32.mrf.mxu0
    %v2088 = vadd.f32 %v2070, %v2087
    %v2089 = vpop.f32.mrf.mxu0
    %v2090 = vadd.f32 %v2072, %v2089
    %2091 = vmatmul.bf16.gmra.mxu0 %v2052
    %v2092 = vpop.f32.mrf.mxu0
    %v2093 = vadd.f32 %v2075, %v2092
    %v2094 = vpop.f32.mrf.mxu0
    %2095 = vdwg.mxu0
    %2096 = vmatpush.bf16.msra.mxu0 %v2017
    %2097 = vmatpush.bf16.msra.mxu0 %v2015
    %2098 = vmatpush.bf16.msra.mxu0 %v2013
    %2099 = vmatpush.bf16.msra.mxu0 %v2011
    %2100 = vmatpush.bf16.msra.mxu0 %v2009
    %2101 = vmatpush.bf16.msra.mxu0 %v2007
    %2102 = vmatpush.bf16.msra.mxu0 %v2005
    %2103 = vmatpush.bf16.msra.mxu0 %v2003
    %2104 = vmatmul.bf16.gmra.mxu0 %v1927
    %v2105 = vpop.f32.mrf.mxu0
    %v2106 = vadd.f32 %v1837, %v2105
    %v2107 = vpop.f32.mrf.mxu0
    %v2108 = vadd.f32 %v1839, %v2107
    %2109 = vmatmul.bf16.gmra.mxu0 %v1929
    %v2110 = vpop.f32.mrf.mxu0
    %v2111 = vadd.f32 %v1842, %v2110
    %v2112 = vpop.f32.mrf.mxu0
    %2113 = vdwg.mxu0
    %2114 = vmatpush.bf16.msra.mxu0 0
    %2115 = vmatpush.bf16.msra.mxu0 0
    %2116 = vmatpush.bf16.msra.mxu0 0
    %2117 = vmatpush.bf16.msra.mxu0 0
    %2118 = vmatpush.bf16.msra.mxu0 %v2058
    %2119 = vmatpush.bf16.msra.mxu0 %v2023
    %2120 = vmatpush.bf16.msra.mxu0 %v2021
    %2121 = vmatpush.bf16.msra.mxu0 %v2019
    %2122 = vmatmul.bf16.gmra.mxu0 %v2049
    %v2123 = vpop.f32.mrf.mxu0
    %v2124 = vadd.f32 %v2106, %v2123
    %v2125 = vpop.f32.mrf.mxu0
    %v2126 = vadd.f32 %v2108, %v2125
    %2127 = vmatmul.bf16.gmra.mxu0 %v2052
    %v2128 = vpop.f32.mrf.mxu0
    %v2129 = vadd.f32 %v2111, %v2128
    %v2130 = vpop.f32.mrf.mxu0
    %2131 = vdwg.mxu0
    %v2134 = vperm.slane %v1231, 0
    %v2135 = vperm.slane %v1231, 2
    %v2136 = vperm.slane %v1243, 0
    %v2137 = vperm.slane %v1243, 2
    %v2142 = vpack.c.bf16 %v2135, %v2134
    %v2143 = vpack.c.bf16 %v2137, %v2136
    %s2144 = scalar_lea.vmem %s3, 368
    %v2145 = vld [vmem:[%s2144] sm:$0xff]
    %v2146 = vld [vmem:[%s2144 + $0x8] sm:$0xff]
    %v2147 = vld [vmem:[%s2144 + $0x10] sm:$0xff]
    %v2148 = vld [vmem:[%s2144 + $0x18] sm:$0xff]
    %v2149 = vld [vmem:[%s2144 + $0x20] sm:$0xff]
    %v2150 = vld [vmem:[%s2144 + $0x28] sm:$0xff]
    %v2151 = vld [vmem:[%s2144 + $0x30] sm:$0xff]
    %v2152 = vld [vmem:[%s2144 + $0x38] sm:$0xff]
    %v2153 = vld [vmem:[%s2144 + $0x40] sm:$0xff]
    %v2154 = vld [vmem:[%s2144 + $0x48] sm:$0xff]
    %v2155 = vld [vmem:[%s2144 + $0x50] sm:$0xff]
    %v2156 = vld [vmem:[%s2144 + $0x58] sm:$0xff]
    %v2157 = vld [vmem:[%s2144 + $0x60] sm:$0xff]
    %v2158 = vld [vmem:[%s2144 + $0x68] sm:$0xff]
    %v2159 = vld [vmem:[%s2144 + $0x70] sm:$0xff]
    %v2160 = vld [vmem:[%s2144 + $0x78] sm:$0xff]
    %v2161 = vld [vmem:[%s2144 + $0x80] sm:$0xff]
    %v2162 = vld [vmem:[%s2144 + $0x88] sm:$0xff]
    %v2163 = vld [vmem:[%s2144 + $0x90] sm:$0xff]
    %v2164 = vld [vmem:[%s2144 + $0x98] sm:$0xff]
    %v2165 = vld [vmem:[%s2144 + $0xa0] sm:$0xff]
    %v2166 = vld [vmem:[%s2144 + $0xa8] sm:$0xff]
    %v2167 = vld [vmem:[%s2144 + $0xb0] sm:$0xff]
    %v2170 = vunpack.c.l.b16 %v2142
    %v2171 = vunpack.c.h.b16 %v2142
    %v2172 = vunpack.c.l.b16 %v2143
    %v2173 = vunpack.c.h.b16 %v2143
    %v2174 = vpack.c.b16 %v2170, %v2170
    %v2175 = vpack.c.b16 %v2171, %v2171
    %v2176 = vpack.c.b16 %v2172, %v2172
    %v2177 = vpack.c.b16 %v2173, %v2173
    %v2178 = vunpack.c.l.b16 %v2174
    %v2179 = vunpack.c.l.b16 %v2175
    %v2180 = vunpack.c.l.b16 %v2176
    %v2181 = vunpack.c.l.b16 %v2177
    %v2182 = vrot.slane %v1527, 7
    %v2183 = vsel %vm1564, %v2182, %v1525
    %v2184 = vrot.slane %v1529, 6
    %v2185 = vsel %vm1567, %v2184, %v2183
    %v2186 = vrot.slane %v1531, 5
    %v2187 = vsel %vm1570, %v2186, %v2185
    %v2188 = vrot.slane %v1533, 4
    %v2189 = vsel %vm1573, %v2188, %v2187
    %v2190 = vrot.slane %v1535, 3
    %v2191 = vsel %vm1576, %v2190, %v2189
    %v2192 = vrot.slane %v1537, 2
    %v2193 = vsel %vm1579, %v2192, %v2191
    %v2194 = vrot.slane %v1539, 1
    %v2195 = vsel %vm1582, %v2194, %v2193
    %v2196 = vrot.slane %v1528, 7
    %v2197 = vsel %vm1564, %v2196, %v1526
    %v2198 = vrot.slane %v1530, 6
    %v2199 = vsel %vm1567, %v2198, %v2197
    %v2200 = vrot.slane %v1532, 5
    %v2201 = vsel %vm1570, %v2200, %v2199
    %v2202 = vrot.slane %v1534, 4
    %v2203 = vsel %vm1573, %v2202, %v2201
    %v2204 = vrot.slane %v1536, 3
    %v2205 = vsel %vm1576, %v2204, %v2203
    %v2206 = vrot.slane %v1538, 2
    %v2207 = vsel %vm1579, %v2206, %v2205
    %v2208 = vrot.slane %v1540, 1
    %v2209 = vsel %vm1582, %v2208, %v2207
    %v2210 = vrot.slane %v2178, 7
    %v2211 = vsel %vm1564, %v2210, %v1541
    %v2212 = vrot.slane %v1545, 6
    %v2213 = vsel %vm1567, %v2212, %v2211
    %v2214 = vrot.slane %v1547, 5
    %v2215 = vsel %vm1570, %v2214, %v2213
    %v2216 = vrot.slane %v1549, 4
    %v2217 = vsel %vm1573, %v2216, %v2215
    %v2218 = vrot.slane %v1551, 3
    %v2219 = vsel %vm1576, %v2218, %v2217
    %v2220 = vrot.slane %v1553, 2
    %v2221 = vsel %vm1579, %v2220, %v2219
    %v2222 = vrot.slane %v1555, 1
    %v2223 = vsel %vm1582, %v2222, %v2221
    %v2224 = vrot.slane %v2179, 7
    %v2225 = vsel %vm1564, %v2224, %v1542
    %v2226 = vrot.slane %v1546, 6
    %v2227 = vsel %vm1567, %v2226, %v2225
    %v2228 = vrot.slane %v1548, 5
    %v2229 = vsel %vm1570, %v2228, %v2227
    %v2230 = vrot.slane %v1550, 4
    %v2231 = vsel %vm1573, %v2230, %v2229
    %v2232 = vrot.slane %v1552, 3
    %v2233 = vsel %vm1576, %v2232, %v2231
    %v2234 = vrot.slane %v1554, 2
    %v2235 = vsel %vm1579, %v2234, %v2233
    %v2236 = vrot.slane %v1556, 1
    %v2237 = vsel %vm1582, %v2236, %v2235
    %v2238 = vrot.slane %v1559, 7
    %v2239 = vsel %vm1564, %v2238, %v1557
    %v2240 = vrot.slane %v1561, 6
    %v2241 = vsel %vm1567, %v2240, %v2239
    %v2242 = vrot.slane %v2180, 5
    %v2243 = vsel %vm1570, %v2242, %v2241
    %v2244 = vrot.slane %v1560, 7
    %v2245 = vsel %vm1564, %v2244, %v1558
    %v2246 = vrot.slane %v1562, 6
    %v2247 = vsel %vm1567, %v2246, %v2245
    %v2248 = vrot.slane %v2181, 5
    %v2249 = vsel %vm1570, %v2248, %v2247
    %v2250 = vpack.c.b16 %v2223, %v2195
    %v2251 = vpack.c.b16 %v2237, %v2209
    %v2252 = vpack.c.b16 %v2243, %v2243
    %v2253 = vpack.c.b16 %v2249, %v2249
    %v2279 = vunpack.c.l.b16 %v2145
    %v2280 = vunpack.c.h.b16 %v2145
    %v2281 = vunpack.c.l.b16 %v2146
    %v2282 = vunpack.c.h.b16 %v2146
    %v2283 = vunpack.c.l.b16 %v2147
    %v2284 = vunpack.c.h.b16 %v2147
    %v2285 = vunpack.c.l.b16 %v2148
    %v2286 = vunpack.c.h.b16 %v2148
    %v2287 = vunpack.c.l.b16 %v2149
    %v2288 = vunpack.c.h.b16 %v2149
    %v2289 = vunpack.c.l.b16 %v2150
    %v2290 = vunpack.c.h.b16 %v2150
    %v2291 = vunpack.c.l.b16 %v2151
    %v2292 = vunpack.c.h.b16 %v2151
    %v2293 = vunpack.c.l.b16 %v2152
    %v2294 = vunpack.c.h.b16 %v2152
    %v2295 = vunpack.c.l.b16 %v2153
    %v2296 = vunpack.c.h.b16 %v2153
    %v2297 = vunpack.c.l.b16 %v2154
    %v2298 = vunpack.c.h.b16 %v2154
    %v2299 = vunpack.c.l.b16 %v2155
    %v2300 = vunpack.c.h.b16 %v2155
    %v2301 = vunpack.c.l.b16 %v2156
    %v2302 = vunpack.c.h.b16 %v2156
    %v2303 = vunpack.c.l.b16 %v2157
    %v2304 = vunpack.c.h.b16 %v2157
    %v2305 = vunpack.c.l.b16 %v2158
    %v2306 = vunpack.c.h.b16 %v2158
    %v2307 = vunpack.c.l.b16 %v2159
    %v2308 = vunpack.c.h.b16 %v2159
    %v2309 = vunpack.c.l.b16 %v2160
    %v2310 = vunpack.c.h.b16 %v2160
    %v2311 = vunpack.c.l.b16 %v2161
    %v2312 = vunpack.c.h.b16 %v2161
    %v2313 = vunpack.c.l.b16 %v2162
    %v2314 = vunpack.c.h.b16 %v2162
    %v2315 = vunpack.c.l.b16 %v2163
    %v2316 = vunpack.c.h.b16 %v2163
    %v2317 = vunpack.c.l.b16 %v2164
    %v2318 = vunpack.c.h.b16 %v2164
    %v2319 = vunpack.c.l.b16 %v2165
    %v2320 = vunpack.c.h.b16 %v2165
    %v2321 = vunpack.c.l.b16 %v2166
    %v2322 = vunpack.c.h.b16 %v2166
    %v2323 = vunpack.c.l.b16 %v2167
    %v2324 = vunpack.c.h.b16 %v2167
    %v2325 = vpack.c.b16 %v2281, %v2279
    %v2326 = vpack.c.b16 %v2282, %v2280
    %v2327 = vpack.c.b16 %v2285, %v2283
    %v2328 = vpack.c.b16 %v2286, %v2284
    %v2329 = vpack.c.b16 %v2289, %v2287
    %v2330 = vpack.c.b16 %v2290, %v2288
    %v2331 = vpack.c.b16 %v2293, %v2291
    %v2332 = vpack.c.b16 %v2294, %v2292
    %v2333 = vpack.c.b16 %v2297, %v2295
    %v2334 = vpack.c.b16 %v2298, %v2296
    %v2335 = vpack.c.b16 %v2301, %v2299
    %v2336 = vpack.c.b16 %v2302, %v2300
    %v2337 = vpack.c.b16 %v2305, %v2303
    %v2338 = vpack.c.b16 %v2306, %v2304
    %v2339 = vpack.c.b16 %v2309, %v2307
    %v2340 = vpack.c.b16 %v2310, %v2308
    %v2341 = vpack.c.b16 %v2313, %v2311
    %v2342 = vpack.c.b16 %v2314, %v2312
    %v2343 = vpack.c.b16 %v2317, %v2315
    %v2344 = vpack.c.b16 %v2318, %v2316
    %v2345 = vpack.c.b16 %v2321, %v2319
    %v2346 = vpack.c.b16 %v2322, %v2320
    %v2347 = vpack.c.b16 %v2323, %v2323
    %v2348 = vpack.c.b16 %v2324, %v2324
    %v2372 = vsel %vm1759, %v2251, 0
    %v2375 = vsel %vm1759, %v2253, 0
    %v2378 = vsel %vm1766, %v2347, 0
    %v2381 = vsel %vm1766, %v2348, 0
    %2383 = vmatpush.bf16.msra.mxu0 %v2339
    %2384 = vmatpush.bf16.msra.mxu0 %v2337
    %2385 = vmatpush.bf16.msra.mxu0 %v2335
    %2386 = vmatpush.bf16.msra.mxu0 %v2333
    %2387 = vmatpush.bf16.msra.mxu0 %v2331
    %2388 = vmatpush.bf16.msra.mxu0 %v2329
    %2389 = vmatpush.bf16.msra.mxu0 %v2327
    %2390 = vmatpush.bf16.msra.mxu0 %v2325
    %2391 = vmatmul.bf16.gmra.mxu0 %v2250
    %v2392 = vpop.f32.mrf.mxu0
    %v2393 = vadd.f32 0.0, %v2392
    %v2394 = vpop.f32.mrf.mxu0
    %v2395 = vadd.f32 0.0, %v2394
    %2396 = vmatmul.bf16.gmra.mxu0 %v2252
    %v2397 = vpop.f32.mrf.mxu0
    %v2398 = vadd.f32 0.0, %v2397
    %v2399 = vpop.f32.mrf.mxu0
    %2400 = vdwg.mxu0
    %2401 = vmatpush.bf16.msra.mxu0 0
    %2402 = vmatpush.bf16.msra.mxu0 0
    %2403 = vmatpush.bf16.msra.mxu0 0
    %2404 = vmatpush.bf16.msra.mxu0 0
    %2405 = vmatpush.bf16.msra.mxu0 %v2378
    %2406 = vmatpush.bf16.msra.mxu0 %v2345
    %2407 = vmatpush.bf16.msra.mxu0 %v2343
    %2408 = vmatpush.bf16.msra.mxu0 %v2341
    %2409 = vmatmul.bf16.gmra.mxu0 %v2372
    %v2410 = vpop.f32.mrf.mxu0
    %v2411 = vadd.f32 %v2393, %v2410
    %v2412 = vpop.f32.mrf.mxu0
    %v2413 = vadd.f32 %v2395, %v2412
    %2414 = vmatmul.bf16.gmra.mxu0 %v2375
    %v2415 = vpop.f32.mrf.mxu0
    %v2416 = vadd.f32 %v2398, %v2415
    %v2417 = vpop.f32.mrf.mxu0
    %2418 = vdwg.mxu0
    %2419 = vmatpush.bf16.msra.mxu0 %v2340
    %2420 = vmatpush.bf16.msra.mxu0 %v2338
    %2421 = vmatpush.bf16.msra.mxu0 %v2336
    %2422 = vmatpush.bf16.msra.mxu0 %v2334
    %2423 = vmatpush.bf16.msra.mxu0 %v2332
    %2424 = vmatpush.bf16.msra.mxu0 %v2330
    %2425 = vmatpush.bf16.msra.mxu0 %v2328
    %2426 = vmatpush.bf16.msra.mxu0 %v2326
    %2427 = vmatmul.bf16.gmra.mxu0 %v2250
    %v2428 = vpop.f32.mrf.mxu0
    %v2429 = vadd.f32 0.0, %v2428
    %v2430 = vpop.f32.mrf.mxu0
    %v2431 = vadd.f32 0.0, %v2430
    %2432 = vmatmul.bf16.gmra.mxu0 %v2252
    %v2433 = vpop.f32.mrf.mxu0
    %v2434 = vadd.f32 0.0, %v2433
    %v2435 = vpop.f32.mrf.mxu0
    %2436 = vdwg.mxu0
    %2437 = vmatpush.bf16.msra.mxu0 0
    %2438 = vmatpush.bf16.msra.mxu0 0
    %2439 = vmatpush.bf16.msra.mxu0 0
    %2440 = vmatpush.bf16.msra.mxu0 0
    %2441 = vmatpush.bf16.msra.mxu0 %v2381
    %2442 = vmatpush.bf16.msra.mxu0 %v2346
    %2443 = vmatpush.bf16.msra.mxu0 %v2344
    %2444 = vmatpush.bf16.msra.mxu0 %v2342
    %2445 = vmatmul.bf16.gmra.mxu0 %v2372
    %v2446 = vpop.f32.mrf.mxu0
    %v2447 = vadd.f32 %v2429, %v2446
    %v2448 = vpop.f32.mrf.mxu0
    %v2449 = vadd.f32 %v2431, %v2448
    %2450 = vmatmul.bf16.gmra.mxu0 %v2375
    %v2451 = vpop.f32.mrf.mxu0
    %v2452 = vadd.f32 %v2434, %v2451
    %v2453 = vpop.f32.mrf.mxu0
    %2454 = vdwg.mxu0
    %v2455 = vadd.f32 %v2088, %v2411
    %v2456 = vadd.f32 %v2124, %v2447
    %v2457 = vadd.f32 %v2090, %v2413
    %v2458 = vadd.f32 %v2126, %v2449
    %v2459 = vadd.f32 %v2093, %v2416
    %v2460 = vadd.f32 %v2129, %v2452
    %v2461 = vld [vmem:[%s4] sm:$0x3]
    %v2463 = vperm.slane %v2461, 0
    %v2464 = vperm.slane %v2461, 1
    %v2467 = vadd.f32 %v2455, %v2463
    %v2468 = vadd.f32 %v2456, %v2464
    %v2469 = vadd.f32 %v2457, %v2463
    %v2470 = vadd.f32 %v2458, %v2464
    %v2471 = vadd.f32 %v2459, %v2463
    %v2472 = vadd.f32 %v2460, %v2464
    %v2473 = vmax.f32 %v2467, 0.0
    %v2474 = vmax.f32 %v2468, 0.0
    %v2475 = vmax.f32 %v2469, 0.0
    %v2476 = vmax.f32 %v2470, 0.0
    %v2477 = vmax.f32 %v2471, 0.0
    %v2478 = vmax.f32 %v2472, 0.0
    %v2485 = vrot.slane %v2474, 6
    %v2486 = vrot.slane %v2476, 6
    %v2487 = vrot.slane %v2478, 6
    %v2488 = vsel %vm167, %v2473, %v2485
    %v2489 = vsel %vm911, %v2473, %v2485
    %v2490 = vrot.slane %v2489, 2
    %v2491 = vsel %vm914, %v2473, %v2485
    %v2492 = vrot.slane %v2491, 4
    %v2493 = vsel %vm917, %v2485, %v2473
    %v2494 = vrot.slane %v2493, 6
    %v2495 = vsel %vm167, %v2475, %v2486
    %v2496 = vsel %vm911, %v2475, %v2486
    %v2497 = vrot.slane %v2496, 2
    %v2498 = vsel %vm914, %v2475, %v2486
    %v2499 = vrot.slane %v2498, 4
    %v2500 = vsel %vm917, %v2486, %v2475
    %v2501 = vrot.slane %v2500, 6
    %v2502 = vsel %vm167, %v2477, %v2487
    %v2503 = vsel %vm911, %v2477, %v2487
    %v2504 = vrot.slane %v2503, 2
    %v2515 = vrot.slane %v2488, 7
    %v2516 = vrot.slane %v2515, 2
    %v2517 = vrot.slane %v2490, 7
    %v2518 = vrot.slane %v2517, 2
    %v2519 = vrot.slane %v2492, 7
    %v2520 = vrot.slane %v2519, 2
    %v2521 = vrot.slane %v2494, 7
    %v2522 = vrot.slane %v2521, 2
    %v2523 = vrot.slane %v2495, 7
    %v2524 = vrot.slane %v2523, 2
    %v2525 = vrot.slane %v2497, 7
    %v2526 = vrot.slane %v2525, 2
    %v2527 = vrot.slane %v2499, 7
    %v2528 = vrot.slane %v2527, 2
    %v2529 = vrot.slane %v2501, 7
    %v2530 = vrot.slane %v2529, 2
    %v2531 = vrot.slane %v2502, 7
    %v2532 = vrot.slane %v2531, 2
    %v2533 = vrot.slane %v2504, 7
    %v2534 = vrot.slane %v2533, 2
    %v2545 = vmax.f32 %v2488, %v2516
    %v2546 = vmax.f32 %v2490, %v2518
    %v2547 = vmax.f32 %v2492, %v2520
    %v2548 = vmax.f32 %v2494, %v2522
    %v2549 = vmax.f32 %v2495, %v2524
    %v2550 = vmax.f32 %v2497, %v2526
    %v2551 = vmax.f32 %v2499, %v2528
    %v2552 = vmax.f32 %v2501, %v2530
    %v2553 = vmax.f32 %v2502, %v2532
    %v2554 = vmax.f32 %v2504, %v2534
    %2565 = vrot.lane.b32.xlu0 %v2545, 112
    %v2566 = vpop.permute.xlu0 %2565
    %2567 = vrot.lane.b32.xlu0 %v2546, 112
    %v2568 = vpop.permute.xlu0 %2567
    %2569 = vrot.lane.b32.xlu0 %v2547, 112
    %v2570 = vpop.permute.xlu0 %2569
    %2571 = vrot.lane.b32.xlu0 %v2548, 112
    %v2572 = vpop.permute.xlu0 %2571
    %2573 = vrot.lane.b32.xlu0 %v2549, 112
    %v2574 = vpop.permute.xlu0 %2573
    %2575 = vrot.lane.b32.xlu0 %v2550, 112
    %v2576 = vpop.permute.xlu0 %2575
    %2577 = vrot.lane.b32.xlu0 %v2551, 112
    %v2578 = vpop.permute.xlu0 %2577
    %2579 = vrot.lane.b32.xlu0 %v2552, 112
    %v2580 = vpop.permute.xlu0 %2579
    %2581 = vrot.lane.b32.xlu0 %v2553, 112
    %v2582 = vpop.permute.xlu0 %2581
    %2583 = vrot.lane.b32.xlu0 %v2554, 112
    %v2584 = vpop.permute.xlu0 %2583
    %v2585 = vrot.slane %v2566, 2
    %v2586 = vrot.slane %v2568, 2
    %v2587 = vrot.slane %v2570, 2
    %v2588 = vrot.slane %v2572, 2
    %v2589 = vrot.slane %v2574, 2
    %v2590 = vrot.slane %v2576, 2
    %v2591 = vrot.slane %v2578, 2
    %v2592 = vrot.slane %v2580, 2
    %v2593 = vrot.slane %v2582, 2
    %v2594 = vrot.slane %v2584, 2
    %vm2595 = vcmask 916480
    %v2596 = vsel %vm2595, %v2566, %v2585
    %v2597 = vsel %vm2595, %v2568, %v2586
    %v2598 = vsel %vm2595, %v2570, %v2587
    %v2599 = vsel %vm2595, %v2572, %v2588
    %v2600 = vsel %vm2595, %v2574, %v2589
    %v2601 = vsel %vm2595, %v2576, %v2590
    %v2602 = vsel %vm2595, %v2578, %v2591
    %v2603 = vsel %vm2595, %v2580, %v2592
    %v2604 = vsel %vm2595, %v2582, %v2593
    %v2605 = vsel %vm2595, %v2584, %v2594
    %v2616 = vmax.f32 %v2545, %v2596
    %v2617 = vmax.f32 %v2546, %v2597
    %v2618 = vmax.f32 %v2547, %v2598
    %v2619 = vmax.f32 %v2548, %v2599
    %v2620 = vmax.f32 %v2549, %v2600
    %v2621 = vmax.f32 %v2550, %v2601
    %v2622 = vmax.f32 %v2551, %v2602
    %v2623 = vmax.f32 %v2552, %v2603
    %v2624 = vmax.f32 %v2553, %v2604
    %v2625 = vmax.f32 %v2554, %v2605
    %v2632 = vperm.slane %v2616, 0
    %v2633 = vperm.slane %v2616, 2
    %v2634 = vperm.slane %v2617, 0
    %v2635 = vperm.slane %v2617, 2
    %v2636 = vperm.slane %v2618, 0
    %v2637 = vperm.slane %v2618, 2
    %v2638 = vperm.slane %v2621, 0
    %v2639 = vperm.slane %v2621, 2
    %v2640 = vperm.slane %v2622, 0
    %v2641 = vperm.slane %v2622, 2
    %v2642 = vperm.slane %v2623, 0
    %v2643 = vperm.slane %v2623, 2
    %v2656 = vpack.c.bf16 %v2633, %v2632
    %v2657 = vpack.c.bf16 %v2635, %v2634
    %v2658 = vpack.c.bf16 %v2637, %v2636
    %v2659 = vpack.c.bf16 %v2639, %v2638
    %v2660 = vpack.c.bf16 %v2641, %v2640
    %v2661 = vpack.c.bf16 %v2643, %v2642
    %v2662 = vld [vmem:[%s5] sm:$0xf]
    %v2663 = vld [vmem:[%s5 + $0x4] sm:$0xf]
    %v2664 = vld [vmem:[%s5 + $0x8] sm:$0xf]
    %v2665 = vld [vmem:[%s5 + $0xc] sm:$0xf]
    %v2666 = vld [vmem:[%s5 + $0x10] sm:$0xf]
    %v2667 = vld [vmem:[%s5 + $0x14] sm:$0xf]
    %v2668 = vld [vmem:[%s5 + $0x18] sm:$0xf]
    %v2669 = vld [vmem:[%s5 + $0x1c] sm:$0xf]
    %v2670 = vld [vmem:[%s5 + $0x20] sm:$0xf]
    %v2671 = vld [vmem:[%s5 + $0x24] sm:$0xf]
    %v2672 = vld [vmem:[%s5 + $0x28] sm:$0xf]
    %v2673 = vld [vmem:[%s5 + $0x2c] sm:$0xf]
    %v2674 = vld [vmem:[%s5 + $0x30] sm:$0xf]
    %v2675 = vld [vmem:[%s5 + $0x34] sm:$0xf]
    %v2676 = vld [vmem:[%s5 + $0x38] sm:$0xf]
    %v2677 = vld [vmem:[%s5 + $0x3c] sm:$0xf]
    %v2678 = vld [vmem:[%s5 + $0x40] sm:$0xf]
    %v2679 = vld [vmem:[%s5 + $0x44] sm:$0xf]
    %v2682 = vperm.slane %v2619, 0
    %v2683 = vperm.slane %v2619, 2
    %v2684 = vperm.slane %v2624, 0
    %v2685 = vperm.slane %v2624, 2
    %v2690 = vpack.c.bf16 %v2683, %v2682
    %v2691 = vpack.c.bf16 %v2685, %v2684
    %s2692 = scalar_lea.vmem %s5, 72
    %v2693 = vld [vmem:[%s2692] sm:$0xf]
    %v2694 = vld [vmem:[%s2692 + $0x4] sm:$0xf]
    %v2695 = vld [vmem:[%s2692 + $0x8] sm:$0xf]
    %v2696 = vld [vmem:[%s2692 + $0xc] sm:$0xf]
    %v2697 = vld [vmem:[%s2692 + $0x10] sm:$0xf]
    %v2698 = vld [vmem:[%s2692 + $0x14] sm:$0xf]
    %v2699 = vld [vmem:[%s2692 + $0x18] sm:$0xf]
    %v2700 = vld [vmem:[%s2692 + $0x1c] sm:$0xf]
    %v2701 = vld [vmem:[%s2692 + $0x20] sm:$0xf]
    %v2702 = vld [vmem:[%s2692 + $0x24] sm:$0xf]
    %v2703 = vld [vmem:[%s2692 + $0x28] sm:$0xf]
    %v2704 = vld [vmem:[%s2692 + $0x2c] sm:$0xf]
    %v2705 = vld [vmem:[%s2692 + $0x30] sm:$0xf]
    %v2706 = vld [vmem:[%s2692 + $0x34] sm:$0xf]
    %v2707 = vld [vmem:[%s2692 + $0x38] sm:$0xf]
    %v2708 = vld [vmem:[%s2692 + $0x3c] sm:$0xf]
    %v2709 = vld [vmem:[%s2692 + $0x40] sm:$0xf]
    %v2710 = vld [vmem:[%s2692 + $0x44] sm:$0xf]
    %v2717 = vunpack.c.l.b16 %v2657
    %v2718 = vunpack.c.h.b16 %v2657
    %v2719 = vunpack.c.l.b16 %v2658
    %v2720 = vunpack.c.h.b16 %v2658
    %v2721 = vunpack.c.l.b16 %v2690
    %v2722 = vunpack.c.h.b16 %v2690
    %v2723 = vunpack.c.l.b16 %v2660
    %v2724 = vunpack.c.h.b16 %v2660
    %v2725 = vunpack.c.l.b16 %v2661
    %v2726 = vunpack.c.h.b16 %v2661
    %v2727 = vunpack.c.l.b16 %v2691
    %v2728 = vunpack.c.h.b16 %v2691
    %v2729 = vpack.c.b16 %v2717, %v2717
    %v2730 = vpack.c.b16 %v2718, %v2718
    %v2731 = vpack.c.b16 %v2719, %v2719
    %v2732 = vpack.c.b16 %v2720, %v2720
    %v2733 = vpack.c.b16 %v2721, %v2721
    %v2734 = vpack.c.b16 %v2722, %v2722
    %v2735 = vpack.c.b16 %v2723, %v2723
    %v2736 = vpack.c.b16 %v2724, %v2724
    %v2737 = vpack.c.b16 %v2725, %v2725
    %v2738 = vpack.c.b16 %v2726, %v2726
    %v2739 = vpack.c.b16 %v2727, %v2727
    %v2740 = vpack.c.b16 %v2728, %v2728
    %v2741 = vunpack.c.l.b16 %v2729
    %v2742 = vunpack.c.l.b16 %v2730
    %v2743 = vunpack.c.l.b16 %v2731
    %v2744 = vunpack.c.l.b16 %v2732
    %v2745 = vunpack.c.l.b16 %v2733
    %v2746 = vunpack.c.l.b16 %v2734
    %v2747 = vunpack.c.l.b16 %v2735
    %v2748 = vunpack.c.l.b16 %v2736
    %v2749 = vunpack.c.l.b16 %v2737
    %v2750 = vunpack.c.l.b16 %v2738
    %v2751 = vunpack.c.l.b16 %v2739
    %v2752 = vunpack.c.l.b16 %v2740
    %v2753 = vrot.slane %v2743, 7
    %v2754 = vsel %vm1564, %v2753, %v2741
    %v2755 = vrot.slane %v2745, 6
    %v2756 = vsel %vm1567, %v2755, %v2754
    %v2757 = vrot.slane %v2747, 5
    %v2758 = vsel %vm1570, %v2757, %v2756
    %v2759 = vrot.slane %v2749, 4
    %v2760 = vsel %vm1573, %v2759, %v2758
    %v2761 = vrot.slane %v2751, 3
    %v2762 = vsel %vm1576, %v2761, %v2760
    %v2763 = vrot.slane %v2744, 7
    %v2764 = vsel %vm1564, %v2763, %v2742
    %v2765 = vrot.slane %v2746, 6
    %v2766 = vsel %vm1567, %v2765, %v2764
    %v2767 = vrot.slane %v2748, 5
    %v2768 = vsel %vm1570, %v2767, %v2766
    %v2769 = vrot.slane %v2750, 4
    %v2770 = vsel %vm1573, %v2769, %v2768
    %v2771 = vrot.slane %v2752, 3
    %v2772 = vsel %vm1576, %v2771, %v2770
    %v2773 = vpack.c.b16 %v2762, %v2762
    %v2774 = vpack.c.b16 %v2772, %v2772
    %v2794 = vunpack.c.l.b16 %v2693
    %v2795 = vunpack.c.l.b16 %v2694
    %v2796 = vunpack.c.l.b16 %v2695
    %v2797 = vunpack.c.l.b16 %v2696
    %v2798 = vunpack.c.l.b16 %v2697
    %v2799 = vunpack.c.l.b16 %v2698
    %v2800 = vunpack.c.l.b16 %v2699
    %v2801 = vunpack.c.l.b16 %v2700
    %v2802 = vunpack.c.l.b16 %v2701
    %v2803 = vunpack.c.l.b16 %v2702
    %v2804 = vunpack.c.l.b16 %v2703
    %v2805 = vunpack.c.l.b16 %v2704
    %v2806 = vunpack.c.l.b16 %v2705
    %v2807 = vunpack.c.l.b16 %v2706
    %v2808 = vunpack.c.l.b16 %v2707
    %v2809 = vunpack.c.l.b16 %v2708
    %v2810 = vunpack.c.l.b16 %v2709
    %v2811 = vunpack.c.l.b16 %v2710
    %v2812 = vpack.c.b16 %v2795, %v2794
    %v2813 = vpack.c.b16 %v2797, %v2796
    %v2814 = vpack.c.b16 %v2799, %v2798
    %v2815 = vpack.c.b16 %v2801, %v2800
    %v2816 = vpack.c.b16 %v2803, %v2802
    %v2817 = vpack.c.b16 %v2805, %v2804
    %v2818 = vpack.c.b16 %v2807, %v2806
    %v2819 = vpack.c.b16 %v2809, %v2808
    %v2820 = vpack.c.b16 %v2811, %v2810
    %vm2830 = vcmask 130048
    %v2832 = vsel %vm2830, %v2774, 0
    %2834 = vmatpush.bf16.msra.mxu0 %v2819
    %2835 = vmatpush.bf16.msra.mxu0 %v2818
    %2836 = vmatpush.bf16.msra.mxu0 %v2817
    %2837 = vmatpush.bf16.msra.mxu0 %v2816
    %2838 = vmatpush.bf16.msra.mxu0 %v2815
    %2839 = vmatpush.bf16.msra.mxu0 %v2814
    %2840 = vmatpush.bf16.msra.mxu0 %v2813
    %2841 = vmatpush.bf16.msra.mxu0 %v2812
    %2842 = vmatmul.bf16.gmra.mxu0 %v2773
    %v2843 = vpop.f32.mrf.mxu0
    %v2844 = vadd.f32 0.0, %v2843
    %v2845 = vpop.f32.mrf.mxu0
    %2846 = vdwg.mxu0
    %2847 = vmatpush.bf16.msra.mxu0 0
    %2848 = vmatpush.bf16.msra.mxu0 0
    %2849 = vmatpush.bf16.msra.mxu0 0
    %2850 = vmatpush.bf16.msra.mxu0 0
    %2851 = vmatpush.bf16.msra.mxu0 0
    %2852 = vmatpush.bf16.msra.mxu0 0
    %2853 = vmatpush.bf16.msra.mxu0 0
    %2854 = vmatpush.bf16.msra.mxu0 %v2820
    %2855 = vmatmul.bf16.gmra.mxu0 %v2832
    %v2856 = vpop.f32.mrf.mxu0
    %v2857 = vadd.f32 %v2844, %v2856
    %v2858 = vpop.f32.mrf.mxu0
    %2859 = vdwg.mxu0
    %v2862 = vunpack.c.l.b16 %v2656
    %v2863 = vunpack.c.h.b16 %v2656
    %v2864 = vunpack.c.l.b16 %v2659
    %v2865 = vunpack.c.h.b16 %v2659
    %v2866 = vpack.c.b16 %v2862, %v2862
    %v2867 = vpack.c.b16 %v2863, %v2863
    %v2868 = vpack.c.b16 %v2864, %v2864
    %v2869 = vpack.c.b16 %v2865, %v2865
    %v2870 = vunpack.c.l.b16 %v2866
    %v2871 = vunpack.c.l.b16 %v2867
    %v2872 = vunpack.c.l.b16 %v2868
    %v2873 = vunpack.c.l.b16 %v2869
    %v2874 = vrot.slane %v2741, 7
    %v2875 = vsel %vm1564, %v2874, %v2870
    %v2876 = vrot.slane %v2743, 6
    %v2877 = vsel %vm1567, %v2876, %v2875
    %v2878 = vrot.slane %v2872, 5
    %v2879 = vsel %vm1570, %v2878, %v2877
    %v2880 = vrot.slane %v2747, 4
    %v2881 = vsel %vm1573, %v2880, %v2879
    %v2882 = vrot.slane %v2749, 3
    %v2883 = vsel %vm1576, %v2882, %v2881
    %v2884 = vrot.slane %v2742, 7
    %v2885 = vsel %vm1564, %v2884, %v2871
    %v2886 = vrot.slane %v2744, 6
    %v2887 = vsel %vm1567, %v2886, %v2885
    %v2888 = vrot.slane %v2873, 5
    %v2889 = vsel %vm1570, %v2888, %v2887
    %v2890 = vrot.slane %v2748, 4
    %v2891 = vsel %vm1573, %v2890, %v2889
    %v2892 = vrot.slane %v2750, 3
    %v2893 = vsel %vm1576, %v2892, %v2891
    %v2894 = vpack.c.b16 %v2883, %v2883
    %v2895 = vpack.c.b16 %v2893, %v2893
    %v2915 = vunpack.c.l.b16 %v2662
    %v2916 = vunpack.c.l.b16 %v2663
    %v2917 = vunpack.c.l.b16 %v2664
    %v2918 = vunpack.c.l.b16 %v2665
    %v2919 = vunpack.c.l.b16 %v2666
    %v2920 = vunpack.c.l.b16 %v2667
    %v2921 = vunpack.c.l.b16 %v2668
    %v2922 = vunpack.c.l.b16 %v2669
    %v2923 = vunpack.c.l.b16 %v2670
    %v2924 = vunpack.c.l.b16 %v2671
    %v2925 = vunpack.c.l.b16 %v2672
    %v2926 = vunpack.c.l.b16 %v2673
    %v2927 = vunpack.c.l.b16 %v2674
    %v2928 = vunpack.c.l.b16 %v2675
    %v2929 = vunpack.c.l.b16 %v2676
    %v2930 = vunpack.c.l.b16 %v2677
    %v2931 = vunpack.c.l.b16 %v2678
    %v2932 = vunpack.c.l.b16 %v2679
    %v2933 = vpack.c.b16 %v2916, %v2915
    %v2934 = vpack.c.b16 %v2918, %v2917
    %v2935 = vpack.c.b16 %v2920, %v2919
    %v2936 = vpack.c.b16 %v2922, %v2921
    %v2937 = vpack.c.b16 %v2924, %v2923
    %v2938 = vpack.c.b16 %v2926, %v2925
    %v2939 = vpack.c.b16 %v2928, %v2927
    %v2940 = vpack.c.b16 %v2930, %v2929
    %v2941 = vpack.c.b16 %v2932, %v2931
    %v2952 = vsel %vm2830, %v2895, 0
    %2954 = vmatpush.bf16.msra.mxu0 %v2940
    %2955 = vmatpush.bf16.msra.mxu0 %v2939
    %2956 = vmatpush.bf16.msra.mxu0 %v2938
    %2957 = vmatpush.bf16.msra.mxu0 %v2937
    %2958 = vmatpush.bf16.msra.mxu0 %v2936
    %2959 = vmatpush.bf16.msra.mxu0 %v2935
    %2960 = vmatpush.bf16.msra.mxu0 %v2934
    %2961 = vmatpush.bf16.msra.mxu0 %v2933
    %2962 = vmatmul.bf16.gmra.mxu0 %v2894
    %v2963 = vpop.f32.mrf.mxu0
    %v2964 = vadd.f32 %v2857, %v2963
    %v2965 = vpop.f32.mrf.mxu0
    %2966 = vdwg.mxu0
    %2967 = vmatpush.bf16.msra.mxu0 0
    %2968 = vmatpush.bf16.msra.mxu0 0
    %2969 = vmatpush.bf16.msra.mxu0 0
    %2970 = vmatpush.bf16.msra.mxu0 0
    %2971 = vmatpush.bf16.msra.mxu0 0
    %2972 = vmatpush.bf16.msra.mxu0 0
    %2973 = vmatpush.bf16.msra.mxu0 0
    %2974 = vmatpush.bf16.msra.mxu0 %v2941
    %2975 = vmatmul.bf16.gmra.mxu0 %v2952
    %v2976 = vpop.f32.mrf.mxu0
    %v2977 = vadd.f32 %v2964, %v2976
    %v2978 = vpop.f32.mrf.mxu0
    %2979 = vdwg.mxu0
    %v2982 = vperm.slane %v2620, 0
    %v2983 = vperm.slane %v2620, 2
    %v2984 = vperm.slane %v2625, 0
    %v2985 = vperm.slane %v2625, 2
    %v2990 = vpack.c.bf16 %v2983, %v2982
    %v2991 = vpack.c.bf16 %v2985, %v2984
    %s2992 = scalar_lea.vmem %s5, 144
    %v2993 = vld [vmem:[%s2992] sm:$0xf]
    %v2994 = vld [vmem:[%s2992 + $0x4] sm:$0xf]
    %v2995 = vld [vmem:[%s2992 + $0x8] sm:$0xf]
    %v2996 = vld [vmem:[%s2992 + $0xc] sm:$0xf]
    %v2997 = vld [vmem:[%s2992 + $0x10] sm:$0xf]
    %v2998 = vld [vmem:[%s2992 + $0x14] sm:$0xf]
    %v2999 = vld [vmem:[%s2992 + $0x18] sm:$0xf]
    %v3000 = vld [vmem:[%s2992 + $0x1c] sm:$0xf]
    %v3001 = vld [vmem:[%s2992 + $0x20] sm:$0xf]
    %v3002 = vld [vmem:[%s2992 + $0x24] sm:$0xf]
    %v3003 = vld [vmem:[%s2992 + $0x28] sm:$0xf]
    %v3004 = vld [vmem:[%s2992 + $0x2c] sm:$0xf]
    %v3005 = vld [vmem:[%s2992 + $0x30] sm:$0xf]
    %v3006 = vld [vmem:[%s2992 + $0x34] sm:$0xf]
    %v3007 = vld [vmem:[%s2992 + $0x38] sm:$0xf]
    %v3008 = vld [vmem:[%s2992 + $0x3c] sm:$0xf]
    %v3009 = vld [vmem:[%s2992 + $0x40] sm:$0xf]
    %v3010 = vld [vmem:[%s2992 + $0x44] sm:$0xf]
    %v3013 = vunpack.c.l.b16 %v2990
    %v3014 = vunpack.c.h.b16 %v2990
    %v3015 = vunpack.c.l.b16 %v2991
    %v3016 = vunpack.c.h.b16 %v2991
    %v3017 = vpack.c.b16 %v3013, %v3013
    %v3018 = vpack.c.b16 %v3014, %v3014
    %v3019 = vpack.c.b16 %v3015, %v3015
    %v3020 = vpack.c.b16 %v3016, %v3016
    %v3021 = vunpack.c.l.b16 %v3017
    %v3022 = vunpack.c.l.b16 %v3018
    %v3023 = vunpack.c.l.b16 %v3019
    %v3024 = vunpack.c.l.b16 %v3020
    %v3025 = vrot.slane %v2745, 7
    %v3026 = vsel %vm1564, %v3025, %v2743
    %v3027 = vrot.slane %v3021, 6
    %v3028 = vsel %vm1567, %v3027, %v3026
    %v3029 = vrot.slane %v2749, 5
    %v3030 = vsel %vm1570, %v3029, %v3028
    %v3031 = vrot.slane %v2751, 4
    %v3032 = vsel %vm1573, %v3031, %v3030
    %v3033 = vrot.slane %v3023, 3
    %v3034 = vsel %vm1576, %v3033, %v3032
    %v3035 = vrot.slane %v2746, 7
    %v3036 = vsel %vm1564, %v3035, %v2744
    %v3037 = vrot.slane %v3022, 6
    %v3038 = vsel %vm1567, %v3037, %v3036
    %v3039 = vrot.slane %v2750, 5
    %v3040 = vsel %vm1570, %v3039, %v3038
    %v3041 = vrot.slane %v2752, 4
    %v3042 = vsel %vm1573, %v3041, %v3040
    %v3043 = vrot.slane %v3024, 3
    %v3044 = vsel %vm1576, %v3043, %v3042
    %v3045 = vpack.c.b16 %v3034, %v3034
    %v3046 = vpack.c.b16 %v3044, %v3044
    %v3066 = vunpack.c.l.b16 %v2993
    %v3067 = vunpack.c.l.b16 %v2994
    %v3068 = vunpack.c.l.b16 %v2995
    %v3069 = vunpack.c.l.b16 %v2996
    %v3070 = vunpack.c.l.b16 %v2997
    %v3071 = vunpack.c.l.b16 %v2998
    %v3072 = vunpack.c.l.b16 %v2999
    %v3073 = vunpack.c.l.b16 %v3000
    %v3074 = vunpack.c.l.b16 %v3001
    %v3075 = vunpack.c.l.b16 %v3002
    %v3076 = vunpack.c.l.b16 %v3003
    %v3077 = vunpack.c.l.b16 %v3004
    %v3078 = vunpack.c.l.b16 %v3005
    %v3079 = vunpack.c.l.b16 %v3006
    %v3080 = vunpack.c.l.b16 %v3007
    %v3081 = vunpack.c.l.b16 %v3008
    %v3082 = vunpack.c.l.b16 %v3009
    %v3083 = vunpack.c.l.b16 %v3010
    %v3084 = vpack.c.b16 %v3067, %v3066
    %v3085 = vpack.c.b16 %v3069, %v3068
    %v3086 = vpack.c.b16 %v3071, %v3070
    %v3087 = vpack.c.b16 %v3073, %v3072
    %v3088 = vpack.c.b16 %v3075, %v3074
    %v3089 = vpack.c.b16 %v3077, %v3076
    %v3090 = vpack.c.b16 %v3079, %v3078
    %v3091 = vpack.c.b16 %v3081, %v3080
    %v3092 = vpack.c.b16 %v3083, %v3082
    %v3103 = vsel %vm2830, %v3046, 0
    %3105 = vmatpush.bf16.msra.mxu0 %v3091
    %3106 = vmatpush.bf16.msra.mxu0 %v3090
    %3107 = vmatpush.bf16.msra.mxu0 %v3089
    %3108 = vmatpush.bf16.msra.mxu0 %v3088
    %3109 = vmatpush.bf16.msra.mxu0 %v3087
    %3110 = vmatpush.bf16.msra.mxu0 %v3086
    %3111 = vmatpush.bf16.msra.mxu0 %v3085
    %3112 = vmatpush.bf16.msra.mxu0 %v3084
    %3113 = vmatmul.bf16.gmra.mxu0 %v3045
    %v3114 = vpop.f32.mrf.mxu0
    %v3115 = vadd.f32 0.0, %v3114
    %v3116 = vpop.f32.mrf.mxu0
    %3117 = vdwg.mxu0
    %3118 = vmatpush.bf16.msra.mxu0 0
    %3119 = vmatpush.bf16.msra.mxu0 0
    %3120 = vmatpush.bf16.msra.mxu0 0
    %3121 = vmatpush.bf16.msra.mxu0 0
    %3122 = vmatpush.bf16.msra.mxu0 0
    %3123 = vmatpush.bf16.msra.mxu0 0
    %3124 = vmatpush.bf16.msra.mxu0 0
    %3125 = vmatpush.bf16.msra.mxu0 %v3092
    %3126 = vmatmul.bf16.gmra.mxu0 %v3103
    %v3127 = vpop.f32.mrf.mxu0
    %v3128 = vadd.f32 %v3115, %v3127
    %v3129 = vpop.f32.mrf.mxu0
    %3130 = vdwg.mxu0
    %v3131 = vadd.f32 %v2977, %v3128
    %v3132 = vld [vmem:[%s6] sm:$0x1]
    %v3134 = vperm.slane %v3132, 0
    %v3136 = vadd.f32 %v3131, %v3134
    %v3137 = vmax.f32 %v3136, 0.0
    %v3138 = vpack.c.bf16 %v3137, %v3137
    %v3140 = vrot.slane %v3138, 3
    %vm3141 = vcmask 1040384
    %v3144 = vsel %vm3141, %v3138, %v3140
    %v3146 = vsel %vm1564, %v3138, %v3140
    %v3148 = vrot.slane %v3146, 1
    %v3149 = vsel %vm1567, %v3138, %v3140
    %v3151 = vrot.slane %v3149, 2
    %v3152 = vunpack.i.l.s16 %v3144
    %v3153 = vunpack.i.h.s16 %v3144
    %v3154 = vunpack.i.l.s16 %v3148
    %v3155 = vunpack.i.h.s16 %v3148
    %v3156 = vunpack.i.l.s16 %v3151
    %v3157 = vunpack.i.h.s16 %v3151
    %v3158 = vld [vmem:[%s7] sm:$0xff]
    %v3159 = vld [vmem:[%s7 + $0x8] sm:$0xff]
    %v3160 = vld [vmem:[%s7 + $0x10] sm:$0xff]
    %v3161 = vld [vmem:[%s7 + $0x18] sm:$0xff]
    %v3162 = vld [vmem:[%s7 + $0x20] sm:$0xff]
    %v3163 = vld [vmem:[%s7 + $0x28] sm:$0xff]
    %v3164 = vld [vmem:[%s7 + $0x30] sm:$0xff]
    %v3165 = vld [vmem:[%s7 + $0x38] sm:$0xff]
    %v3166 = vld [vmem:[%s7 + $0x40] sm:$0xff]
    %v3167 = vld [vmem:[%s7 + $0x48] sm:$0xff]
    %v3168 = vld [vmem:[%s7 + $0x50] sm:$0xff]
    %v3169 = vld [vmem:[%s7 + $0x58] sm:$0xff]
    %s3170 = scalar_lea.vmem %s7, 96
    %v3171 = vld [vmem:[%s3170] sm:$0xff]
    %v3172 = vld [vmem:[%s3170 + $0x8] sm:$0xff]
    %v3173 = vld [vmem:[%s3170 + $0x10] sm:$0xff]
    %v3174 = vld [vmem:[%s3170 + $0x18] sm:$0xff]
    %v3175 = vld [vmem:[%s3170 + $0x20] sm:$0xff]
    %v3176 = vld [vmem:[%s3170 + $0x28] sm:$0xff]
    %v3177 = vld [vmem:[%s3170 + $0x30] sm:$0xff]
    %v3178 = vld [vmem:[%s3170 + $0x38] sm:$0xff]
    %v3179 = vld [vmem:[%s3170 + $0x40] sm:$0xff]
    %v3180 = vld [vmem:[%s3170 + $0x48] sm:$0xff]
    %v3181 = vld [vmem:[%s3170 + $0x50] sm:$0xff]
    %v3182 = vld [vmem:[%s3170 + $0x58] sm:$0xff]
    %v3183 = vpack.i.b16 %v3156, %v3153
    %3185 = vst [vmem:[#allocation1] ss:$9 sm:$0xff] %v3183
    %v3186 = vld [vmem:[#allocation1] sm:$0xff]
    %v3199 = vunpack.c.l.b16 %v3171
    %v3200 = vunpack.c.h.b16 %v3171
    %v3201 = vunpack.c.l.b16 %v3172
    %v3202 = vunpack.c.h.b16 %v3172
    %v3203 = vunpack.c.l.b16 %v3173
    %v3204 = vunpack.c.h.b16 %v3173
    %v3205 = vunpack.c.l.b16 %v3174
    %v3206 = vunpack.c.h.b16 %v3174
    %v3207 = vunpack.c.l.b16 %v3175
    %v3208 = vunpack.c.h.b16 %v3175
    %v3209 = vunpack.c.l.b16 %v3176
    %v3210 = vunpack.c.h.b16 %v3176
    %v3211 = vunpack.c.l.b16 %v3177
    %v3212 = vunpack.c.h.b16 %v3177
    %v3213 = vunpack.c.l.b16 %v3178
    %v3214 = vunpack.c.h.b16 %v3178
    %v3215 = vunpack.c.l.b16 %v3179
    %v3216 = vunpack.c.h.b16 %v3179
    %v3217 = vunpack.c.l.b16 %v3180
    %v3218 = vunpack.c.h.b16 %v3180
    %v3219 = vunpack.c.l.b16 %v3181
    %v3220 = vunpack.c.h.b16 %v3181
    %v3221 = vunpack.c.l.b16 %v3182
    %v3222 = vunpack.c.h.b16 %v3182
    %v3223 = vpack.c.b16 %v3201, %v3199
    %v3224 = vpack.c.b16 %v3202, %v3200
    %v3225 = vpack.c.b16 %v3205, %v3203
    %v3226 = vpack.c.b16 %v3206, %v3204
    %v3227 = vpack.c.b16 %v3209, %v3207
    %v3228 = vpack.c.b16 %v3210, %v3208
    %v3229 = vpack.c.b16 %v3213, %v3211
    %v3230 = vpack.c.b16 %v3214, %v3212
    %v3231 = vpack.c.b16 %v3217, %v3215
    %v3232 = vpack.c.b16 %v3218, %v3216
    %v3233 = vpack.c.b16 %v3221, %v3219
    %v3234 = vpack.c.b16 %v3222, %v3220
    %vm3247 = vcmask 785408
    %v3248 = vsel %vm3247, %v3186, 0
    %3250 = vmatpush.bf16.msra.mxu0 0
    %3251 = vmatpush.bf16.msra.mxu0 0
    %3252 = vmatpush.bf16.msra.mxu0 %v3233
    %3253 = vmatpush.bf16.msra.mxu0 %v3231
    %3254 = vmatpush.bf16.msra.mxu0 %v3229
    %3255 = vmatpush.bf16.msra.mxu0 %v3227
    %3256 = vmatpush.bf16.msra.mxu0 %v3225
    %3257 = vmatpush.bf16.msra.mxu0 %v3223
    %3258 = vmatmul.bf16.gmra.mxu0 %v3248
    %v3259 = vpop.f32.mrf.mxu0
    %v3260 = vadd.f32 0.0, %v3259
    %v3261 = vpop.f32.mrf.mxu0
    %3262 = vdwg.mxu0
    %3263 = vmatpush.bf16.msra.mxu0 0
    %3264 = vmatpush.bf16.msra.mxu0 0
    %3265 = vmatpush.bf16.msra.mxu0 %v3234
    %3266 = vmatpush.bf16.msra.mxu0 %v3232
    %3267 = vmatpush.bf16.msra.mxu0 %v3230
    %3268 = vmatpush.bf16.msra.mxu0 %v3228
    %3269 = vmatpush.bf16.msra.mxu0 %v3226
    %3270 = vmatpush.bf16.msra.mxu0 %v3224
    %3271 = vmatmul.bf16.gmra.mxu0 %v3248
    %v3272 = vpop.f32.mrf.mxu0
    %v3273 = vadd.f32 0.0, %v3272
    %v3274 = vpop.f32.mrf.mxu0
    %3275 = vdwg.mxu0
    %v3276 = vpack.i.b16 %v3155, %v3152
    %3278 = vst [vmem:[#allocation1] ss:$9 sm:$0xff] %v3276
    %v3279 = vld [vmem:[#allocation1] sm:$0xff]
    %v3292 = vunpack.c.l.b16 %v3158
    %v3293 = vunpack.c.h.b16 %v3158
    %v3294 = vunpack.c.l.b16 %v3159
    %v3295 = vunpack.c.h.b16 %v3159
    %v3296 = vunpack.c.l.b16 %v3160
    %v3297 = vunpack.c.h.b16 %v3160
    %v3298 = vunpack.c.l.b16 %v3161
    %v3299 = vunpack.c.h.b16 %v3161
    %v3300 = vunpack.c.l.b16 %v3162
    %v3301 = vunpack.c.h.b16 %v3162
    %v3302 = vunpack.c.l.b16 %v3163
    %v3303 = vunpack.c.h.b16 %v3163
    %v3304 = vunpack.c.l.b16 %v3164
    %v3305 = vunpack.c.h.b16 %v3164
    %v3306 = vunpack.c.l.b16 %v3165
    %v3307 = vunpack.c.h.b16 %v3165
    %v3308 = vunpack.c.l.b16 %v3166
    %v3309 = vunpack.c.h.b16 %v3166
    %v3310 = vunpack.c.l.b16 %v3167
    %v3311 = vunpack.c.h.b16 %v3167
    %v3312 = vunpack.c.l.b16 %v3168
    %v3313 = vunpack.c.h.b16 %v3168
    %v3314 = vunpack.c.l.b16 %v3169
    %v3315 = vunpack.c.h.b16 %v3169
    %v3316 = vpack.c.b16 %v3294, %v3292
    %v3317 = vpack.c.b16 %v3295, %v3293
    %v3318 = vpack.c.b16 %v3298, %v3296
    %v3319 = vpack.c.b16 %v3299, %v3297
    %v3320 = vpack.c.b16 %v3302, %v3300
    %v3321 = vpack.c.b16 %v3303, %v3301
    %v3322 = vpack.c.b16 %v3306, %v3304
    %v3323 = vpack.c.b16 %v3307, %v3305
    %v3324 = vpack.c.b16 %v3310, %v3308
    %v3325 = vpack.c.b16 %v3311, %v3309
    %v3326 = vpack.c.b16 %v3314, %v3312
    %v3327 = vpack.c.b16 %v3315, %v3313
    %v3340 = vsel %vm3247, %v3279, 0
    %3342 = vmatpush.bf16.msra.mxu0 0
    %3343 = vmatpush.bf16.msra.mxu0 0
    %3344 = vmatpush.bf16.msra.mxu0 %v3326
    %3345 = vmatpush.bf16.msra.mxu0 %v3324
    %3346 = vmatpush.bf16.msra.mxu0 %v3322
    %3347 = vmatpush.bf16.msra.mxu0 %v3320
    %3348 = vmatpush.bf16.msra.mxu0 %v3318
    %3349 = vmatpush.bf16.msra.mxu0 %v3316
    %3350 = vmatmul.bf16.gmra.mxu0 %v3340
    %v3351 = vpop.f32.mrf.mxu0
    %v3352 = vadd.f32 %v3260, %v3351
    %v3353 = vpop.f32.mrf.mxu0
    %3354 = vdwg.mxu0
    %3355 = vmatpush.bf16.msra.mxu0 0
    %3356 = vmatpush.bf16.msra.mxu0 0
    %3357 = vmatpush.bf16.msra.mxu0 %v3327
    %3358 = vmatpush.bf16.msra.mxu0 %v3325
    %3359 = vmatpush.bf16.msra.mxu0 %v3323
    %3360 = vmatpush.bf16.msra.mxu0 %v3321
    %3361 = vmatpush.bf16.msra.mxu0 %v3319
    %3362 = vmatpush.bf16.msra.mxu0 %v3317
    %3363 = vmatmul.bf16.gmra.mxu0 %v3340
    %v3364 = vpop.f32.mrf.mxu0
    %v3365 = vadd.f32 %v3273, %v3364
    %v3366 = vpop.f32.mrf.mxu0
    %3367 = vdwg.mxu0
    %s3368 = scalar_lea.vmem %s7, 192
    %v3369 = vld [vmem:[%s3368] sm:$0xff]
    %v3370 = vld [vmem:[%s3368 + $0x8] sm:$0xff]
    %v3371 = vld [vmem:[%s3368 + $0x10] sm:$0xff]
    %v3372 = vld [vmem:[%s3368 + $0x18] sm:$0xff]
    %v3373 = vld [vmem:[%s3368 + $0x20] sm:$0xff]
    %v3374 = vld [vmem:[%s3368 + $0x28] sm:$0xff]
    %v3375 = vld [vmem:[%s3368 + $0x30] sm:$0xff]
    %v3376 = vld [vmem:[%s3368 + $0x38] sm:$0xff]
    %v3377 = vld [vmem:[%s3368 + $0x40] sm:$0xff]
    %v3378 = vld [vmem:[%s3368 + $0x48] sm:$0xff]
    %v3379 = vld [vmem:[%s3368 + $0x50] sm:$0xff]
    %v3380 = vld [vmem:[%s3368 + $0x58] sm:$0xff]
    %v3381 = vpack.i.b16 %v3157, %v3154
    %3383 = vst [vmem:[#allocation1] ss:$9 sm:$0xff] %v3381
    %v3384 = vld [vmem:[#allocation1] sm:$0xff]
    %v3397 = vunpack.c.l.b16 %v3369
    %v3398 = vunpack.c.h.b16 %v3369
    %v3399 = vunpack.c.l.b16 %v3370
    %v3400 = vunpack.c.h.b16 %v3370
    %v3401 = vunpack.c.l.b16 %v3371
    %v3402 = vunpack.c.h.b16 %v3371
    %v3403 = vunpack.c.l.b16 %v3372
    %v3404 = vunpack.c.h.b16 %v3372
    %v3405 = vunpack.c.l.b16 %v3373
    %v3406 = vunpack.c.h.b16 %v3373
    %v3407 = vunpack.c.l.b16 %v3374
    %v3408 = vunpack.c.h.b16 %v3374
    %v3409 = vunpack.c.l.b16 %v3375
    %v3410 = vunpack.c.h.b16 %v3375
    %v3411 = vunpack.c.l.b16 %v3376
    %v3412 = vunpack.c.h.b16 %v3376
    %v3413 = vunpack.c.l.b16 %v3377
    %v3414 = vunpack.c.h.b16 %v3377
    %v3415 = vunpack.c.l.b16 %v3378
    %v3416 = vunpack.c.h.b16 %v3378
    %v3417 = vunpack.c.l.b16 %v3379
    %v3418 = vunpack.c.h.b16 %v3379
    %v3419 = vunpack.c.l.b16 %v3380
    %v3420 = vunpack.c.h.b16 %v3380
    %v3421 = vpack.c.b16 %v3399, %v3397
    %v3422 = vpack.c.b16 %v3400, %v3398
    %v3423 = vpack.c.b16 %v3403, %v3401
    %v3424 = vpack.c.b16 %v3404, %v3402
    %v3425 = vpack.c.b16 %v3407, %v3405
    %v3426 = vpack.c.b16 %v3408, %v3406
    %v3427 = vpack.c.b16 %v3411, %v3409
    %v3428 = vpack.c.b16 %v3412, %v3410
    %v3429 = vpack.c.b16 %v3415, %v3413
    %v3430 = vpack.c.b16 %v3416, %v3414
    %v3431 = vpack.c.b16 %v3419, %v3417
    %v3432 = vpack.c.b16 %v3420, %v3418
    %v3445 = vsel %vm3247, %v3384, 0
    %3447 = vmatpush.bf16.msra.mxu0 0
    %3448 = vmatpush.bf16.msra.mxu0 0
    %3449 = vmatpush.bf16.msra.mxu0 %v3431
    %3450 = vmatpush.bf16.msra.mxu0 %v3429
    %3451 = vmatpush.bf16.msra.mxu0 %v3427
    %3452 = vmatpush.bf16.msra.mxu0 %v3425
    %3453 = vmatpush.bf16.msra.mxu0 %v3423
    %3454 = vmatpush.bf16.msra.mxu0 %v3421
    %3455 = vmatmul.bf16.gmra.mxu0 %v3445
    %v3456 = vpop.f32.mrf.mxu0
    %v3457 = vadd.f32 0.0, %v3456
    %v3458 = vpop.f32.mrf.mxu0
    %3459 = vdwg.mxu0
    %3460 = vmatpush.bf16.msra.mxu0 0
    %3461 = vmatpush.bf16.msra.mxu0 0
    %3462 = vmatpush.bf16.msra.mxu0 %v3432
    %3463 = vmatpush.bf16.msra.mxu0 %v3430
    %3464 = vmatpush.bf16.msra.mxu0 %v3428
    %3465 = vmatpush.bf16.msra.mxu0 %v3426
    %3466 = vmatpush.bf16.msra.mxu0 %v3424
    %3467 = vmatpush.bf16.msra.mxu0 %v3422
    %3468 = vmatmul.bf16.gmra.mxu0 %v3445
    %v3469 = vpop.f32.mrf.mxu0
    %v3470 = vadd.f32 0.0, %v3469
    %v3471 = vpop.f32.mrf.mxu0
    %3472 = vdwg.mxu0
    %v3473 = vadd.f32 %v3352, %v3457
    %v3474 = vadd.f32 %v3365, %v3470
    %v3475 = vld [vmem:[%s8] sm:$0x3]
    %v3477 = vperm.slane %v3475, 0
    %v3478 = vperm.slane %v3475, 1
    %v3481 = vadd.f32 %v3473, %v3477
    %v3482 = vadd.f32 %v3474, %v3478
    %v3483 = vmax.f32 %v3481, 0.0
    %v3484 = vmax.f32 %v3482, 0.0
    %v3485 = vpack.c.bf16 %v3483, %v3483
    %v3486 = vpack.c.bf16 %v3484, %v3484
    %v3487 = vld [vmem:[%s9] sm:$0xf]
    %v3488 = vld [vmem:[%s9 + $0x4] sm:$0xf]
    %v3489 = vld [vmem:[%s9 + $0x8] sm:$0xf]
    %v3490 = vld [vmem:[%s9 + $0xc] sm:$0xf]
    %v3491 = vld [vmem:[%s9 + $0x10] sm:$0xf]
    %v3492 = vld [vmem:[%s9 + $0x14] sm:$0xf]
    %v3493 = vld [vmem:[%s9 + $0x18] sm:$0xf]
    %v3494 = vld [vmem:[%s9 + $0x1c] sm:$0xf]
    %v3495 = vld [vmem:[%s9 + $0x20] sm:$0xf]
    %v3496 = vld [vmem:[%s9 + $0x24] sm:$0xf]
    %v3497 = vld [vmem:[%s9 + $0x28] sm:$0xf]
    %v3498 = vld [vmem:[%s9 + $0x2c] sm:$0xf]
    %v3499 = vld [vmem:[%s9 + $0x30] sm:$0xf]
    %v3500 = vld [vmem:[%s9 + $0x34] sm:$0xf]
    %v3501 = vld [vmem:[%s9 + $0x38] sm:$0xf]
    %v3502 = vld [vmem:[%s9 + $0x3c] sm:$0xf]
    %v3503 = vld [vmem:[%s9 + $0x40] sm:$0xf]
    %v3504 = vld [vmem:[%s9 + $0x44] sm:$0xf]
    %v3505 = vld [vmem:[%s9 + $0x48] sm:$0xf]
    %v3506 = vld [vmem:[%s9 + $0x4c] sm:$0xf]
    %v3507 = vld [vmem:[%s9 + $0x50] sm:$0xf]
    %v3508 = vld [vmem:[%s9 + $0x54] sm:$0xf]
    %v3509 = vld [vmem:[%s9 + $0x58] sm:$0xf]
    %v3510 = vld [vmem:[%s9 + $0x5c] sm:$0xf]
    %v3511 = vld [vmem:[%s9 + $0x60] sm:$0xf]
    %v3512 = vld [vmem:[%s9 + $0x64] sm:$0xf]
    %v3513 = vld [vmem:[%s9 + $0x68] sm:$0xf]
    %v3514 = vld [vmem:[%s9 + $0x6c] sm:$0xf]
    %v3515 = vld [vmem:[%s9 + $0x70] sm:$0xf]
    %v3516 = vld [vmem:[%s9 + $0x74] sm:$0xf]
    %v3517 = vld [vmem:[%s9 + $0x78] sm:$0xf]
    %v3518 = vld [vmem:[%s9 + $0x7c] sm:$0xf]
    %v3519 = vld [vmem:[%s10] sm:$0x1]
    %v3521 = vperm.slane %v3519, 0
    %v3555 = vunpack.c.l.b16 %v3487
    %v3556 = vunpack.c.l.b16 %v3488
    %v3557 = vunpack.c.l.b16 %v3489
    %v3558 = vunpack.c.l.b16 %v3490
    %v3559 = vunpack.c.l.b16 %v3491
    %v3560 = vunpack.c.l.b16 %v3492
    %v3561 = vunpack.c.l.b16 %v3493
    %v3562 = vunpack.c.l.b16 %v3494
    %v3563 = vunpack.c.l.b16 %v3495
    %v3564 = vunpack.c.l.b16 %v3496
    %v3565 = vunpack.c.l.b16 %v3497
    %v3566 = vunpack.c.l.b16 %v3498
    %v3567 = vunpack.c.l.b16 %v3499
    %v3568 = vunpack.c.l.b16 %v3500
    %v3569 = vunpack.c.l.b16 %v3501
    %v3570 = vunpack.c.l.b16 %v3502
    %v3571 = vunpack.c.l.b16 %v3503
    %v3572 = vunpack.c.l.b16 %v3504
    %v3573 = vunpack.c.l.b16 %v3505
    %v3574 = vunpack.c.l.b16 %v3506
    %v3575 = vunpack.c.l.b16 %v3507
    %v3576 = vunpack.c.l.b16 %v3508
    %v3577 = vunpack.c.l.b16 %v3509
    %v3578 = vunpack.c.l.b16 %v3510
    %v3579 = vunpack.c.l.b16 %v3511
    %v3580 = vunpack.c.l.b16 %v3512
    %v3581 = vunpack.c.l.b16 %v3513
    %v3582 = vunpack.c.l.b16 %v3514
    %v3583 = vunpack.c.l.b16 %v3515
    %v3584 = vunpack.c.l.b16 %v3516
    %v3585 = vunpack.c.l.b16 %v3517
    %v3586 = vunpack.c.l.b16 %v3518
    %v3587 = vpack.c.b16 %v3556, %v3555
    %v3588 = vpack.c.b16 %v3558, %v3557
    %v3589 = vpack.c.b16 %v3560, %v3559
    %v3590 = vpack.c.b16 %v3562, %v3561
    %v3591 = vpack.c.b16 %v3564, %v3563
    %v3592 = vpack.c.b16 %v3566, %v3565
    %v3593 = vpack.c.b16 %v3568, %v3567
    %v3594 = vpack.c.b16 %v3570, %v3569
    %v3595 = vpack.c.b16 %v3572, %v3571
    %v3596 = vpack.c.b16 %v3574, %v3573
    %v3597 = vpack.c.b16 %v3576, %v3575
    %v3598 = vpack.c.b16 %v3578, %v3577
    %v3599 = vpack.c.b16 %v3580, %v3579
    %v3600 = vpack.c.b16 %v3582, %v3581
    %v3601 = vpack.c.b16 %v3584, %v3583
    %v3602 = vpack.c.b16 %v3586, %v3585
    %3619 = vmatpush.bf16.msra.mxu0 %v3594
    %3620 = vmatpush.bf16.msra.mxu0 %v3593
    %3621 = vmatpush.bf16.msra.mxu0 %v3592
    %3622 = vmatpush.bf16.msra.mxu0 %v3591
    %3623 = vmatpush.bf16.msra.mxu0 %v3590
    %3624 = vmatpush.bf16.msra.mxu0 %v3589
    %3625 = vmatpush.bf16.msra.mxu0 %v3588
    %3626 = vmatpush.bf16.msra.mxu0 %v3587
    %3627 = vmatmul.bf16.gmra.mxu0 %v3485
    %v3628 = vpop.f32.mrf.mxu0
    %v3629 = vadd.f32 %v3521, %v3628
    %v3630 = vpop.f32.mrf.mxu0
    %3631 = vdwg.mxu0
    %3632 = vmatpush.bf16.msra.mxu0 %v3602
    %3633 = vmatpush.bf16.msra.mxu0 %v3601
    %3634 = vmatpush.bf16.msra.mxu0 %v3600
    %3635 = vmatpush.bf16.msra.mxu0 %v3599
    %3636 = vmatpush.bf16.msra.mxu0 %v3598
    %3637 = vmatpush.bf16.msra.mxu0 %v3597
    %3638 = vmatpush.bf16.msra.mxu0 %v3596
    %3639 = vmatpush.bf16.msra.mxu0 %v3595
    %3640 = vmatmul.bf16.gmra.mxu0 %v3486
    %v3641 = vpop.f32.mrf.mxu0
    %v3642 = vadd.f32 %v3629, %v3641
    %v3643 = vpop.f32.mrf.mxu0
    %3644 = vdwg.mxu0
    %3645 = vst [vmem:[#allocation2] sm:$0x3] %v3642
    // Predicated region
    $region46: #{cnet_forward.1} parent=1 // pred_check
      _
    $region47: #{cnet_forward.1} parent=1 // pred_check_branch
      %3647 = sbr.rel (0) target = $region49
    $region48: #{cnet_forward.1} parent=1 // pred_region
      %3649 = vsyncadd [#allocation3], 0
      %s3651 = sshll.u32 [#allocation2], 4
      %s3652 = int_to_ptr.vmem [resolvable:$true] %s3651
      %s3653 = sshll.u32 %s11, 4
      %s3654 = int_to_ptr.hbm [resolvable:$true] %s3653
      %3656 = dma.vmem_to_hbm [thread:$0]  %s3652, 32, %s3654, [#allocation3]
    $region49: #{cnet_forward.1} parent=1 // pred_fallthru
      _
    // Predicated region
    $region50: #{cnet_forward.1} parent=1 // pred_check
      _
    $region51: #{cnet_forward.1} parent=1 // pred_check_branch
      %3658 = sbr.rel (0) target = $region53
    $region52: #{cnet_forward.1} parent=1 // pred_region
      %3660 = dma.done [#allocation3], 32
    $region53: #{cnet_forward.1} parent=1 // pred_fallthru
      _
    %3661 = vsyncpa [#allocation3], 1

</llo_original>
